<compile_context>
chip_gen: v7x
topology: tpu7x:2x2x1
jax: 0.10.0
libtpu: 0.0.40
codegen_flags: <defaults>
</compile_context>

<pallas_src>
import math
import functools

import numpy as np
import jax
import jax.numpy as jnp
from jax.experimental import pallas as pl
from jax.experimental.pallas import tpu as pltpu


def _round_up(v, m):
    return (v + m - 1) // m * m


# -----------------------------------------------------------------------------
# Fused Pallas kernel: all KAN layers in one invocation
# -----------------------------------------------------------------------------
def _kan_kernel(x_ref, *refs, grid_vals, spline_order):
    """refs = (w_packed_0, ..., w_packed_{L-1}, out_ref).

    x_ref:       (TB, P)                padded input tile (P = 128-padded feats)
    w_packed_l:  ((K+1)*P, P)           [Wb ; Ws_k0 ; ... ; Ws_k{K-1}] zero-padded
    out_ref:     (TB, P)                padded output tile
    """
    w_refs = refs[:-1]
    o_ref = refs[-1]
    G = len(grid_vals)

    x = x_ref[...]                                        # (TB, P) f32
    for w_ref in w_refs:
        # ---- base activation (feeds rows [0, P) of the packed weight) ----
        silu_x = x * jax.nn.sigmoid(x)

        # ---- Cox-de Boor B-spline bases, elementwise on the full 128-lane tile.
        # Knots are compile-time scalar constants (uniform grid, nonzero denoms).
        bases = [((x >= grid_vals[k]) & (x < grid_vals[k + 1])).astype(x.dtype)
                 for k in range(G - 1)]
        for order in range(1, spline_order + 1):
            nxt = []
            for k in range(len(bases) - 1):
                left = ((x - grid_vals[k])
                        / (grid_vals[k + order] - grid_vals[k])) * bases[k]
                right = ((grid_vals[k + order + 1] - x)
                         / (grid_vals[k + order + 1] - grid_vals[k + 1])) * bases[k + 1]
                nxt.append(left + right)
            bases = nxt
        # len(bases) == K = grid_size + spline_order, each plane (TB, P)

        # ---- single fused MXU matmul: base branch + all K spline bases ----
        z = jnp.concatenate([silu_x] + bases, axis=-1)    # (TB, (K+1)*P)
        x = jnp.dot(z, w_ref[...], preferred_element_type=jnp.float32)  # (TB, P)

    o_ref[...] = x.astype(o_ref.dtype)


def kan_forward(x, packed_weights, out_features, grid_vals, spline_order,
                feat_pad=128, max_batch_tile=512):
    """x: (B, in_features). packed_weights: list of ((K+1)*feat_pad, feat_pad)."""
    B, in_f = x.shape
    P = feat_pad

    # batch tiling: one "parallel" grid axis (single step at tiny batch)
    TB = min(_round_up(B, 8), max_batch_tile)
    B_pad = _round_up(B, TB)

    xp = jnp.zeros((B_pad, P), x.dtype).at[:B, :in_f].set(x)

    kernel = functools.partial(_kan_kernel,
                               grid_vals=tuple(float(g) for g in grid_vals),
                               spline_order=spline_order)

    in_specs = [pl.BlockSpec((TB, P), lambda b: (b, 0))]
    for w in packed_weights:
        in_specs.append(pl.BlockSpec(w.shape, lambda b: (0, 0)))  # VMEM-resident

    out = pl.pallas_call(
        kernel,
        out_shape=jax.ShapeDtypeStruct((B_pad, P), x.dtype),
        grid_spec=pltpu.PrefetchScalarGridSpec(
            num_scalar_prefetch=0,
            grid=(B_pad // TB,),
            in_specs=in_specs,
            out_specs=pl.BlockSpec((TB, P), lambda b: (b, 0)),
        ),
        compiler_params=pltpu.CompilerParams(
            dimension_semantics=("parallel",)),
    )(xp, *packed_weights)

    return out[:B, :out_features]


# -----------------------------------------------------------------------------
# Parameter construction (deterministic, synthetic) + kernel-facing packing
# -----------------------------------------------------------------------------
def make_grid_vals(grid_size, spline_order):
    grid_step = 2.0 / grid_size
    j = np.arange(-spline_order, grid_size + spline_order + 1).astype(np.float32)
    g = (j * np.float32(grid_step) - np.float32(1.0)).astype(np.float32)
    return [float(v) for v in g]


def init_kan_linear(key, in_f, out_f, grid_size, spline_order):
    k1, k2 = jax.random.split(key)
    # kaiming_uniform_(a=sqrt(5)) on (out,in)  ->  U(-1/sqrt(in), 1/sqrt(in))
    bound = 1.0 / math.sqrt(in_f)
    base_weight = jax.random.uniform(k1, (out_f, in_f), jnp.float32, -bound, bound)
    # TODO(synk): torch init derives spline_weight via curve2coeff (lstsq on
    # random noise); here we use an equivalent-scale deterministic uniform init.
    K = grid_size + spline_order
    spline_weight = (jax.random.uniform(k2, (out_f, in_f, K), jnp.float32) - 0.5) \
        * (0.1 / grid_size)
    return base_weight, spline_weight


def init_kan(key, input_features, output_features, layers_hidden,
             grid_size, spline_order):
    dims = [input_features] + list(layers_hidden) + [output_features]
    params = []
    for fi, fo in zip(dims[:-1], dims[1:]):
        key, sub = jax.random.split(key)
        params.append(init_kan_linear(sub, fi, fo, grid_size, spline_order))
    return params


def pack_kan_params(params, feat_pad=128):
    """Pack (base_weight, spline_weight) per layer into the kernel-facing layout:

        W_packed[0:in, 0:out]                 = base_weight.T
        W_packed[(1+k)*P : (1+k)*P+in, 0:out] = spline_weight[:, :, k].T

    Done once at init time so no per-forward transposes/copies are needed.
    Zero padding of the feature dims makes padded input/output columns inert.
    """
    packed = []
    for base_weight, spline_weight in params:
        out_f, in_f = base_weight.shape
        K = spline_weight.shape[2]
        blocks = [base_weight.T] + [spline_weight[:, :, k].T for k in range(K)]
        pads = []
        for blk in blocks:
            buf = jnp.zeros((feat_pad, feat_pad), jnp.float32)
            pads.append(buf.at[:in_f, :out_f].set(blk))
        packed.append(jnp.concatenate(pads, axis=0))      # ((K+1)*P, P)
    return packed


# -----------------------------------------------------------------------------
# Pure-JAX reference (mirrors the PyTorch formulation exactly)
# -----------------------------------------------------------------------------
def b_splines_ref(x, grid2d, spline_order):
    g = grid2d[None, :, :]                               # (1, in, G)
    xe = x[:, :, None]                                   # (B, in, 1)
    bases = ((xe >= g[:, :, :-1]) & (xe < g[:, :, 1:])).astype(x.dtype)
    for order in range(1, spline_order + 1):
        left = (xe - g[:, :, :-order - 1]) / \
               (g[:, :, order:-1] - g[:, :, :-order - 1]) * bases[:, :, :-1]
        right = (g[:, :, order + 1:] - xe) / \
                (g[:, :, order + 1:] - g[:, :, 1:-order]) * bases[:, :, 1:]
        bases = left + right
    return bases


def kan_linear_ref(x, bw, sw, grid2d, spline_order):
    base = jax.nn.silu(x) @ bw.T
    B = x.shape[0]
    spl = b_splines_ref(x, grid2d, spline_order).reshape(B, -1) \
        @ sw.reshape(sw.shape[0], -1).T
    return base + spl


def kan_ref(params, x, grid2d_per_layer, spline_order):
    for (bw, sw), grid2d in zip(params, grid2d_per_layer):
        x = kan_linear_ref(x, bw, sw, grid2d, spline_order)
    return x


# -----------------------------------------------------------------------------
# Main
# -----------------------------------------------------------------------------
if __name__ == "__main__":
    grid_size = 5
    spline_order = 3
    input_features = 16
    layers_hidden = [32, 32]
    output_features = 8
    batch = 8

    grid_vals = make_grid_vals(grid_size, spline_order)

    key = jax.random.PRNGKey(0)
    kp, kx = jax.random.split(key)
    params = init_kan(kp, input_features, output_features, layers_hidden,
                      grid_size, spline_order)
    packed = pack_kan_params(params)                      # kernel-facing layout, built once
    x = jax.random.uniform(kx, (batch, input_features), jnp.float32, -1.0, 1.0)

    @jax.jit
    def run(x, packed_weights):
        return kan_forward(x, packed_weights, output_features, grid_vals,
                           spline_order)

    out = run(x, packed)
    out = jax.block_until_ready(out)

    # reference check (pure JAX, mirrors the torch forward)
    grid1d = jnp.asarray(np.array(grid_vals, dtype=np.float32))
    grid2d_per_layer = []
    dims = [input_features] + list(layers_hidden) + [output_features]
    for fi in dims[:-1]:
        grid2d_per_layer.append(jnp.broadcast_to(grid1d, (fi, grid1d.shape[0])))
    ref = kan_ref(params, x, grid2d_per_layer, spline_order)

    assert out.shape == (batch, output_features)
    np.testing.assert_allclose(np.asarray(out), np.asarray(ref),
                               rtol=1e-4, atol=1e-4)
    print("KERNEL_OK")
</pallas_src>

<mosaic_0001>
module attributes {stable_mosaic.version = 11 : i64} {
  func.func @_kan_kernel(%arg0: i32, %arg1: memref<8x128xf32, #tpu.memory_space<vmem>>, %arg2: memref<1152x128xf32, #tpu.memory_space<vmem>>, %arg3: memref<1152x128xf32, #tpu.memory_space<vmem>>, %arg4: memref<1152x128xf32, #tpu.memory_space<vmem>>, %arg5: memref<8x128xf32, #tpu.memory_space<vmem>>) attributes {dimension_semantics = [#tpu.dimension_semantics<parallel>], iteration_bounds = array<i64: 1>, scalar_prefetch = 0 : i64, scratch_operands = 0 : i64, tpu.core_type = #tpu.core_type<tc>, window_params = [{transform_indices = @transform_0, window_bounds = array<i64: 8, 128>}, {pipeline_mode = #tpu.pipeline_mode<synchronous>, transform_indices = @transform_1, window_bounds = array<i64: 1152, 128>}, {pipeline_mode = #tpu.pipeline_mode<synchronous>, transform_indices = @transform_2, window_bounds = array<i64: 1152, 128>}, {pipeline_mode = #tpu.pipeline_mode<synchronous>, transform_indices = @transform_3, window_bounds = array<i64: 1152, 128>}, {transform_indices = @transform_4, window_bounds = array<i64: 8, 128>}]} {
    %c0 = arith.constant 0 : index
    %c0_0 = arith.constant 0 : index
    %0 = vector.load %arg1[%c0, %c0_0] : memref<8x128xf32, #tpu.memory_space<vmem>>, vector<8x128xf32>
    %1 = arith.negf %0 : vector<8x128xf32>
    %2 = math.exp %1 : vector<8x128xf32>
    %cst = arith.constant 1.000000e+00 : f32
    %3 = vector.broadcast %cst : f32 to vector<8x128xf32>
    %4 = arith.addf %3, %2 : vector<8x128xf32>
    %5 = arith.divf %3, %4 : vector<8x128xf32>
    %6 = arith.mulf %0, %5 : vector<8x128xf32>
    %cst_1 = arith.constant -2.200000e+00 : f32
    %7 = vector.broadcast %cst_1 : f32 to vector<8x128xf32>
    %8 = arith.cmpf oge, %0, %7 : vector<8x128xf32>
    %cst_2 = arith.constant -1.800000e+00 : f32
    %9 = vector.broadcast %cst_2 : f32 to vector<8x128xf32>
    %10 = arith.cmpf olt, %0, %9 : vector<8x128xf32>
    %11 = arith.andi %8, %10 : vector<8x128xi1>
    %12 = arith.extui %11 : vector<8x128xi1> to vector<8x128xi32>
    %13 = arith.sitofp %12 : vector<8x128xi32> to vector<8x128xf32>
    %cst_3 = arith.constant -1.800000e+00 : f32
    %14 = vector.broadcast %cst_3 : f32 to vector<8x128xf32>
    %15 = arith.cmpf oge, %0, %14 : vector<8x128xf32>
    %cst_4 = arith.constant -1.400000e+00 : f32
    %16 = vector.broadcast %cst_4 : f32 to vector<8x128xf32>
    %17 = arith.cmpf olt, %0, %16 : vector<8x128xf32>
    %18 = arith.andi %15, %17 : vector<8x128xi1>
    %19 = arith.extui %18 : vector<8x128xi1> to vector<8x128xi32>
    %20 = arith.sitofp %19 : vector<8x128xi32> to vector<8x128xf32>
    %cst_5 = arith.constant -1.400000e+00 : f32
    %21 = vector.broadcast %cst_5 : f32 to vector<8x128xf32>
    %22 = arith.cmpf oge, %0, %21 : vector<8x128xf32>
    %cst_6 = arith.constant -1.000000e+00 : f32
    %23 = vector.broadcast %cst_6 : f32 to vector<8x128xf32>
    %24 = arith.cmpf olt, %0, %23 : vector<8x128xf32>
    %25 = arith.andi %22, %24 : vector<8x128xi1>
    %26 = arith.extui %25 : vector<8x128xi1> to vector<8x128xi32>
    %27 = arith.sitofp %26 : vector<8x128xi32> to vector<8x128xf32>
    %cst_7 = arith.constant -1.000000e+00 : f32
    %28 = vector.broadcast %cst_7 : f32 to vector<8x128xf32>
    %29 = arith.cmpf oge, %0, %28 : vector<8x128xf32>
    %cst_8 = arith.constant -6.000000e-01 : f32
    %30 = vector.broadcast %cst_8 : f32 to vector<8x128xf32>
    %31 = arith.cmpf olt, %0, %30 : vector<8x128xf32>
    %32 = arith.andi %29, %31 : vector<8x128xi1>
    %33 = arith.extui %32 : vector<8x128xi1> to vector<8x128xi32>
    %34 = arith.sitofp %33 : vector<8x128xi32> to vector<8x128xf32>
    %cst_9 = arith.constant -6.000000e-01 : f32
    %35 = vector.broadcast %cst_9 : f32 to vector<8x128xf32>
    %36 = arith.cmpf oge, %0, %35 : vector<8x128xf32>
    %cst_10 = arith.constant -0.199999988 : f32
    %37 = vector.broadcast %cst_10 : f32 to vector<8x128xf32>
    %38 = arith.cmpf olt, %0, %37 : vector<8x128xf32>
    %39 = arith.andi %36, %38 : vector<8x128xi1>
    %40 = arith.extui %39 : vector<8x128xi1> to vector<8x128xi32>
    %41 = arith.sitofp %40 : vector<8x128xi32> to vector<8x128xf32>
    %cst_11 = arith.constant -0.199999988 : f32
    %42 = vector.broadcast %cst_11 : f32 to vector<8x128xf32>
    %43 = arith.cmpf oge, %0, %42 : vector<8x128xf32>
    %cst_12 = arith.constant 0.200000048 : f32
    %44 = vector.broadcast %cst_12 : f32 to vector<8x128xf32>
    %45 = arith.cmpf olt, %0, %44 : vector<8x128xf32>
    %46 = arith.andi %43, %45 : vector<8x128xi1>
    %47 = arith.extui %46 : vector<8x128xi1> to vector<8x128xi32>
    %48 = arith.sitofp %47 : vector<8x128xi32> to vector<8x128xf32>
    %cst_13 = arith.constant 0.200000048 : f32
    %49 = vector.broadcast %cst_13 : f32 to vector<8x128xf32>
    %50 = arith.cmpf oge, %0, %49 : vector<8x128xf32>
    %cst_14 = arith.constant 6.000000e-01 : f32
    %51 = vector.broadcast %cst_14 : f32 to vector<8x128xf32>
    %52 = arith.cmpf olt, %0, %51 : vector<8x128xf32>
    %53 = arith.andi %50, %52 : vector<8x128xi1>
    %54 = arith.extui %53 : vector<8x128xi1> to vector<8x128xi32>
    %55 = arith.sitofp %54 : vector<8x128xi32> to vector<8x128xf32>
    %cst_15 = arith.constant 6.000000e-01 : f32
    %56 = vector.broadcast %cst_15 : f32 to vector<8x128xf32>
    %57 = arith.cmpf oge, %0, %56 : vector<8x128xf32>
    %cst_16 = arith.constant 1.000000e+00 : f32
    %58 = vector.broadcast %cst_16 : f32 to vector<8x128xf32>
    %59 = arith.cmpf olt, %0, %58 : vector<8x128xf32>
    %60 = arith.andi %57, %59 : vector<8x128xi1>
    %61 = arith.extui %60 : vector<8x128xi1> to vector<8x128xi32>
    %62 = arith.sitofp %61 : vector<8x128xi32> to vector<8x128xf32>
    %cst_17 = arith.constant 1.000000e+00 : f32
    %63 = vector.broadcast %cst_17 : f32 to vector<8x128xf32>
    %64 = arith.cmpf oge, %0, %63 : vector<8x128xf32>
    %cst_18 = arith.constant 1.4000001 : f32
    %65 = vector.broadcast %cst_18 : f32 to vector<8x128xf32>
    %66 = arith.cmpf olt, %0, %65 : vector<8x128xf32>
    %67 = arith.andi %64, %66 : vector<8x128xi1>
    %68 = arith.extui %67 : vector<8x128xi1> to vector<8x128xi32>
    %69 = arith.sitofp %68 : vector<8x128xi32> to vector<8x128xf32>
    %cst_19 = arith.constant 1.4000001 : f32
    %70 = vector.broadcast %cst_19 : f32 to vector<8x128xf32>
    %71 = arith.cmpf oge, %0, %70 : vector<8x128xf32>
    %cst_20 = arith.constant 1.800000e+00 : f32
    %72 = vector.broadcast %cst_20 : f32 to vector<8x128xf32>
    %73 = arith.cmpf olt, %0, %72 : vector<8x128xf32>
    %74 = arith.andi %71, %73 : vector<8x128xi1>
    %75 = arith.extui %74 : vector<8x128xi1> to vector<8x128xi32>
    %76 = arith.sitofp %75 : vector<8x128xi32> to vector<8x128xf32>
    %cst_21 = arith.constant 1.800000e+00 : f32
    %77 = vector.broadcast %cst_21 : f32 to vector<8x128xf32>
    %78 = arith.cmpf oge, %0, %77 : vector<8x128xf32>
    %cst_22 = arith.constant 2.200000e+00 : f32
    %79 = vector.broadcast %cst_22 : f32 to vector<8x128xf32>
    %80 = arith.cmpf olt, %0, %79 : vector<8x128xf32>
    %81 = arith.andi %78, %80 : vector<8x128xi1>
    %82 = arith.extui %81 : vector<8x128xi1> to vector<8x128xi32>
    %83 = arith.sitofp %82 : vector<8x128xi32> to vector<8x128xf32>
    %cst_23 = arith.constant -2.200000e+00 : f32
    %84 = vector.broadcast %cst_23 : f32 to vector<8x128xf32>
    %85 = arith.subf %0, %84 : vector<8x128xf32>
    %cst_24 = arith.constant 0.400000095 : f32
    %86 = vector.broadcast %cst_24 : f32 to vector<8x128xf32>
    %87 = arith.divf %85, %86 : vector<8x128xf32>
    %88 = arith.mulf %87, %13 : vector<8x128xf32>
    %cst_25 = arith.constant -1.400000e+00 : f32
    %89 = vector.broadcast %cst_25 : f32 to vector<8x128xf32>
    %90 = arith.subf %89, %0 : vector<8x128xf32>
    %cst_26 = arith.constant 0.399999976 : f32
    %91 = vector.broadcast %cst_26 : f32 to vector<8x128xf32>
    %92 = arith.divf %90, %91 : vector<8x128xf32>
    %93 = arith.mulf %92, %20 : vector<8x128xf32>
    %94 = arith.addf %88, %93 : vector<8x128xf32>
    %cst_27 = arith.constant -1.800000e+00 : f32
    %95 = vector.broadcast %cst_27 : f32 to vector<8x128xf32>
    %96 = arith.subf %0, %95 : vector<8x128xf32>
    %cst_28 = arith.constant 0.399999976 : f32
    %97 = vector.broadcast %cst_28 : f32 to vector<8x128xf32>
    %98 = arith.divf %96, %97 : vector<8x128xf32>
    %99 = arith.mulf %98, %20 : vector<8x128xf32>
    %cst_29 = arith.constant -1.000000e+00 : f32
    %100 = vector.broadcast %cst_29 : f32 to vector<8x128xf32>
    %101 = arith.subf %100, %0 : vector<8x128xf32>
    %cst_30 = arith.constant 0.399999976 : f32
    %102 = vector.broadcast %cst_30 : f32 to vector<8x128xf32>
    %103 = arith.divf %101, %102 : vector<8x128xf32>
    %104 = arith.mulf %103, %27 : vector<8x128xf32>
    %105 = arith.addf %99, %104 : vector<8x128xf32>
    %cst_31 = arith.constant -1.400000e+00 : f32
    %106 = vector.broadcast %cst_31 : f32 to vector<8x128xf32>
    %107 = arith.subf %0, %106 : vector<8x128xf32>
    %cst_32 = arith.constant 0.399999976 : f32
    %108 = vector.broadcast %cst_32 : f32 to vector<8x128xf32>
    %109 = arith.divf %107, %108 : vector<8x128xf32>
    %110 = arith.mulf %109, %27 : vector<8x128xf32>
    %cst_33 = arith.constant -6.000000e-01 : f32
    %111 = vector.broadcast %cst_33 : f32 to vector<8x128xf32>
    %112 = arith.subf %111, %0 : vector<8x128xf32>
    %cst_34 = arith.constant 0.399999976 : f32
    %113 = vector.broadcast %cst_34 : f32 to vector<8x128xf32>
    %114 = arith.divf %112, %113 : vector<8x128xf32>
    %115 = arith.mulf %114, %34 : vector<8x128xf32>
    %116 = arith.addf %110, %115 : vector<8x128xf32>
    %cst_35 = arith.constant -1.000000e+00 : f32
    %117 = vector.broadcast %cst_35 : f32 to vector<8x128xf32>
    %118 = arith.subf %0, %117 : vector<8x128xf32>
    %cst_36 = arith.constant 0.399999976 : f32
    %119 = vector.broadcast %cst_36 : f32 to vector<8x128xf32>
    %120 = arith.divf %118, %119 : vector<8x128xf32>
    %121 = arith.mulf %120, %34 : vector<8x128xf32>
    %cst_37 = arith.constant -0.199999988 : f32
    %122 = vector.broadcast %cst_37 : f32 to vector<8x128xf32>
    %123 = arith.subf %122, %0 : vector<8x128xf32>
    %cst_38 = arith.constant 0.400000036 : f32
    %124 = vector.broadcast %cst_38 : f32 to vector<8x128xf32>
    %125 = arith.divf %123, %124 : vector<8x128xf32>
    %126 = arith.mulf %125, %41 : vector<8x128xf32>
    %127 = arith.addf %121, %126 : vector<8x128xf32>
    %cst_39 = arith.constant -6.000000e-01 : f32
    %128 = vector.broadcast %cst_39 : f32 to vector<8x128xf32>
    %129 = arith.subf %0, %128 : vector<8x128xf32>
    %cst_40 = arith.constant 0.400000036 : f32
    %130 = vector.broadcast %cst_40 : f32 to vector<8x128xf32>
    %131 = arith.divf %129, %130 : vector<8x128xf32>
    %132 = arith.mulf %131, %41 : vector<8x128xf32>
    %cst_41 = arith.constant 0.200000048 : f32
    %133 = vector.broadcast %cst_41 : f32 to vector<8x128xf32>
    %134 = arith.subf %133, %0 : vector<8x128xf32>
    %cst_42 = arith.constant 0.400000036 : f32
    %135 = vector.broadcast %cst_42 : f32 to vector<8x128xf32>
    %136 = arith.divf %134, %135 : vector<8x128xf32>
    %137 = arith.mulf %136, %48 : vector<8x128xf32>
    %138 = arith.addf %132, %137 : vector<8x128xf32>
    %cst_43 = arith.constant -0.199999988 : f32
    %139 = vector.broadcast %cst_43 : f32 to vector<8x128xf32>
    %140 = arith.subf %0, %139 : vector<8x128xf32>
    %cst_44 = arith.constant 0.400000036 : f32
    %141 = vector.broadcast %cst_44 : f32 to vector<8x128xf32>
    %142 = arith.divf %140, %141 : vector<8x128xf32>
    %143 = arith.mulf %142, %48 : vector<8x128xf32>
    %cst_45 = arith.constant 6.000000e-01 : f32
    %144 = vector.broadcast %cst_45 : f32 to vector<8x128xf32>
    %145 = arith.subf %144, %0 : vector<8x128xf32>
    %cst_46 = arith.constant 0.399999976 : f32
    %146 = vector.broadcast %cst_46 : f32 to vector<8x128xf32>
    %147 = arith.divf %145, %146 : vector<8x128xf32>
    %148 = arith.mulf %147, %55 : vector<8x128xf32>
    %149 = arith.addf %143, %148 : vector<8x128xf32>
    %cst_47 = arith.constant 0.200000048 : f32
    %150 = vector.broadcast %cst_47 : f32 to vector<8x128xf32>
    %151 = arith.subf %0, %150 : vector<8x128xf32>
    %cst_48 = arith.constant 0.399999976 : f32
    %152 = vector.broadcast %cst_48 : f32 to vector<8x128xf32>
    %153 = arith.divf %151, %152 : vector<8x128xf32>
    %154 = arith.mulf %153, %55 : vector<8x128xf32>
    %cst_49 = arith.constant 1.000000e+00 : f32
    %155 = vector.broadcast %cst_49 : f32 to vector<8x128xf32>
    %156 = arith.subf %155, %0 : vector<8x128xf32>
    %cst_50 = arith.constant 0.399999976 : f32
    %157 = vector.broadcast %cst_50 : f32 to vector<8x128xf32>
    %158 = arith.divf %156, %157 : vector<8x128xf32>
    %159 = arith.mulf %158, %62 : vector<8x128xf32>
    %160 = arith.addf %154, %159 : vector<8x128xf32>
    %cst_51 = arith.constant 6.000000e-01 : f32
    %161 = vector.broadcast %cst_51 : f32 to vector<8x128xf32>
    %162 = arith.subf %0, %161 : vector<8x128xf32>
    %cst_52 = arith.constant 0.399999976 : f32
    %163 = vector.broadcast %cst_52 : f32 to vector<8x128xf32>
    %164 = arith.divf %162, %163 : vector<8x128xf32>
    %165 = arith.mulf %164, %62 : vector<8x128xf32>
    %cst_53 = arith.constant 1.4000001 : f32
    %166 = vector.broadcast %cst_53 : f32 to vector<8x128xf32>
    %167 = arith.subf %166, %0 : vector<8x128xf32>
    %cst_54 = arith.constant 0.400000095 : f32
    %168 = vector.broadcast %cst_54 : f32 to vector<8x128xf32>
    %169 = arith.divf %167, %168 : vector<8x128xf32>
    %170 = arith.mulf %169, %69 : vector<8x128xf32>
    %171 = arith.addf %165, %170 : vector<8x128xf32>
    %cst_55 = arith.constant 1.000000e+00 : f32
    %172 = vector.broadcast %cst_55 : f32 to vector<8x128xf32>
    %173 = arith.subf %0, %172 : vector<8x128xf32>
    %cst_56 = arith.constant 0.400000095 : f32
    %174 = vector.broadcast %cst_56 : f32 to vector<8x128xf32>
    %175 = arith.divf %173, %174 : vector<8x128xf32>
    %176 = arith.mulf %175, %69 : vector<8x128xf32>
    %cst_57 = arith.constant 1.800000e+00 : f32
    %177 = vector.broadcast %cst_57 : f32 to vector<8x128xf32>
    %178 = arith.subf %177, %0 : vector<8x128xf32>
    %cst_58 = arith.constant 0.399999857 : f32
    %179 = vector.broadcast %cst_58 : f32 to vector<8x128xf32>
    %180 = arith.divf %178, %179 : vector<8x128xf32>
    %181 = arith.mulf %180, %76 : vector<8x128xf32>
    %182 = arith.addf %176, %181 : vector<8x128xf32>
    %cst_59 = arith.constant 1.4000001 : f32
    %183 = vector.broadcast %cst_59 : f32 to vector<8x128xf32>
    %184 = arith.subf %0, %183 : vector<8x128xf32>
    %cst_60 = arith.constant 0.399999857 : f32
    %185 = vector.broadcast %cst_60 : f32 to vector<8x128xf32>
    %186 = arith.divf %184, %185 : vector<8x128xf32>
    %187 = arith.mulf %186, %76 : vector<8x128xf32>
    %cst_61 = arith.constant 2.200000e+00 : f32
    %188 = vector.broadcast %cst_61 : f32 to vector<8x128xf32>
    %189 = arith.subf %188, %0 : vector<8x128xf32>
    %cst_62 = arith.constant 0.400000095 : f32
    %190 = vector.broadcast %cst_62 : f32 to vector<8x128xf32>
    %191 = arith.divf %189, %190 : vector<8x128xf32>
    %192 = arith.mulf %191, %83 : vector<8x128xf32>
    %193 = arith.addf %187, %192 : vector<8x128xf32>
    %cst_63 = arith.constant -2.200000e+00 : f32
    %194 = vector.broadcast %cst_63 : f32 to vector<8x128xf32>
    %195 = arith.subf %0, %194 : vector<8x128xf32>
    %cst_64 = arith.constant 0.800000071 : f32
    %196 = vector.broadcast %cst_64 : f32 to vector<8x128xf32>
    %197 = arith.divf %195, %196 : vector<8x128xf32>
    %198 = arith.mulf %197, %94 : vector<8x128xf32>
    %cst_65 = arith.constant -1.000000e+00 : f32
    %199 = vector.broadcast %cst_65 : f32 to vector<8x128xf32>
    %200 = arith.subf %199, %0 : vector<8x128xf32>
    %cst_66 = arith.constant 0.799999952 : f32
    %201 = vector.broadcast %cst_66 : f32 to vector<8x128xf32>
    %202 = arith.divf %200, %201 : vector<8x128xf32>
    %203 = arith.mulf %202, %105 : vector<8x128xf32>
    %204 = arith.addf %198, %203 : vector<8x128xf32>
    %cst_67 = arith.constant -1.800000e+00 : f32
    %205 = vector.broadcast %cst_67 : f32 to vector<8x128xf32>
    %206 = arith.subf %0, %205 : vector<8x128xf32>
    %cst_68 = arith.constant 0.799999952 : f32
    %207 = vector.broadcast %cst_68 : f32 to vector<8x128xf32>
    %208 = arith.divf %206, %207 : vector<8x128xf32>
    %209 = arith.mulf %208, %105 : vector<8x128xf32>
    %cst_69 = arith.constant -6.000000e-01 : f32
    %210 = vector.broadcast %cst_69 : f32 to vector<8x128xf32>
    %211 = arith.subf %210, %0 : vector<8x128xf32>
    %cst_70 = arith.constant 0.799999952 : f32
    %212 = vector.broadcast %cst_70 : f32 to vector<8x128xf32>
    %213 = arith.divf %211, %212 : vector<8x128xf32>
    %214 = arith.mulf %213, %116 : vector<8x128xf32>
    %215 = arith.addf %209, %214 : vector<8x128xf32>
    %cst_71 = arith.constant -1.400000e+00 : f32
    %216 = vector.broadcast %cst_71 : f32 to vector<8x128xf32>
    %217 = arith.subf %0, %216 : vector<8x128xf32>
    %cst_72 = arith.constant 0.799999952 : f32
    %218 = vector.broadcast %cst_72 : f32 to vector<8x128xf32>
    %219 = arith.divf %217, %218 : vector<8x128xf32>
    %220 = arith.mulf %219, %116 : vector<8x128xf32>
    %cst_73 = arith.constant -0.199999988 : f32
    %221 = vector.broadcast %cst_73 : f32 to vector<8x128xf32>
    %222 = arith.subf %221, %0 : vector<8x128xf32>
    %cst_74 = arith.constant 8.000000e-01 : f32
    %223 = vector.broadcast %cst_74 : f32 to vector<8x128xf32>
    %224 = arith.divf %222, %223 : vector<8x128xf32>
    %225 = arith.mulf %224, %127 : vector<8x128xf32>
    %226 = arith.addf %220, %225 : vector<8x128xf32>
    %cst_75 = arith.constant -1.000000e+00 : f32
    %227 = vector.broadcast %cst_75 : f32 to vector<8x128xf32>
    %228 = arith.subf %0, %227 : vector<8x128xf32>
    %cst_76 = arith.constant 8.000000e-01 : f32
    %229 = vector.broadcast %cst_76 : f32 to vector<8x128xf32>
    %230 = arith.divf %228, %229 : vector<8x128xf32>
    %231 = arith.mulf %230, %127 : vector<8x128xf32>
    %cst_77 = arith.constant 0.200000048 : f32
    %232 = vector.broadcast %cst_77 : f32 to vector<8x128xf32>
    %233 = arith.subf %232, %0 : vector<8x128xf32>
    %cst_78 = arith.constant 0.800000071 : f32
    %234 = vector.broadcast %cst_78 : f32 to vector<8x128xf32>
    %235 = arith.divf %233, %234 : vector<8x128xf32>
    %236 = arith.mulf %235, %138 : vector<8x128xf32>
    %237 = arith.addf %231, %236 : vector<8x128xf32>
    %cst_79 = arith.constant -6.000000e-01 : f32
    %238 = vector.broadcast %cst_79 : f32 to vector<8x128xf32>
    %239 = arith.subf %0, %238 : vector<8x128xf32>
    %cst_80 = arith.constant 0.800000071 : f32
    %240 = vector.broadcast %cst_80 : f32 to vector<8x128xf32>
    %241 = arith.divf %239, %240 : vector<8x128xf32>
    %242 = arith.mulf %241, %138 : vector<8x128xf32>
    %cst_81 = arith.constant 6.000000e-01 : f32
    %243 = vector.broadcast %cst_81 : f32 to vector<8x128xf32>
    %244 = arith.subf %243, %0 : vector<8x128xf32>
    %cst_82 = arith.constant 8.000000e-01 : f32
    %245 = vector.broadcast %cst_82 : f32 to vector<8x128xf32>
    %246 = arith.divf %244, %245 : vector<8x128xf32>
    %247 = arith.mulf %246, %149 : vector<8x128xf32>
    %248 = arith.addf %242, %247 : vector<8x128xf32>
    %cst_83 = arith.constant -0.199999988 : f32
    %249 = vector.broadcast %cst_83 : f32 to vector<8x128xf32>
    %250 = arith.subf %0, %249 : vector<8x128xf32>
    %cst_84 = arith.constant 8.000000e-01 : f32
    %251 = vector.broadcast %cst_84 : f32 to vector<8x128xf32>
    %252 = arith.divf %250, %251 : vector<8x128xf32>
    %253 = arith.mulf %252, %149 : vector<8x128xf32>
    %cst_85 = arith.constant 1.000000e+00 : f32
    %254 = vector.broadcast %cst_85 : f32 to vector<8x128xf32>
    %255 = arith.subf %254, %0 : vector<8x128xf32>
    %cst_86 = arith.constant 0.799999952 : f32
    %256 = vector.broadcast %cst_86 : f32 to vector<8x128xf32>
    %257 = arith.divf %255, %256 : vector<8x128xf32>
    %258 = arith.mulf %257, %160 : vector<8x128xf32>
    %259 = arith.addf %253, %258 : vector<8x128xf32>
    %cst_87 = arith.constant 0.200000048 : f32
    %260 = vector.broadcast %cst_87 : f32 to vector<8x128xf32>
    %261 = arith.subf %0, %260 : vector<8x128xf32>
    %cst_88 = arith.constant 0.799999952 : f32
    %262 = vector.broadcast %cst_88 : f32 to vector<8x128xf32>
    %263 = arith.divf %261, %262 : vector<8x128xf32>
    %264 = arith.mulf %263, %160 : vector<8x128xf32>
    %cst_89 = arith.constant 1.4000001 : f32
    %265 = vector.broadcast %cst_89 : f32 to vector<8x128xf32>
    %266 = arith.subf %265, %0 : vector<8x128xf32>
    %cst_90 = arith.constant 0.800000071 : f32
    %267 = vector.broadcast %cst_90 : f32 to vector<8x128xf32>
    %268 = arith.divf %266, %267 : vector<8x128xf32>
    %269 = arith.mulf %268, %171 : vector<8x128xf32>
    %270 = arith.addf %264, %269 : vector<8x128xf32>
    %cst_91 = arith.constant 6.000000e-01 : f32
    %271 = vector.broadcast %cst_91 : f32 to vector<8x128xf32>
    %272 = arith.subf %0, %271 : vector<8x128xf32>
    %cst_92 = arith.constant 0.800000071 : f32
    %273 = vector.broadcast %cst_92 : f32 to vector<8x128xf32>
    %274 = arith.divf %272, %273 : vector<8x128xf32>
    %275 = arith.mulf %274, %171 : vector<8x128xf32>
    %cst_93 = arith.constant 1.800000e+00 : f32
    %276 = vector.broadcast %cst_93 : f32 to vector<8x128xf32>
    %277 = arith.subf %276, %0 : vector<8x128xf32>
    %cst_94 = arith.constant 0.799999952 : f32
    %278 = vector.broadcast %cst_94 : f32 to vector<8x128xf32>
    %279 = arith.divf %277, %278 : vector<8x128xf32>
    %280 = arith.mulf %279, %182 : vector<8x128xf32>
    %281 = arith.addf %275, %280 : vector<8x128xf32>
    %cst_95 = arith.constant 1.000000e+00 : f32
    %282 = vector.broadcast %cst_95 : f32 to vector<8x128xf32>
    %283 = arith.subf %0, %282 : vector<8x128xf32>
    %cst_96 = arith.constant 0.799999952 : f32
    %284 = vector.broadcast %cst_96 : f32 to vector<8x128xf32>
    %285 = arith.divf %283, %284 : vector<8x128xf32>
    %286 = arith.mulf %285, %182 : vector<8x128xf32>
    %cst_97 = arith.constant 2.200000e+00 : f32
    %287 = vector.broadcast %cst_97 : f32 to vector<8x128xf32>
    %288 = arith.subf %287, %0 : vector<8x128xf32>
    %cst_98 = arith.constant 0.799999952 : f32
    %289 = vector.broadcast %cst_98 : f32 to vector<8x128xf32>
    %290 = arith.divf %288, %289 : vector<8x128xf32>
    %291 = arith.mulf %290, %193 : vector<8x128xf32>
    %292 = arith.addf %286, %291 : vector<8x128xf32>
    %cst_99 = arith.constant -2.200000e+00 : f32
    %293 = vector.broadcast %cst_99 : f32 to vector<8x128xf32>
    %294 = arith.subf %0, %293 : vector<8x128xf32>
    %cst_100 = arith.constant 1.200000e+00 : f32
    %295 = vector.broadcast %cst_100 : f32 to vector<8x128xf32>
    %296 = arith.divf %294, %295 : vector<8x128xf32>
    %297 = arith.mulf %296, %204 : vector<8x128xf32>
    %cst_101 = arith.constant -6.000000e-01 : f32
    %298 = vector.broadcast %cst_101 : f32 to vector<8x128xf32>
    %299 = arith.subf %298, %0 : vector<8x128xf32>
    %cst_102 = arith.constant 1.19999993 : f32
    %300 = vector.broadcast %cst_102 : f32 to vector<8x128xf32>
    %301 = arith.divf %299, %300 : vector<8x128xf32>
    %302 = arith.mulf %301, %215 : vector<8x128xf32>
    %303 = arith.addf %297, %302 : vector<8x128xf32>
    %cst_103 = arith.constant -1.800000e+00 : f32
    %304 = vector.broadcast %cst_103 : f32 to vector<8x128xf32>
    %305 = arith.subf %0, %304 : vector<8x128xf32>
    %cst_104 = arith.constant 1.19999993 : f32
    %306 = vector.broadcast %cst_104 : f32 to vector<8x128xf32>
    %307 = arith.divf %305, %306 : vector<8x128xf32>
    %308 = arith.mulf %307, %215 : vector<8x128xf32>
    %cst_105 = arith.constant -0.199999988 : f32
    %309 = vector.broadcast %cst_105 : f32 to vector<8x128xf32>
    %310 = arith.subf %309, %0 : vector<8x128xf32>
    %cst_106 = arith.constant 1.200000e+00 : f32
    %311 = vector.broadcast %cst_106 : f32 to vector<8x128xf32>
    %312 = arith.divf %310, %311 : vector<8x128xf32>
    %313 = arith.mulf %312, %226 : vector<8x128xf32>
    %314 = arith.addf %308, %313 : vector<8x128xf32>
    %cst_107 = arith.constant -1.400000e+00 : f32
    %315 = vector.broadcast %cst_107 : f32 to vector<8x128xf32>
    %316 = arith.subf %0, %315 : vector<8x128xf32>
    %cst_108 = arith.constant 1.200000e+00 : f32
    %317 = vector.broadcast %cst_108 : f32 to vector<8x128xf32>
    %318 = arith.divf %316, %317 : vector<8x128xf32>
    %319 = arith.mulf %318, %226 : vector<8x128xf32>
    %cst_109 = arith.constant 0.200000048 : f32
    %320 = vector.broadcast %cst_109 : f32 to vector<8x128xf32>
    %321 = arith.subf %320, %0 : vector<8x128xf32>
    %cst_110 = arith.constant 1.200000e+00 : f32
    %322 = vector.broadcast %cst_110 : f32 to vector<8x128xf32>
    %323 = arith.divf %321, %322 : vector<8x128xf32>
    %324 = arith.mulf %323, %237 : vector<8x128xf32>
    %325 = arith.addf %319, %324 : vector<8x128xf32>
    %cst_111 = arith.constant -1.000000e+00 : f32
    %326 = vector.broadcast %cst_111 : f32 to vector<8x128xf32>
    %327 = arith.subf %0, %326 : vector<8x128xf32>
    %cst_112 = arith.constant 1.200000e+00 : f32
    %328 = vector.broadcast %cst_112 : f32 to vector<8x128xf32>
    %329 = arith.divf %327, %328 : vector<8x128xf32>
    %330 = arith.mulf %329, %237 : vector<8x128xf32>
    %cst_113 = arith.constant 6.000000e-01 : f32
    %331 = vector.broadcast %cst_113 : f32 to vector<8x128xf32>
    %332 = arith.subf %331, %0 : vector<8x128xf32>
    %cst_114 = arith.constant 1.200000e+00 : f32
    %333 = vector.broadcast %cst_114 : f32 to vector<8x128xf32>
    %334 = arith.divf %332, %333 : vector<8x128xf32>
    %335 = arith.mulf %334, %248 : vector<8x128xf32>
    %336 = arith.addf %330, %335 : vector<8x128xf32>
    %cst_115 = arith.constant -6.000000e-01 : f32
    %337 = vector.broadcast %cst_115 : f32 to vector<8x128xf32>
    %338 = arith.subf %0, %337 : vector<8x128xf32>
    %cst_116 = arith.constant 1.200000e+00 : f32
    %339 = vector.broadcast %cst_116 : f32 to vector<8x128xf32>
    %340 = arith.divf %338, %339 : vector<8x128xf32>
    %341 = arith.mulf %340, %248 : vector<8x128xf32>
    %cst_117 = arith.constant 1.000000e+00 : f32
    %342 = vector.broadcast %cst_117 : f32 to vector<8x128xf32>
    %343 = arith.subf %342, %0 : vector<8x128xf32>
    %cst_118 = arith.constant 1.200000e+00 : f32
    %344 = vector.broadcast %cst_118 : f32 to vector<8x128xf32>
    %345 = arith.divf %343, %344 : vector<8x128xf32>
    %346 = arith.mulf %345, %259 : vector<8x128xf32>
    %347 = arith.addf %341, %346 : vector<8x128xf32>
    %cst_119 = arith.constant -0.199999988 : f32
    %348 = vector.broadcast %cst_119 : f32 to vector<8x128xf32>
    %349 = arith.subf %0, %348 : vector<8x128xf32>
    %cst_120 = arith.constant 1.200000e+00 : f32
    %350 = vector.broadcast %cst_120 : f32 to vector<8x128xf32>
    %351 = arith.divf %349, %350 : vector<8x128xf32>
    %352 = arith.mulf %351, %259 : vector<8x128xf32>
    %cst_121 = arith.constant 1.4000001 : f32
    %353 = vector.broadcast %cst_121 : f32 to vector<8x128xf32>
    %354 = arith.subf %353, %0 : vector<8x128xf32>
    %cst_122 = arith.constant 1.200000e+00 : f32
    %355 = vector.broadcast %cst_122 : f32 to vector<8x128xf32>
    %356 = arith.divf %354, %355 : vector<8x128xf32>
    %357 = arith.mulf %356, %270 : vector<8x128xf32>
    %358 = arith.addf %352, %357 : vector<8x128xf32>
    %cst_123 = arith.constant 0.200000048 : f32
    %359 = vector.broadcast %cst_123 : f32 to vector<8x128xf32>
    %360 = arith.subf %0, %359 : vector<8x128xf32>
    %cst_124 = arith.constant 1.200000e+00 : f32
    %361 = vector.broadcast %cst_124 : f32 to vector<8x128xf32>
    %362 = arith.divf %360, %361 : vector<8x128xf32>
    %363 = arith.mulf %362, %270 : vector<8x128xf32>
    %cst_125 = arith.constant 1.800000e+00 : f32
    %364 = vector.broadcast %cst_125 : f32 to vector<8x128xf32>
    %365 = arith.subf %364, %0 : vector<8x128xf32>
    %cst_126 = arith.constant 1.19999993 : f32
    %366 = vector.broadcast %cst_126 : f32 to vector<8x128xf32>
    %367 = arith.divf %365, %366 : vector<8x128xf32>
    %368 = arith.mulf %367, %281 : vector<8x128xf32>
    %369 = arith.addf %363, %368 : vector<8x128xf32>
    %cst_127 = arith.constant 6.000000e-01 : f32
    %370 = vector.broadcast %cst_127 : f32 to vector<8x128xf32>
    %371 = arith.subf %0, %370 : vector<8x128xf32>
    %cst_128 = arith.constant 1.19999993 : f32
    %372 = vector.broadcast %cst_128 : f32 to vector<8x128xf32>
    %373 = arith.divf %371, %372 : vector<8x128xf32>
    %374 = arith.mulf %373, %281 : vector<8x128xf32>
    %cst_129 = arith.constant 2.200000e+00 : f32
    %375 = vector.broadcast %cst_129 : f32 to vector<8x128xf32>
    %376 = arith.subf %375, %0 : vector<8x128xf32>
    %cst_130 = arith.constant 1.200000e+00 : f32
    %377 = vector.broadcast %cst_130 : f32 to vector<8x128xf32>
    %378 = arith.divf %376, %377 : vector<8x128xf32>
    %379 = arith.mulf %378, %292 : vector<8x128xf32>
    %380 = arith.addf %374, %379 : vector<8x128xf32>
    %381 = tpu.concatenate %6, %303, %314, %325, %336, %347, %358, %369, %380 in 1 : vector<8x128xf32>, vector<8x128xf32>, vector<8x128xf32>, vector<8x128xf32>, vector<8x128xf32>, vector<8x128xf32>, vector<8x128xf32>, vector<8x128xf32>, vector<8x128xf32> -> vector<8x1152xf32>
    %c0_131 = arith.constant 0 : index
    %c0_132 = arith.constant 0 : index
    %382 = vector.load %arg2[%c0_131, %c0_132] : memref<1152x128xf32, #tpu.memory_space<vmem>>, vector<1152x128xf32>
    %cst_133 = arith.constant dense<0.000000e+00> : vector<8x128xf32>
    %383 = tpu.matmul %381, %382, %cst_133 {dimension_numbers = #tpu.dot_dimension_numbers<[1], [0], [0], [1], [0, 0, 1, 1], [], []>} : vector<8x1152xf32>, vector<1152x128xf32>, vector<8x128xf32> -> vector<8x128xf32>
    %384 = arith.negf %383 : vector<8x128xf32>
    %385 = math.exp %384 : vector<8x128xf32>
    %cst_134 = arith.constant 1.000000e+00 : f32
    %386 = vector.broadcast %cst_134 : f32 to vector<8x128xf32>
    %387 = arith.addf %386, %385 : vector<8x128xf32>
    %388 = arith.divf %386, %387 : vector<8x128xf32>
    %389 = arith.mulf %383, %388 : vector<8x128xf32>
    %cst_135 = arith.constant -2.200000e+00 : f32
    %390 = vector.broadcast %cst_135 : f32 to vector<8x128xf32>
    %391 = arith.cmpf oge, %383, %390 : vector<8x128xf32>
    %cst_136 = arith.constant -1.800000e+00 : f32
    %392 = vector.broadcast %cst_136 : f32 to vector<8x128xf32>
    %393 = arith.cmpf olt, %383, %392 : vector<8x128xf32>
    %394 = arith.andi %391, %393 : vector<8x128xi1>
    %395 = arith.extui %394 : vector<8x128xi1> to vector<8x128xi32>
    %396 = arith.sitofp %395 : vector<8x128xi32> to vector<8x128xf32>
    %cst_137 = arith.constant -1.800000e+00 : f32
    %397 = vector.broadcast %cst_137 : f32 to vector<8x128xf32>
    %398 = arith.cmpf oge, %383, %397 : vector<8x128xf32>
    %cst_138 = arith.constant -1.400000e+00 : f32
    %399 = vector.broadcast %cst_138 : f32 to vector<8x128xf32>
    %400 = arith.cmpf olt, %383, %399 : vector<8x128xf32>
    %401 = arith.andi %398, %400 : vector<8x128xi1>
    %402 = arith.extui %401 : vector<8x128xi1> to vector<8x128xi32>
    %403 = arith.sitofp %402 : vector<8x128xi32> to vector<8x128xf32>
    %cst_139 = arith.constant -1.400000e+00 : f32
    %404 = vector.broadcast %cst_139 : f32 to vector<8x128xf32>
    %405 = arith.cmpf oge, %383, %404 : vector<8x128xf32>
    %cst_140 = arith.constant -1.000000e+00 : f32
    %406 = vector.broadcast %cst_140 : f32 to vector<8x128xf32>
    %407 = arith.cmpf olt, %383, %406 : vector<8x128xf32>
    %408 = arith.andi %405, %407 : vector<8x128xi1>
    %409 = arith.extui %408 : vector<8x128xi1> to vector<8x128xi32>
    %410 = arith.sitofp %409 : vector<8x128xi32> to vector<8x128xf32>
    %cst_141 = arith.constant -1.000000e+00 : f32
    %411 = vector.broadcast %cst_141 : f32 to vector<8x128xf32>
    %412 = arith.cmpf oge, %383, %411 : vector<8x128xf32>
    %cst_142 = arith.constant -6.000000e-01 : f32
    %413 = vector.broadcast %cst_142 : f32 to vector<8x128xf32>
    %414 = arith.cmpf olt, %383, %413 : vector<8x128xf32>
    %415 = arith.andi %412, %414 : vector<8x128xi1>
    %416 = arith.extui %415 : vector<8x128xi1> to vector<8x128xi32>
    %417 = arith.sitofp %416 : vector<8x128xi32> to vector<8x128xf32>
    %cst_143 = arith.constant -6.000000e-01 : f32
    %418 = vector.broadcast %cst_143 : f32 to vector<8x128xf32>
    %419 = arith.cmpf oge, %383, %418 : vector<8x128xf32>
    %cst_144 = arith.constant -0.199999988 : f32
    %420 = vector.broadcast %cst_144 : f32 to vector<8x128xf32>
    %421 = arith.cmpf olt, %383, %420 : vector<8x128xf32>
    %422 = arith.andi %419, %421 : vector<8x128xi1>
    %423 = arith.extui %422 : vector<8x128xi1> to vector<8x128xi32>
    %424 = arith.sitofp %423 : vector<8x128xi32> to vector<8x128xf32>
    %cst_145 = arith.constant -0.199999988 : f32
    %425 = vector.broadcast %cst_145 : f32 to vector<8x128xf32>
    %426 = arith.cmpf oge, %383, %425 : vector<8x128xf32>
    %cst_146 = arith.constant 0.200000048 : f32
    %427 = vector.broadcast %cst_146 : f32 to vector<8x128xf32>
    %428 = arith.cmpf olt, %383, %427 : vector<8x128xf32>
    %429 = arith.andi %426, %428 : vector<8x128xi1>
    %430 = arith.extui %429 : vector<8x128xi1> to vector<8x128xi32>
    %431 = arith.sitofp %430 : vector<8x128xi32> to vector<8x128xf32>
    %cst_147 = arith.constant 0.200000048 : f32
    %432 = vector.broadcast %cst_147 : f32 to vector<8x128xf32>
    %433 = arith.cmpf oge, %383, %432 : vector<8x128xf32>
    %cst_148 = arith.constant 6.000000e-01 : f32
    %434 = vector.broadcast %cst_148 : f32 to vector<8x128xf32>
    %435 = arith.cmpf olt, %383, %434 : vector<8x128xf32>
    %436 = arith.andi %433, %435 : vector<8x128xi1>
    %437 = arith.extui %436 : vector<8x128xi1> to vector<8x128xi32>
    %438 = arith.sitofp %437 : vector<8x128xi32> to vector<8x128xf32>
    %cst_149 = arith.constant 6.000000e-01 : f32
    %439 = vector.broadcast %cst_149 : f32 to vector<8x128xf32>
    %440 = arith.cmpf oge, %383, %439 : vector<8x128xf32>
    %cst_150 = arith.constant 1.000000e+00 : f32
    %441 = vector.broadcast %cst_150 : f32 to vector<8x128xf32>
    %442 = arith.cmpf olt, %383, %441 : vector<8x128xf32>
    %443 = arith.andi %440, %442 : vector<8x128xi1>
    %444 = arith.extui %443 : vector<8x128xi1> to vector<8x128xi32>
    %445 = arith.sitofp %444 : vector<8x128xi32> to vector<8x128xf32>
    %cst_151 = arith.constant 1.000000e+00 : f32
    %446 = vector.broadcast %cst_151 : f32 to vector<8x128xf32>
    %447 = arith.cmpf oge, %383, %446 : vector<8x128xf32>
    %cst_152 = arith.constant 1.4000001 : f32
    %448 = vector.broadcast %cst_152 : f32 to vector<8x128xf32>
    %449 = arith.cmpf olt, %383, %448 : vector<8x128xf32>
    %450 = arith.andi %447, %449 : vector<8x128xi1>
    %451 = arith.extui %450 : vector<8x128xi1> to vector<8x128xi32>
    %452 = arith.sitofp %451 : vector<8x128xi32> to vector<8x128xf32>
    %cst_153 = arith.constant 1.4000001 : f32
    %453 = vector.broadcast %cst_153 : f32 to vector<8x128xf32>
    %454 = arith.cmpf oge, %383, %453 : vector<8x128xf32>
    %cst_154 = arith.constant 1.800000e+00 : f32
    %455 = vector.broadcast %cst_154 : f32 to vector<8x128xf32>
    %456 = arith.cmpf olt, %383, %455 : vector<8x128xf32>
    %457 = arith.andi %454, %456 : vector<8x128xi1>
    %458 = arith.extui %457 : vector<8x128xi1> to vector<8x128xi32>
    %459 = arith.sitofp %458 : vector<8x128xi32> to vector<8x128xf32>
    %cst_155 = arith.constant 1.800000e+00 : f32
    %460 = vector.broadcast %cst_155 : f32 to vector<8x128xf32>
    %461 = arith.cmpf oge, %383, %460 : vector<8x128xf32>
    %cst_156 = arith.constant 2.200000e+00 : f32
    %462 = vector.broadcast %cst_156 : f32 to vector<8x128xf32>
    %463 = arith.cmpf olt, %383, %462 : vector<8x128xf32>
    %464 = arith.andi %461, %463 : vector<8x128xi1>
    %465 = arith.extui %464 : vector<8x128xi1> to vector<8x128xi32>
    %466 = arith.sitofp %465 : vector<8x128xi32> to vector<8x128xf32>
    %cst_157 = arith.constant -2.200000e+00 : f32
    %467 = vector.broadcast %cst_157 : f32 to vector<8x128xf32>
    %468 = arith.subf %383, %467 : vector<8x128xf32>
    %cst_158 = arith.constant 0.400000095 : f32
    %469 = vector.broadcast %cst_158 : f32 to vector<8x128xf32>
    %470 = arith.divf %468, %469 : vector<8x128xf32>
    %471 = arith.mulf %470, %396 : vector<8x128xf32>
    %cst_159 = arith.constant -1.400000e+00 : f32
    %472 = vector.broadcast %cst_159 : f32 to vector<8x128xf32>
    %473 = arith.subf %472, %383 : vector<8x128xf32>
    %cst_160 = arith.constant 0.399999976 : f32
    %474 = vector.broadcast %cst_160 : f32 to vector<8x128xf32>
    %475 = arith.divf %473, %474 : vector<8x128xf32>
    %476 = arith.mulf %475, %403 : vector<8x128xf32>
    %477 = arith.addf %471, %476 : vector<8x128xf32>
    %cst_161 = arith.constant -1.800000e+00 : f32
    %478 = vector.broadcast %cst_161 : f32 to vector<8x128xf32>
    %479 = arith.subf %383, %478 : vector<8x128xf32>
    %cst_162 = arith.constant 0.399999976 : f32
    %480 = vector.broadcast %cst_162 : f32 to vector<8x128xf32>
    %481 = arith.divf %479, %480 : vector<8x128xf32>
    %482 = arith.mulf %481, %403 : vector<8x128xf32>
    %cst_163 = arith.constant -1.000000e+00 : f32
    %483 = vector.broadcast %cst_163 : f32 to vector<8x128xf32>
    %484 = arith.subf %483, %383 : vector<8x128xf32>
    %cst_164 = arith.constant 0.399999976 : f32
    %485 = vector.broadcast %cst_164 : f32 to vector<8x128xf32>
    %486 = arith.divf %484, %485 : vector<8x128xf32>
    %487 = arith.mulf %486, %410 : vector<8x128xf32>
    %488 = arith.addf %482, %487 : vector<8x128xf32>
    %cst_165 = arith.constant -1.400000e+00 : f32
    %489 = vector.broadcast %cst_165 : f32 to vector<8x128xf32>
    %490 = arith.subf %383, %489 : vector<8x128xf32>
    %cst_166 = arith.constant 0.399999976 : f32
    %491 = vector.broadcast %cst_166 : f32 to vector<8x128xf32>
    %492 = arith.divf %490, %491 : vector<8x128xf32>
    %493 = arith.mulf %492, %410 : vector<8x128xf32>
    %cst_167 = arith.constant -6.000000e-01 : f32
    %494 = vector.broadcast %cst_167 : f32 to vector<8x128xf32>
    %495 = arith.subf %494, %383 : vector<8x128xf32>
    %cst_168 = arith.constant 0.399999976 : f32
    %496 = vector.broadcast %cst_168 : f32 to vector<8x128xf32>
    %497 = arith.divf %495, %496 : vector<8x128xf32>
    %498 = arith.mulf %497, %417 : vector<8x128xf32>
    %499 = arith.addf %493, %498 : vector<8x128xf32>
    %cst_169 = arith.constant -1.000000e+00 : f32
    %500 = vector.broadcast %cst_169 : f32 to vector<8x128xf32>
    %501 = arith.subf %383, %500 : vector<8x128xf32>
    %cst_170 = arith.constant 0.399999976 : f32
    %502 = vector.broadcast %cst_170 : f32 to vector<8x128xf32>
    %503 = arith.divf %501, %502 : vector<8x128xf32>
    %504 = arith.mulf %503, %417 : vector<8x128xf32>
    %cst_171 = arith.constant -0.199999988 : f32
    %505 = vector.broadcast %cst_171 : f32 to vector<8x128xf32>
    %506 = arith.subf %505, %383 : vector<8x128xf32>
    %cst_172 = arith.constant 0.400000036 : f32
    %507 = vector.broadcast %cst_172 : f32 to vector<8x128xf32>
    %508 = arith.divf %506, %507 : vector<8x128xf32>
    %509 = arith.mulf %508, %424 : vector<8x128xf32>
    %510 = arith.addf %504, %509 : vector<8x128xf32>
    %cst_173 = arith.constant -6.000000e-01 : f32
    %511 = vector.broadcast %cst_173 : f32 to vector<8x128xf32>
    %512 = arith.subf %383, %511 : vector<8x128xf32>
    %cst_174 = arith.constant 0.400000036 : f32
    %513 = vector.broadcast %cst_174 : f32 to vector<8x128xf32>
    %514 = arith.divf %512, %513 : vector<8x128xf32>
    %515 = arith.mulf %514, %424 : vector<8x128xf32>
    %cst_175 = arith.constant 0.200000048 : f32
    %516 = vector.broadcast %cst_175 : f32 to vector<8x128xf32>
    %517 = arith.subf %516, %383 : vector<8x128xf32>
    %cst_176 = arith.constant 0.400000036 : f32
    %518 = vector.broadcast %cst_176 : f32 to vector<8x128xf32>
    %519 = arith.divf %517, %518 : vector<8x128xf32>
    %520 = arith.mulf %519, %431 : vector<8x128xf32>
    %521 = arith.addf %515, %520 : vector<8x128xf32>
    %cst_177 = arith.constant -0.199999988 : f32
    %522 = vector.broadcast %cst_177 : f32 to vector<8x128xf32>
    %523 = arith.subf %383, %522 : vector<8x128xf32>
    %cst_178 = arith.constant 0.400000036 : f32
    %524 = vector.broadcast %cst_178 : f32 to vector<8x128xf32>
    %525 = arith.divf %523, %524 : vector<8x128xf32>
    %526 = arith.mulf %525, %431 : vector<8x128xf32>
    %cst_179 = arith.constant 6.000000e-01 : f32
    %527 = vector.broadcast %cst_179 : f32 to vector<8x128xf32>
    %528 = arith.subf %527, %383 : vector<8x128xf32>
    %cst_180 = arith.constant 0.399999976 : f32
    %529 = vector.broadcast %cst_180 : f32 to vector<8x128xf32>
    %530 = arith.divf %528, %529 : vector<8x128xf32>
    %531 = arith.mulf %530, %438 : vector<8x128xf32>
    %532 = arith.addf %526, %531 : vector<8x128xf32>
    %cst_181 = arith.constant 0.200000048 : f32
    %533 = vector.broadcast %cst_181 : f32 to vector<8x128xf32>
    %534 = arith.subf %383, %533 : vector<8x128xf32>
    %cst_182 = arith.constant 0.399999976 : f32
    %535 = vector.broadcast %cst_182 : f32 to vector<8x128xf32>
    %536 = arith.divf %534, %535 : vector<8x128xf32>
    %537 = arith.mulf %536, %438 : vector<8x128xf32>
    %cst_183 = arith.constant 1.000000e+00 : f32
    %538 = vector.broadcast %cst_183 : f32 to vector<8x128xf32>
    %539 = arith.subf %538, %383 : vector<8x128xf32>
    %cst_184 = arith.constant 0.399999976 : f32
    %540 = vector.broadcast %cst_184 : f32 to vector<8x128xf32>
    %541 = arith.divf %539, %540 : vector<8x128xf32>
    %542 = arith.mulf %541, %445 : vector<8x128xf32>
    %543 = arith.addf %537, %542 : vector<8x128xf32>
    %cst_185 = arith.constant 6.000000e-01 : f32
    %544 = vector.broadcast %cst_185 : f32 to vector<8x128xf32>
    %545 = arith.subf %383, %544 : vector<8x128xf32>
    %cst_186 = arith.constant 0.399999976 : f32
    %546 = vector.broadcast %cst_186 : f32 to vector<8x128xf32>
    %547 = arith.divf %545, %546 : vector<8x128xf32>
    %548 = arith.mulf %547, %445 : vector<8x128xf32>
    %cst_187 = arith.constant 1.4000001 : f32
    %549 = vector.broadcast %cst_187 : f32 to vector<8x128xf32>
    %550 = arith.subf %549, %383 : vector<8x128xf32>
    %cst_188 = arith.constant 0.400000095 : f32
    %551 = vector.broadcast %cst_188 : f32 to vector<8x128xf32>
    %552 = arith.divf %550, %551 : vector<8x128xf32>
    %553 = arith.mulf %552, %452 : vector<8x128xf32>
    %554 = arith.addf %548, %553 : vector<8x128xf32>
    %cst_189 = arith.constant 1.000000e+00 : f32
    %555 = vector.broadcast %cst_189 : f32 to vector<8x128xf32>
    %556 = arith.subf %383, %555 : vector<8x128xf32>
    %cst_190 = arith.constant 0.400000095 : f32
    %557 = vector.broadcast %cst_190 : f32 to vector<8x128xf32>
    %558 = arith.divf %556, %557 : vector<8x128xf32>
    %559 = arith.mulf %558, %452 : vector<8x128xf32>
    %cst_191 = arith.constant 1.800000e+00 : f32
    %560 = vector.broadcast %cst_191 : f32 to vector<8x128xf32>
    %561 = arith.subf %560, %383 : vector<8x128xf32>
    %cst_192 = arith.constant 0.399999857 : f32
    %562 = vector.broadcast %cst_192 : f32 to vector<8x128xf32>
    %563 = arith.divf %561, %562 : vector<8x128xf32>
    %564 = arith.mulf %563, %459 : vector<8x128xf32>
    %565 = arith.addf %559, %564 : vector<8x128xf32>
    %cst_193 = arith.constant 1.4000001 : f32
    %566 = vector.broadcast %cst_193 : f32 to vector<8x128xf32>
    %567 = arith.subf %383, %566 : vector<8x128xf32>
    %cst_194 = arith.constant 0.399999857 : f32
    %568 = vector.broadcast %cst_194 : f32 to vector<8x128xf32>
    %569 = arith.divf %567, %568 : vector<8x128xf32>
    %570 = arith.mulf %569, %459 : vector<8x128xf32>
    %cst_195 = arith.constant 2.200000e+00 : f32
    %571 = vector.broadcast %cst_195 : f32 to vector<8x128xf32>
    %572 = arith.subf %571, %383 : vector<8x128xf32>
    %cst_196 = arith.constant 0.400000095 : f32
    %573 = vector.broadcast %cst_196 : f32 to vector<8x128xf32>
    %574 = arith.divf %572, %573 : vector<8x128xf32>
    %575 = arith.mulf %574, %466 : vector<8x128xf32>
    %576 = arith.addf %570, %575 : vector<8x128xf32>
    %cst_197 = arith.constant -2.200000e+00 : f32
    %577 = vector.broadcast %cst_197 : f32 to vector<8x128xf32>
    %578 = arith.subf %383, %577 : vector<8x128xf32>
    %cst_198 = arith.constant 0.800000071 : f32
    %579 = vector.broadcast %cst_198 : f32 to vector<8x128xf32>
    %580 = arith.divf %578, %579 : vector<8x128xf32>
    %581 = arith.mulf %580, %477 : vector<8x128xf32>
    %cst_199 = arith.constant -1.000000e+00 : f32
    %582 = vector.broadcast %cst_199 : f32 to vector<8x128xf32>
    %583 = arith.subf %582, %383 : vector<8x128xf32>
    %cst_200 = arith.constant 0.799999952 : f32
    %584 = vector.broadcast %cst_200 : f32 to vector<8x128xf32>
    %585 = arith.divf %583, %584 : vector<8x128xf32>
    %586 = arith.mulf %585, %488 : vector<8x128xf32>
    %587 = arith.addf %581, %586 : vector<8x128xf32>
    %cst_201 = arith.constant -1.800000e+00 : f32
    %588 = vector.broadcast %cst_201 : f32 to vector<8x128xf32>
    %589 = arith.subf %383, %588 : vector<8x128xf32>
    %cst_202 = arith.constant 0.799999952 : f32
    %590 = vector.broadcast %cst_202 : f32 to vector<8x128xf32>
    %591 = arith.divf %589, %590 : vector<8x128xf32>
    %592 = arith.mulf %591, %488 : vector<8x128xf32>
    %cst_203 = arith.constant -6.000000e-01 : f32
    %593 = vector.broadcast %cst_203 : f32 to vector<8x128xf32>
    %594 = arith.subf %593, %383 : vector<8x128xf32>
    %cst_204 = arith.constant 0.799999952 : f32
    %595 = vector.broadcast %cst_204 : f32 to vector<8x128xf32>
    %596 = arith.divf %594, %595 : vector<8x128xf32>
    %597 = arith.mulf %596, %499 : vector<8x128xf32>
    %598 = arith.addf %592, %597 : vector<8x128xf32>
    %cst_205 = arith.constant -1.400000e+00 : f32
    %599 = vector.broadcast %cst_205 : f32 to vector<8x128xf32>
    %600 = arith.subf %383, %599 : vector<8x128xf32>
    %cst_206 = arith.constant 0.799999952 : f32
    %601 = vector.broadcast %cst_206 : f32 to vector<8x128xf32>
    %602 = arith.divf %600, %601 : vector<8x128xf32>
    %603 = arith.mulf %602, %499 : vector<8x128xf32>
    %cst_207 = arith.constant -0.199999988 : f32
    %604 = vector.broadcast %cst_207 : f32 to vector<8x128xf32>
    %605 = arith.subf %604, %383 : vector<8x128xf32>
    %cst_208 = arith.constant 8.000000e-01 : f32
    %606 = vector.broadcast %cst_208 : f32 to vector<8x128xf32>
    %607 = arith.divf %605, %606 : vector<8x128xf32>
    %608 = arith.mulf %607, %510 : vector<8x128xf32>
    %609 = arith.addf %603, %608 : vector<8x128xf32>
    %cst_209 = arith.constant -1.000000e+00 : f32
    %610 = vector.broadcast %cst_209 : f32 to vector<8x128xf32>
    %611 = arith.subf %383, %610 : vector<8x128xf32>
    %cst_210 = arith.constant 8.000000e-01 : f32
    %612 = vector.broadcast %cst_210 : f32 to vector<8x128xf32>
    %613 = arith.divf %611, %612 : vector<8x128xf32>
    %614 = arith.mulf %613, %510 : vector<8x128xf32>
    %cst_211 = arith.constant 0.200000048 : f32
    %615 = vector.broadcast %cst_211 : f32 to vector<8x128xf32>
    %616 = arith.subf %615, %383 : vector<8x128xf32>
    %cst_212 = arith.constant 0.800000071 : f32
    %617 = vector.broadcast %cst_212 : f32 to vector<8x128xf32>
    %618 = arith.divf %616, %617 : vector<8x128xf32>
    %619 = arith.mulf %618, %521 : vector<8x128xf32>
    %620 = arith.addf %614, %619 : vector<8x128xf32>
    %cst_213 = arith.constant -6.000000e-01 : f32
    %621 = vector.broadcast %cst_213 : f32 to vector<8x128xf32>
    %622 = arith.subf %383, %621 : vector<8x128xf32>
    %cst_214 = arith.constant 0.800000071 : f32
    %623 = vector.broadcast %cst_214 : f32 to vector<8x128xf32>
    %624 = arith.divf %622, %623 : vector<8x128xf32>
    %625 = arith.mulf %624, %521 : vector<8x128xf32>
    %cst_215 = arith.constant 6.000000e-01 : f32
    %626 = vector.broadcast %cst_215 : f32 to vector<8x128xf32>
    %627 = arith.subf %626, %383 : vector<8x128xf32>
    %cst_216 = arith.constant 8.000000e-01 : f32
    %628 = vector.broadcast %cst_216 : f32 to vector<8x128xf32>
    %629 = arith.divf %627, %628 : vector<8x128xf32>
    %630 = arith.mulf %629, %532 : vector<8x128xf32>
    %631 = arith.addf %625, %630 : vector<8x128xf32>
    %cst_217 = arith.constant -0.199999988 : f32
    %632 = vector.broadcast %cst_217 : f32 to vector<8x128xf32>
    %633 = arith.subf %383, %632 : vector<8x128xf32>
    %cst_218 = arith.constant 8.000000e-01 : f32
    %634 = vector.broadcast %cst_218 : f32 to vector<8x128xf32>
    %635 = arith.divf %633, %634 : vector<8x128xf32>
    %636 = arith.mulf %635, %532 : vector<8x128xf32>
    %cst_219 = arith.constant 1.000000e+00 : f32
    %637 = vector.broadcast %cst_219 : f32 to vector<8x128xf32>
    %638 = arith.subf %637, %383 : vector<8x128xf32>
    %cst_220 = arith.constant 0.799999952 : f32
    %639 = vector.broadcast %cst_220 : f32 to vector<8x128xf32>
    %640 = arith.divf %638, %639 : vector<8x128xf32>
    %641 = arith.mulf %640, %543 : vector<8x128xf32>
    %642 = arith.addf %636, %641 : vector<8x128xf32>
    %cst_221 = arith.constant 0.200000048 : f32
    %643 = vector.broadcast %cst_221 : f32 to vector<8x128xf32>
    %644 = arith.subf %383, %643 : vector<8x128xf32>
    %cst_222 = arith.constant 0.799999952 : f32
    %645 = vector.broadcast %cst_222 : f32 to vector<8x128xf32>
    %646 = arith.divf %644, %645 : vector<8x128xf32>
    %647 = arith.mulf %646, %543 : vector<8x128xf32>
    %cst_223 = arith.constant 1.4000001 : f32
    %648 = vector.broadcast %cst_223 : f32 to vector<8x128xf32>
    %649 = arith.subf %648, %383 : vector<8x128xf32>
    %cst_224 = arith.constant 0.800000071 : f32
    %650 = vector.broadcast %cst_224 : f32 to vector<8x128xf32>
    %651 = arith.divf %649, %650 : vector<8x128xf32>
    %652 = arith.mulf %651, %554 : vector<8x128xf32>
    %653 = arith.addf %647, %652 : vector<8x128xf32>
    %cst_225 = arith.constant 6.000000e-01 : f32
    %654 = vector.broadcast %cst_225 : f32 to vector<8x128xf32>
    %655 = arith.subf %383, %654 : vector<8x128xf32>
    %cst_226 = arith.constant 0.800000071 : f32
    %656 = vector.broadcast %cst_226 : f32 to vector<8x128xf32>
    %657 = arith.divf %655, %656 : vector<8x128xf32>
    %658 = arith.mulf %657, %554 : vector<8x128xf32>
    %cst_227 = arith.constant 1.800000e+00 : f32
    %659 = vector.broadcast %cst_227 : f32 to vector<8x128xf32>
    %660 = arith.subf %659, %383 : vector<8x128xf32>
    %cst_228 = arith.constant 0.799999952 : f32
    %661 = vector.broadcast %cst_228 : f32 to vector<8x128xf32>
    %662 = arith.divf %660, %661 : vector<8x128xf32>
    %663 = arith.mulf %662, %565 : vector<8x128xf32>
    %664 = arith.addf %658, %663 : vector<8x128xf32>
    %cst_229 = arith.constant 1.000000e+00 : f32
    %665 = vector.broadcast %cst_229 : f32 to vector<8x128xf32>
    %666 = arith.subf %383, %665 : vector<8x128xf32>
    %cst_230 = arith.constant 0.799999952 : f32
    %667 = vector.broadcast %cst_230 : f32 to vector<8x128xf32>
    %668 = arith.divf %666, %667 : vector<8x128xf32>
    %669 = arith.mulf %668, %565 : vector<8x128xf32>
    %cst_231 = arith.constant 2.200000e+00 : f32
    %670 = vector.broadcast %cst_231 : f32 to vector<8x128xf32>
    %671 = arith.subf %670, %383 : vector<8x128xf32>
    %cst_232 = arith.constant 0.799999952 : f32
    %672 = vector.broadcast %cst_232 : f32 to vector<8x128xf32>
    %673 = arith.divf %671, %672 : vector<8x128xf32>
    %674 = arith.mulf %673, %576 : vector<8x128xf32>
    %675 = arith.addf %669, %674 : vector<8x128xf32>
    %cst_233 = arith.constant -2.200000e+00 : f32
    %676 = vector.broadcast %cst_233 : f32 to vector<8x128xf32>
    %677 = arith.subf %383, %676 : vector<8x128xf32>
    %cst_234 = arith.constant 1.200000e+00 : f32
    %678 = vector.broadcast %cst_234 : f32 to vector<8x128xf32>
    %679 = arith.divf %677, %678 : vector<8x128xf32>
    %680 = arith.mulf %679, %587 : vector<8x128xf32>
    %cst_235 = arith.constant -6.000000e-01 : f32
    %681 = vector.broadcast %cst_235 : f32 to vector<8x128xf32>
    %682 = arith.subf %681, %383 : vector<8x128xf32>
    %cst_236 = arith.constant 1.19999993 : f32
    %683 = vector.broadcast %cst_236 : f32 to vector<8x128xf32>
    %684 = arith.divf %682, %683 : vector<8x128xf32>
    %685 = arith.mulf %684, %598 : vector<8x128xf32>
    %686 = arith.addf %680, %685 : vector<8x128xf32>
    %cst_237 = arith.constant -1.800000e+00 : f32
    %687 = vector.broadcast %cst_237 : f32 to vector<8x128xf32>
    %688 = arith.subf %383, %687 : vector<8x128xf32>
    %cst_238 = arith.constant 1.19999993 : f32
    %689 = vector.broadcast %cst_238 : f32 to vector<8x128xf32>
    %690 = arith.divf %688, %689 : vector<8x128xf32>
    %691 = arith.mulf %690, %598 : vector<8x128xf32>
    %cst_239 = arith.constant -0.199999988 : f32
    %692 = vector.broadcast %cst_239 : f32 to vector<8x128xf32>
    %693 = arith.subf %692, %383 : vector<8x128xf32>
    %cst_240 = arith.constant 1.200000e+00 : f32
    %694 = vector.broadcast %cst_240 : f32 to vector<8x128xf32>
    %695 = arith.divf %693, %694 : vector<8x128xf32>
    %696 = arith.mulf %695, %609 : vector<8x128xf32>
    %697 = arith.addf %691, %696 : vector<8x128xf32>
    %cst_241 = arith.constant -1.400000e+00 : f32
    %698 = vector.broadcast %cst_241 : f32 to vector<8x128xf32>
    %699 = arith.subf %383, %698 : vector<8x128xf32>
    %cst_242 = arith.constant 1.200000e+00 : f32
    %700 = vector.broadcast %cst_242 : f32 to vector<8x128xf32>
    %701 = arith.divf %699, %700 : vector<8x128xf32>
    %702 = arith.mulf %701, %609 : vector<8x128xf32>
    %cst_243 = arith.constant 0.200000048 : f32
    %703 = vector.broadcast %cst_243 : f32 to vector<8x128xf32>
    %704 = arith.subf %703, %383 : vector<8x128xf32>
    %cst_244 = arith.constant 1.200000e+00 : f32
    %705 = vector.broadcast %cst_244 : f32 to vector<8x128xf32>
    %706 = arith.divf %704, %705 : vector<8x128xf32>
    %707 = arith.mulf %706, %620 : vector<8x128xf32>
    %708 = arith.addf %702, %707 : vector<8x128xf32>
    %cst_245 = arith.constant -1.000000e+00 : f32
    %709 = vector.broadcast %cst_245 : f32 to vector<8x128xf32>
    %710 = arith.subf %383, %709 : vector<8x128xf32>
    %cst_246 = arith.constant 1.200000e+00 : f32
    %711 = vector.broadcast %cst_246 : f32 to vector<8x128xf32>
    %712 = arith.divf %710, %711 : vector<8x128xf32>
    %713 = arith.mulf %712, %620 : vector<8x128xf32>
    %cst_247 = arith.constant 6.000000e-01 : f32
    %714 = vector.broadcast %cst_247 : f32 to vector<8x128xf32>
    %715 = arith.subf %714, %383 : vector<8x128xf32>
    %cst_248 = arith.constant 1.200000e+00 : f32
    %716 = vector.broadcast %cst_248 : f32 to vector<8x128xf32>
    %717 = arith.divf %715, %716 : vector<8x128xf32>
    %718 = arith.mulf %717, %631 : vector<8x128xf32>
    %719 = arith.addf %713, %718 : vector<8x128xf32>
    %cst_249 = arith.constant -6.000000e-01 : f32
    %720 = vector.broadcast %cst_249 : f32 to vector<8x128xf32>
    %721 = arith.subf %383, %720 : vector<8x128xf32>
    %cst_250 = arith.constant 1.200000e+00 : f32
    %722 = vector.broadcast %cst_250 : f32 to vector<8x128xf32>
    %723 = arith.divf %721, %722 : vector<8x128xf32>
    %724 = arith.mulf %723, %631 : vector<8x128xf32>
    %cst_251 = arith.constant 1.000000e+00 : f32
    %725 = vector.broadcast %cst_251 : f32 to vector<8x128xf32>
    %726 = arith.subf %725, %383 : vector<8x128xf32>
    %cst_252 = arith.constant 1.200000e+00 : f32
    %727 = vector.broadcast %cst_252 : f32 to vector<8x128xf32>
    %728 = arith.divf %726, %727 : vector<8x128xf32>
    %729 = arith.mulf %728, %642 : vector<8x128xf32>
    %730 = arith.addf %724, %729 : vector<8x128xf32>
    %cst_253 = arith.constant -0.199999988 : f32
    %731 = vector.broadcast %cst_253 : f32 to vector<8x128xf32>
    %732 = arith.subf %383, %731 : vector<8x128xf32>
    %cst_254 = arith.constant 1.200000e+00 : f32
    %733 = vector.broadcast %cst_254 : f32 to vector<8x128xf32>
    %734 = arith.divf %732, %733 : vector<8x128xf32>
    %735 = arith.mulf %734, %642 : vector<8x128xf32>
    %cst_255 = arith.constant 1.4000001 : f32
    %736 = vector.broadcast %cst_255 : f32 to vector<8x128xf32>
    %737 = arith.subf %736, %383 : vector<8x128xf32>
    %cst_256 = arith.constant 1.200000e+00 : f32
    %738 = vector.broadcast %cst_256 : f32 to vector<8x128xf32>
    %739 = arith.divf %737, %738 : vector<8x128xf32>
    %740 = arith.mulf %739, %653 : vector<8x128xf32>
    %741 = arith.addf %735, %740 : vector<8x128xf32>
    %cst_257 = arith.constant 0.200000048 : f32
    %742 = vector.broadcast %cst_257 : f32 to vector<8x128xf32>
    %743 = arith.subf %383, %742 : vector<8x128xf32>
    %cst_258 = arith.constant 1.200000e+00 : f32
    %744 = vector.broadcast %cst_258 : f32 to vector<8x128xf32>
    %745 = arith.divf %743, %744 : vector<8x128xf32>
    %746 = arith.mulf %745, %653 : vector<8x128xf32>
    %cst_259 = arith.constant 1.800000e+00 : f32
    %747 = vector.broadcast %cst_259 : f32 to vector<8x128xf32>
    %748 = arith.subf %747, %383 : vector<8x128xf32>
    %cst_260 = arith.constant 1.19999993 : f32
    %749 = vector.broadcast %cst_260 : f32 to vector<8x128xf32>
    %750 = arith.divf %748, %749 : vector<8x128xf32>
    %751 = arith.mulf %750, %664 : vector<8x128xf32>
    %752 = arith.addf %746, %751 : vector<8x128xf32>
    %cst_261 = arith.constant 6.000000e-01 : f32
    %753 = vector.broadcast %cst_261 : f32 to vector<8x128xf32>
    %754 = arith.subf %383, %753 : vector<8x128xf32>
    %cst_262 = arith.constant 1.19999993 : f32
    %755 = vector.broadcast %cst_262 : f32 to vector<8x128xf32>
    %756 = arith.divf %754, %755 : vector<8x128xf32>
    %757 = arith.mulf %756, %664 : vector<8x128xf32>
    %cst_263 = arith.constant 2.200000e+00 : f32
    %758 = vector.broadcast %cst_263 : f32 to vector<8x128xf32>
    %759 = arith.subf %758, %383 : vector<8x128xf32>
    %cst_264 = arith.constant 1.200000e+00 : f32
    %760 = vector.broadcast %cst_264 : f32 to vector<8x128xf32>
    %761 = arith.divf %759, %760 : vector<8x128xf32>
    %762 = arith.mulf %761, %675 : vector<8x128xf32>
    %763 = arith.addf %757, %762 : vector<8x128xf32>
    %764 = tpu.concatenate %389, %686, %697, %708, %719, %730, %741, %752, %763 in 1 : vector<8x128xf32>, vector<8x128xf32>, vector<8x128xf32>, vector<8x128xf32>, vector<8x128xf32>, vector<8x128xf32>, vector<8x128xf32>, vector<8x128xf32>, vector<8x128xf32> -> vector<8x1152xf32>
    %c0_265 = arith.constant 0 : index
    %c0_266 = arith.constant 0 : index
    %765 = vector.load %arg3[%c0_265, %c0_266] : memref<1152x128xf32, #tpu.memory_space<vmem>>, vector<1152x128xf32>
    %cst_267 = arith.constant dense<0.000000e+00> : vector<8x128xf32>
    %766 = tpu.matmul %764, %765, %cst_267 {dimension_numbers = #tpu.dot_dimension_numbers<[1], [0], [0], [1], [0, 0, 1, 1], [], []>} : vector<8x1152xf32>, vector<1152x128xf32>, vector<8x128xf32> -> vector<8x128xf32>
    %767 = arith.negf %766 : vector<8x128xf32>
    %768 = math.exp %767 : vector<8x128xf32>
    %cst_268 = arith.constant 1.000000e+00 : f32
    %769 = vector.broadcast %cst_268 : f32 to vector<8x128xf32>
    %770 = arith.addf %769, %768 : vector<8x128xf32>
    %771 = arith.divf %769, %770 : vector<8x128xf32>
    %772 = arith.mulf %766, %771 : vector<8x128xf32>
    %cst_269 = arith.constant -2.200000e+00 : f32
    %773 = vector.broadcast %cst_269 : f32 to vector<8x128xf32>
    %774 = arith.cmpf oge, %766, %773 : vector<8x128xf32>
    %cst_270 = arith.constant -1.800000e+00 : f32
    %775 = vector.broadcast %cst_270 : f32 to vector<8x128xf32>
    %776 = arith.cmpf olt, %766, %775 : vector<8x128xf32>
    %777 = arith.andi %774, %776 : vector<8x128xi1>
    %778 = arith.extui %777 : vector<8x128xi1> to vector<8x128xi32>
    %779 = arith.sitofp %778 : vector<8x128xi32> to vector<8x128xf32>
    %cst_271 = arith.constant -1.800000e+00 : f32
    %780 = vector.broadcast %cst_271 : f32 to vector<8x128xf32>
    %781 = arith.cmpf oge, %766, %780 : vector<8x128xf32>
    %cst_272 = arith.constant -1.400000e+00 : f32
    %782 = vector.broadcast %cst_272 : f32 to vector<8x128xf32>
    %783 = arith.cmpf olt, %766, %782 : vector<8x128xf32>
    %784 = arith.andi %781, %783 : vector<8x128xi1>
    %785 = arith.extui %784 : vector<8x128xi1> to vector<8x128xi32>
    %786 = arith.sitofp %785 : vector<8x128xi32> to vector<8x128xf32>
    %cst_273 = arith.constant -1.400000e+00 : f32
    %787 = vector.broadcast %cst_273 : f32 to vector<8x128xf32>
    %788 = arith.cmpf oge, %766, %787 : vector<8x128xf32>
    %cst_274 = arith.constant -1.000000e+00 : f32
    %789 = vector.broadcast %cst_274 : f32 to vector<8x128xf32>
    %790 = arith.cmpf olt, %766, %789 : vector<8x128xf32>
    %791 = arith.andi %788, %790 : vector<8x128xi1>
    %792 = arith.extui %791 : vector<8x128xi1> to vector<8x128xi32>
    %793 = arith.sitofp %792 : vector<8x128xi32> to vector<8x128xf32>
    %cst_275 = arith.constant -1.000000e+00 : f32
    %794 = vector.broadcast %cst_275 : f32 to vector<8x128xf32>
    %795 = arith.cmpf oge, %766, %794 : vector<8x128xf32>
    %cst_276 = arith.constant -6.000000e-01 : f32
    %796 = vector.broadcast %cst_276 : f32 to vector<8x128xf32>
    %797 = arith.cmpf olt, %766, %796 : vector<8x128xf32>
    %798 = arith.andi %795, %797 : vector<8x128xi1>
    %799 = arith.extui %798 : vector<8x128xi1> to vector<8x128xi32>
    %800 = arith.sitofp %799 : vector<8x128xi32> to vector<8x128xf32>
    %cst_277 = arith.constant -6.000000e-01 : f32
    %801 = vector.broadcast %cst_277 : f32 to vector<8x128xf32>
    %802 = arith.cmpf oge, %766, %801 : vector<8x128xf32>
    %cst_278 = arith.constant -0.199999988 : f32
    %803 = vector.broadcast %cst_278 : f32 to vector<8x128xf32>
    %804 = arith.cmpf olt, %766, %803 : vector<8x128xf32>
    %805 = arith.andi %802, %804 : vector<8x128xi1>
    %806 = arith.extui %805 : vector<8x128xi1> to vector<8x128xi32>
    %807 = arith.sitofp %806 : vector<8x128xi32> to vector<8x128xf32>
    %cst_279 = arith.constant -0.199999988 : f32
    %808 = vector.broadcast %cst_279 : f32 to vector<8x128xf32>
    %809 = arith.cmpf oge, %766, %808 : vector<8x128xf32>
    %cst_280 = arith.constant 0.200000048 : f32
    %810 = vector.broadcast %cst_280 : f32 to vector<8x128xf32>
    %811 = arith.cmpf olt, %766, %810 : vector<8x128xf32>
    %812 = arith.andi %809, %811 : vector<8x128xi1>
    %813 = arith.extui %812 : vector<8x128xi1> to vector<8x128xi32>
    %814 = arith.sitofp %813 : vector<8x128xi32> to vector<8x128xf32>
    %cst_281 = arith.constant 0.200000048 : f32
    %815 = vector.broadcast %cst_281 : f32 to vector<8x128xf32>
    %816 = arith.cmpf oge, %766, %815 : vector<8x128xf32>
    %cst_282 = arith.constant 6.000000e-01 : f32
    %817 = vector.broadcast %cst_282 : f32 to vector<8x128xf32>
    %818 = arith.cmpf olt, %766, %817 : vector<8x128xf32>
    %819 = arith.andi %816, %818 : vector<8x128xi1>
    %820 = arith.extui %819 : vector<8x128xi1> to vector<8x128xi32>
    %821 = arith.sitofp %820 : vector<8x128xi32> to vector<8x128xf32>
    %cst_283 = arith.constant 6.000000e-01 : f32
    %822 = vector.broadcast %cst_283 : f32 to vector<8x128xf32>
    %823 = arith.cmpf oge, %766, %822 : vector<8x128xf32>
    %cst_284 = arith.constant 1.000000e+00 : f32
    %824 = vector.broadcast %cst_284 : f32 to vector<8x128xf32>
    %825 = arith.cmpf olt, %766, %824 : vector<8x128xf32>
    %826 = arith.andi %823, %825 : vector<8x128xi1>
    %827 = arith.extui %826 : vector<8x128xi1> to vector<8x128xi32>
    %828 = arith.sitofp %827 : vector<8x128xi32> to vector<8x128xf32>
    %cst_285 = arith.constant 1.000000e+00 : f32
    %829 = vector.broadcast %cst_285 : f32 to vector<8x128xf32>
    %830 = arith.cmpf oge, %766, %829 : vector<8x128xf32>
    %cst_286 = arith.constant 1.4000001 : f32
    %831 = vector.broadcast %cst_286 : f32 to vector<8x128xf32>
    %832 = arith.cmpf olt, %766, %831 : vector<8x128xf32>
    %833 = arith.andi %830, %832 : vector<8x128xi1>
    %834 = arith.extui %833 : vector<8x128xi1> to vector<8x128xi32>
    %835 = arith.sitofp %834 : vector<8x128xi32> to vector<8x128xf32>
    %cst_287 = arith.constant 1.4000001 : f32
    %836 = vector.broadcast %cst_287 : f32 to vector<8x128xf32>
    %837 = arith.cmpf oge, %766, %836 : vector<8x128xf32>
    %cst_288 = arith.constant 1.800000e+00 : f32
    %838 = vector.broadcast %cst_288 : f32 to vector<8x128xf32>
    %839 = arith.cmpf olt, %766, %838 : vector<8x128xf32>
    %840 = arith.andi %837, %839 : vector<8x128xi1>
    %841 = arith.extui %840 : vector<8x128xi1> to vector<8x128xi32>
    %842 = arith.sitofp %841 : vector<8x128xi32> to vector<8x128xf32>
    %cst_289 = arith.constant 1.800000e+00 : f32
    %843 = vector.broadcast %cst_289 : f32 to vector<8x128xf32>
    %844 = arith.cmpf oge, %766, %843 : vector<8x128xf32>
    %cst_290 = arith.constant 2.200000e+00 : f32
    %845 = vector.broadcast %cst_290 : f32 to vector<8x128xf32>
    %846 = arith.cmpf olt, %766, %845 : vector<8x128xf32>
    %847 = arith.andi %844, %846 : vector<8x128xi1>
    %848 = arith.extui %847 : vector<8x128xi1> to vector<8x128xi32>
    %849 = arith.sitofp %848 : vector<8x128xi32> to vector<8x128xf32>
    %cst_291 = arith.constant -2.200000e+00 : f32
    %850 = vector.broadcast %cst_291 : f32 to vector<8x128xf32>
    %851 = arith.subf %766, %850 : vector<8x128xf32>
    %cst_292 = arith.constant 0.400000095 : f32
    %852 = vector.broadcast %cst_292 : f32 to vector<8x128xf32>
    %853 = arith.divf %851, %852 : vector<8x128xf32>
    %854 = arith.mulf %853, %779 : vector<8x128xf32>
    %cst_293 = arith.constant -1.400000e+00 : f32
    %855 = vector.broadcast %cst_293 : f32 to vector<8x128xf32>
    %856 = arith.subf %855, %766 : vector<8x128xf32>
    %cst_294 = arith.constant 0.399999976 : f32
    %857 = vector.broadcast %cst_294 : f32 to vector<8x128xf32>
    %858 = arith.divf %856, %857 : vector<8x128xf32>
    %859 = arith.mulf %858, %786 : vector<8x128xf32>
    %860 = arith.addf %854, %859 : vector<8x128xf32>
    %cst_295 = arith.constant -1.800000e+00 : f32
    %861 = vector.broadcast %cst_295 : f32 to vector<8x128xf32>
    %862 = arith.subf %766, %861 : vector<8x128xf32>
    %cst_296 = arith.constant 0.399999976 : f32
    %863 = vector.broadcast %cst_296 : f32 to vector<8x128xf32>
    %864 = arith.divf %862, %863 : vector<8x128xf32>
    %865 = arith.mulf %864, %786 : vector<8x128xf32>
    %cst_297 = arith.constant -1.000000e+00 : f32
    %866 = vector.broadcast %cst_297 : f32 to vector<8x128xf32>
    %867 = arith.subf %866, %766 : vector<8x128xf32>
    %cst_298 = arith.constant 0.399999976 : f32
    %868 = vector.broadcast %cst_298 : f32 to vector<8x128xf32>
    %869 = arith.divf %867, %868 : vector<8x128xf32>
    %870 = arith.mulf %869, %793 : vector<8x128xf32>
    %871 = arith.addf %865, %870 : vector<8x128xf32>
    %cst_299 = arith.constant -1.400000e+00 : f32
    %872 = vector.broadcast %cst_299 : f32 to vector<8x128xf32>
    %873 = arith.subf %766, %872 : vector<8x128xf32>
    %cst_300 = arith.constant 0.399999976 : f32
    %874 = vector.broadcast %cst_300 : f32 to vector<8x128xf32>
    %875 = arith.divf %873, %874 : vector<8x128xf32>
    %876 = arith.mulf %875, %793 : vector<8x128xf32>
    %cst_301 = arith.constant -6.000000e-01 : f32
    %877 = vector.broadcast %cst_301 : f32 to vector<8x128xf32>
    %878 = arith.subf %877, %766 : vector<8x128xf32>
    %cst_302 = arith.constant 0.399999976 : f32
    %879 = vector.broadcast %cst_302 : f32 to vector<8x128xf32>
    %880 = arith.divf %878, %879 : vector<8x128xf32>
    %881 = arith.mulf %880, %800 : vector<8x128xf32>
    %882 = arith.addf %876, %881 : vector<8x128xf32>
    %cst_303 = arith.constant -1.000000e+00 : f32
    %883 = vector.broadcast %cst_303 : f32 to vector<8x128xf32>
    %884 = arith.subf %766, %883 : vector<8x128xf32>
    %cst_304 = arith.constant 0.399999976 : f32
    %885 = vector.broadcast %cst_304 : f32 to vector<8x128xf32>
    %886 = arith.divf %884, %885 : vector<8x128xf32>
    %887 = arith.mulf %886, %800 : vector<8x128xf32>
    %cst_305 = arith.constant -0.199999988 : f32
    %888 = vector.broadcast %cst_305 : f32 to vector<8x128xf32>
    %889 = arith.subf %888, %766 : vector<8x128xf32>
    %cst_306 = arith.constant 0.400000036 : f32
    %890 = vector.broadcast %cst_306 : f32 to vector<8x128xf32>
    %891 = arith.divf %889, %890 : vector<8x128xf32>
    %892 = arith.mulf %891, %807 : vector<8x128xf32>
    %893 = arith.addf %887, %892 : vector<8x128xf32>
    %cst_307 = arith.constant -6.000000e-01 : f32
    %894 = vector.broadcast %cst_307 : f32 to vector<8x128xf32>
    %895 = arith.subf %766, %894 : vector<8x128xf32>
    %cst_308 = arith.constant 0.400000036 : f32
    %896 = vector.broadcast %cst_308 : f32 to vector<8x128xf32>
    %897 = arith.divf %895, %896 : vector<8x128xf32>
    %898 = arith.mulf %897, %807 : vector<8x128xf32>
    %cst_309 = arith.constant 0.200000048 : f32
    %899 = vector.broadcast %cst_309 : f32 to vector<8x128xf32>
    %900 = arith.subf %899, %766 : vector<8x128xf32>
    %cst_310 = arith.constant 0.400000036 : f32
    %901 = vector.broadcast %cst_310 : f32 to vector<8x128xf32>
    %902 = arith.divf %900, %901 : vector<8x128xf32>
    %903 = arith.mulf %902, %814 : vector<8x128xf32>
    %904 = arith.addf %898, %903 : vector<8x128xf32>
    %cst_311 = arith.constant -0.199999988 : f32
    %905 = vector.broadcast %cst_311 : f32 to vector<8x128xf32>
    %906 = arith.subf %766, %905 : vector<8x128xf32>
    %cst_312 = arith.constant 0.400000036 : f32
    %907 = vector.broadcast %cst_312 : f32 to vector<8x128xf32>
    %908 = arith.divf %906, %907 : vector<8x128xf32>
    %909 = arith.mulf %908, %814 : vector<8x128xf32>
    %cst_313 = arith.constant 6.000000e-01 : f32
    %910 = vector.broadcast %cst_313 : f32 to vector<8x128xf32>
    %911 = arith.subf %910, %766 : vector<8x128xf32>
    %cst_314 = arith.constant 0.399999976 : f32
    %912 = vector.broadcast %cst_314 : f32 to vector<8x128xf32>
    %913 = arith.divf %911, %912 : vector<8x128xf32>
    %914 = arith.mulf %913, %821 : vector<8x128xf32>
    %915 = arith.addf %909, %914 : vector<8x128xf32>
    %cst_315 = arith.constant 0.200000048 : f32
    %916 = vector.broadcast %cst_315 : f32 to vector<8x128xf32>
    %917 = arith.subf %766, %916 : vector<8x128xf32>
    %cst_316 = arith.constant 0.399999976 : f32
    %918 = vector.broadcast %cst_316 : f32 to vector<8x128xf32>
    %919 = arith.divf %917, %918 : vector<8x128xf32>
    %920 = arith.mulf %919, %821 : vector<8x128xf32>
    %cst_317 = arith.constant 1.000000e+00 : f32
    %921 = vector.broadcast %cst_317 : f32 to vector<8x128xf32>
    %922 = arith.subf %921, %766 : vector<8x128xf32>
    %cst_318 = arith.constant 0.399999976 : f32
    %923 = vector.broadcast %cst_318 : f32 to vector<8x128xf32>
    %924 = arith.divf %922, %923 : vector<8x128xf32>
    %925 = arith.mulf %924, %828 : vector<8x128xf32>
    %926 = arith.addf %920, %925 : vector<8x128xf32>
    %cst_319 = arith.constant 6.000000e-01 : f32
    %927 = vector.broadcast %cst_319 : f32 to vector<8x128xf32>
    %928 = arith.subf %766, %927 : vector<8x128xf32>
    %cst_320 = arith.constant 0.399999976 : f32
    %929 = vector.broadcast %cst_320 : f32 to vector<8x128xf32>
    %930 = arith.divf %928, %929 : vector<8x128xf32>
    %931 = arith.mulf %930, %828 : vector<8x128xf32>
    %cst_321 = arith.constant 1.4000001 : f32
    %932 = vector.broadcast %cst_321 : f32 to vector<8x128xf32>
    %933 = arith.subf %932, %766 : vector<8x128xf32>
    %cst_322 = arith.constant 0.400000095 : f32
    %934 = vector.broadcast %cst_322 : f32 to vector<8x128xf32>
    %935 = arith.divf %933, %934 : vector<8x128xf32>
    %936 = arith.mulf %935, %835 : vector<8x128xf32>
    %937 = arith.addf %931, %936 : vector<8x128xf32>
    %cst_323 = arith.constant 1.000000e+00 : f32
    %938 = vector.broadcast %cst_323 : f32 to vector<8x128xf32>
    %939 = arith.subf %766, %938 : vector<8x128xf32>
    %cst_324 = arith.constant 0.400000095 : f32
    %940 = vector.broadcast %cst_324 : f32 to vector<8x128xf32>
    %941 = arith.divf %939, %940 : vector<8x128xf32>
    %942 = arith.mulf %941, %835 : vector<8x128xf32>
    %cst_325 = arith.constant 1.800000e+00 : f32
    %943 = vector.broadcast %cst_325 : f32 to vector<8x128xf32>
    %944 = arith.subf %943, %766 : vector<8x128xf32>
    %cst_326 = arith.constant 0.399999857 : f32
    %945 = vector.broadcast %cst_326 : f32 to vector<8x128xf32>
    %946 = arith.divf %944, %945 : vector<8x128xf32>
    %947 = arith.mulf %946, %842 : vector<8x128xf32>
    %948 = arith.addf %942, %947 : vector<8x128xf32>
    %cst_327 = arith.constant 1.4000001 : f32
    %949 = vector.broadcast %cst_327 : f32 to vector<8x128xf32>
    %950 = arith.subf %766, %949 : vector<8x128xf32>
    %cst_328 = arith.constant 0.399999857 : f32
    %951 = vector.broadcast %cst_328 : f32 to vector<8x128xf32>
    %952 = arith.divf %950, %951 : vector<8x128xf32>
    %953 = arith.mulf %952, %842 : vector<8x128xf32>
    %cst_329 = arith.constant 2.200000e+00 : f32
    %954 = vector.broadcast %cst_329 : f32 to vector<8x128xf32>
    %955 = arith.subf %954, %766 : vector<8x128xf32>
    %cst_330 = arith.constant 0.400000095 : f32
    %956 = vector.broadcast %cst_330 : f32 to vector<8x128xf32>
    %957 = arith.divf %955, %956 : vector<8x128xf32>
    %958 = arith.mulf %957, %849 : vector<8x128xf32>
    %959 = arith.addf %953, %958 : vector<8x128xf32>
    %cst_331 = arith.constant -2.200000e+00 : f32
    %960 = vector.broadcast %cst_331 : f32 to vector<8x128xf32>
    %961 = arith.subf %766, %960 : vector<8x128xf32>
    %cst_332 = arith.constant 0.800000071 : f32
    %962 = vector.broadcast %cst_332 : f32 to vector<8x128xf32>
    %963 = arith.divf %961, %962 : vector<8x128xf32>
    %964 = arith.mulf %963, %860 : vector<8x128xf32>
    %cst_333 = arith.constant -1.000000e+00 : f32
    %965 = vector.broadcast %cst_333 : f32 to vector<8x128xf32>
    %966 = arith.subf %965, %766 : vector<8x128xf32>
    %cst_334 = arith.constant 0.799999952 : f32
    %967 = vector.broadcast %cst_334 : f32 to vector<8x128xf32>
    %968 = arith.divf %966, %967 : vector<8x128xf32>
    %969 = arith.mulf %968, %871 : vector<8x128xf32>
    %970 = arith.addf %964, %969 : vector<8x128xf32>
    %cst_335 = arith.constant -1.800000e+00 : f32
    %971 = vector.broadcast %cst_335 : f32 to vector<8x128xf32>
    %972 = arith.subf %766, %971 : vector<8x128xf32>
    %cst_336 = arith.constant 0.799999952 : f32
    %973 = vector.broadcast %cst_336 : f32 to vector<8x128xf32>
    %974 = arith.divf %972, %973 : vector<8x128xf32>
    %975 = arith.mulf %974, %871 : vector<8x128xf32>
    %cst_337 = arith.constant -6.000000e-01 : f32
    %976 = vector.broadcast %cst_337 : f32 to vector<8x128xf32>
    %977 = arith.subf %976, %766 : vector<8x128xf32>
    %cst_338 = arith.constant 0.799999952 : f32
    %978 = vector.broadcast %cst_338 : f32 to vector<8x128xf32>
    %979 = arith.divf %977, %978 : vector<8x128xf32>
    %980 = arith.mulf %979, %882 : vector<8x128xf32>
    %981 = arith.addf %975, %980 : vector<8x128xf32>
    %cst_339 = arith.constant -1.400000e+00 : f32
    %982 = vector.broadcast %cst_339 : f32 to vector<8x128xf32>
    %983 = arith.subf %766, %982 : vector<8x128xf32>
    %cst_340 = arith.constant 0.799999952 : f32
    %984 = vector.broadcast %cst_340 : f32 to vector<8x128xf32>
    %985 = arith.divf %983, %984 : vector<8x128xf32>
    %986 = arith.mulf %985, %882 : vector<8x128xf32>
    %cst_341 = arith.constant -0.199999988 : f32
    %987 = vector.broadcast %cst_341 : f32 to vector<8x128xf32>
    %988 = arith.subf %987, %766 : vector<8x128xf32>
    %cst_342 = arith.constant 8.000000e-01 : f32
    %989 = vector.broadcast %cst_342 : f32 to vector<8x128xf32>
    %990 = arith.divf %988, %989 : vector<8x128xf32>
    %991 = arith.mulf %990, %893 : vector<8x128xf32>
    %992 = arith.addf %986, %991 : vector<8x128xf32>
    %cst_343 = arith.constant -1.000000e+00 : f32
    %993 = vector.broadcast %cst_343 : f32 to vector<8x128xf32>
    %994 = arith.subf %766, %993 : vector<8x128xf32>
    %cst_344 = arith.constant 8.000000e-01 : f32
    %995 = vector.broadcast %cst_344 : f32 to vector<8x128xf32>
    %996 = arith.divf %994, %995 : vector<8x128xf32>
    %997 = arith.mulf %996, %893 : vector<8x128xf32>
    %cst_345 = arith.constant 0.200000048 : f32
    %998 = vector.broadcast %cst_345 : f32 to vector<8x128xf32>
    %999 = arith.subf %998, %766 : vector<8x128xf32>
    %cst_346 = arith.constant 0.800000071 : f32
    %1000 = vector.broadcast %cst_346 : f32 to vector<8x128xf32>
    %1001 = arith.divf %999, %1000 : vector<8x128xf32>
    %1002 = arith.mulf %1001, %904 : vector<8x128xf32>
    %1003 = arith.addf %997, %1002 : vector<8x128xf32>
    %cst_347 = arith.constant -6.000000e-01 : f32
    %1004 = vector.broadcast %cst_347 : f32 to vector<8x128xf32>
    %1005 = arith.subf %766, %1004 : vector<8x128xf32>
    %cst_348 = arith.constant 0.800000071 : f32
    %1006 = vector.broadcast %cst_348 : f32 to vector<8x128xf32>
    %1007 = arith.divf %1005, %1006 : vector<8x128xf32>
    %1008 = arith.mulf %1007, %904 : vector<8x128xf32>
    %cst_349 = arith.constant 6.000000e-01 : f32
    %1009 = vector.broadcast %cst_349 : f32 to vector<8x128xf32>
    %1010 = arith.subf %1009, %766 : vector<8x128xf32>
    %cst_350 = arith.constant 8.000000e-01 : f32
    %1011 = vector.broadcast %cst_350 : f32 to vector<8x128xf32>
    %1012 = arith.divf %1010, %1011 : vector<8x128xf32>
    %1013 = arith.mulf %1012, %915 : vector<8x128xf32>
    %1014 = arith.addf %1008, %1013 : vector<8x128xf32>
    %cst_351 = arith.constant -0.199999988 : f32
    %1015 = vector.broadcast %cst_351 : f32 to vector<8x128xf32>
    %1016 = arith.subf %766, %1015 : vector<8x128xf32>
    %cst_352 = arith.constant 8.000000e-01 : f32
    %1017 = vector.broadcast %cst_352 : f32 to vector<8x128xf32>
    %1018 = arith.divf %1016, %1017 : vector<8x128xf32>
    %1019 = arith.mulf %1018, %915 : vector<8x128xf32>
    %cst_353 = arith.constant 1.000000e+00 : f32
    %1020 = vector.broadcast %cst_353 : f32 to vector<8x128xf32>
    %1021 = arith.subf %1020, %766 : vector<8x128xf32>
    %cst_354 = arith.constant 0.799999952 : f32
    %1022 = vector.broadcast %cst_354 : f32 to vector<8x128xf32>
    %1023 = arith.divf %1021, %1022 : vector<8x128xf32>
    %1024 = arith.mulf %1023, %926 : vector<8x128xf32>
    %1025 = arith.addf %1019, %1024 : vector<8x128xf32>
    %cst_355 = arith.constant 0.200000048 : f32
    %1026 = vector.broadcast %cst_355 : f32 to vector<8x128xf32>
    %1027 = arith.subf %766, %1026 : vector<8x128xf32>
    %cst_356 = arith.constant 0.799999952 : f32
    %1028 = vector.broadcast %cst_356 : f32 to vector<8x128xf32>
    %1029 = arith.divf %1027, %1028 : vector<8x128xf32>
    %1030 = arith.mulf %1029, %926 : vector<8x128xf32>
    %cst_357 = arith.constant 1.4000001 : f32
    %1031 = vector.broadcast %cst_357 : f32 to vector<8x128xf32>
    %1032 = arith.subf %1031, %766 : vector<8x128xf32>
    %cst_358 = arith.constant 0.800000071 : f32
    %1033 = vector.broadcast %cst_358 : f32 to vector<8x128xf32>
    %1034 = arith.divf %1032, %1033 : vector<8x128xf32>
    %1035 = arith.mulf %1034, %937 : vector<8x128xf32>
    %1036 = arith.addf %1030, %1035 : vector<8x128xf32>
    %cst_359 = arith.constant 6.000000e-01 : f32
    %1037 = vector.broadcast %cst_359 : f32 to vector<8x128xf32>
    %1038 = arith.subf %766, %1037 : vector<8x128xf32>
    %cst_360 = arith.constant 0.800000071 : f32
    %1039 = vector.broadcast %cst_360 : f32 to vector<8x128xf32>
    %1040 = arith.divf %1038, %1039 : vector<8x128xf32>
    %1041 = arith.mulf %1040, %937 : vector<8x128xf32>
    %cst_361 = arith.constant 1.800000e+00 : f32
    %1042 = vector.broadcast %cst_361 : f32 to vector<8x128xf32>
    %1043 = arith.subf %1042, %766 : vector<8x128xf32>
    %cst_362 = arith.constant 0.799999952 : f32
    %1044 = vector.broadcast %cst_362 : f32 to vector<8x128xf32>
    %1045 = arith.divf %1043, %1044 : vector<8x128xf32>
    %1046 = arith.mulf %1045, %948 : vector<8x128xf32>
    %1047 = arith.addf %1041, %1046 : vector<8x128xf32>
    %cst_363 = arith.constant 1.000000e+00 : f32
    %1048 = vector.broadcast %cst_363 : f32 to vector<8x128xf32>
    %1049 = arith.subf %766, %1048 : vector<8x128xf32>
    %cst_364 = arith.constant 0.799999952 : f32
    %1050 = vector.broadcast %cst_364 : f32 to vector<8x128xf32>
    %1051 = arith.divf %1049, %1050 : vector<8x128xf32>
    %1052 = arith.mulf %1051, %948 : vector<8x128xf32>
    %cst_365 = arith.constant 2.200000e+00 : f32
    %1053 = vector.broadcast %cst_365 : f32 to vector<8x128xf32>
    %1054 = arith.subf %1053, %766 : vector<8x128xf32>
    %cst_366 = arith.constant 0.799999952 : f32
    %1055 = vector.broadcast %cst_366 : f32 to vector<8x128xf32>
    %1056 = arith.divf %1054, %1055 : vector<8x128xf32>
    %1057 = arith.mulf %1056, %959 : vector<8x128xf32>
    %1058 = arith.addf %1052, %1057 : vector<8x128xf32>
    %cst_367 = arith.constant -2.200000e+00 : f32
    %1059 = vector.broadcast %cst_367 : f32 to vector<8x128xf32>
    %1060 = arith.subf %766, %1059 : vector<8x128xf32>
    %cst_368 = arith.constant 1.200000e+00 : f32
    %1061 = vector.broadcast %cst_368 : f32 to vector<8x128xf32>
    %1062 = arith.divf %1060, %1061 : vector<8x128xf32>
    %1063 = arith.mulf %1062, %970 : vector<8x128xf32>
    %cst_369 = arith.constant -6.000000e-01 : f32
    %1064 = vector.broadcast %cst_369 : f32 to vector<8x128xf32>
    %1065 = arith.subf %1064, %766 : vector<8x128xf32>
    %cst_370 = arith.constant 1.19999993 : f32
    %1066 = vector.broadcast %cst_370 : f32 to vector<8x128xf32>
    %1067 = arith.divf %1065, %1066 : vector<8x128xf32>
    %1068 = arith.mulf %1067, %981 : vector<8x128xf32>
    %1069 = arith.addf %1063, %1068 : vector<8x128xf32>
    %cst_371 = arith.constant -1.800000e+00 : f32
    %1070 = vector.broadcast %cst_371 : f32 to vector<8x128xf32>
    %1071 = arith.subf %766, %1070 : vector<8x128xf32>
    %cst_372 = arith.constant 1.19999993 : f32
    %1072 = vector.broadcast %cst_372 : f32 to vector<8x128xf32>
    %1073 = arith.divf %1071, %1072 : vector<8x128xf32>
    %1074 = arith.mulf %1073, %981 : vector<8x128xf32>
    %cst_373 = arith.constant -0.199999988 : f32
    %1075 = vector.broadcast %cst_373 : f32 to vector<8x128xf32>
    %1076 = arith.subf %1075, %766 : vector<8x128xf32>
    %cst_374 = arith.constant 1.200000e+00 : f32
    %1077 = vector.broadcast %cst_374 : f32 to vector<8x128xf32>
    %1078 = arith.divf %1076, %1077 : vector<8x128xf32>
    %1079 = arith.mulf %1078, %992 : vector<8x128xf32>
    %1080 = arith.addf %1074, %1079 : vector<8x128xf32>
    %cst_375 = arith.constant -1.400000e+00 : f32
    %1081 = vector.broadcast %cst_375 : f32 to vector<8x128xf32>
    %1082 = arith.subf %766, %1081 : vector<8x128xf32>
    %cst_376 = arith.constant 1.200000e+00 : f32
    %1083 = vector.broadcast %cst_376 : f32 to vector<8x128xf32>
    %1084 = arith.divf %1082, %1083 : vector<8x128xf32>
    %1085 = arith.mulf %1084, %992 : vector<8x128xf32>
    %cst_377 = arith.constant 0.200000048 : f32
    %1086 = vector.broadcast %cst_377 : f32 to vector<8x128xf32>
    %1087 = arith.subf %1086, %766 : vector<8x128xf32>
    %cst_378 = arith.constant 1.200000e+00 : f32
    %1088 = vector.broadcast %cst_378 : f32 to vector<8x128xf32>
    %1089 = arith.divf %1087, %1088 : vector<8x128xf32>
    %1090 = arith.mulf %1089, %1003 : vector<8x128xf32>
    %1091 = arith.addf %1085, %1090 : vector<8x128xf32>
    %cst_379 = arith.constant -1.000000e+00 : f32
    %1092 = vector.broadcast %cst_379 : f32 to vector<8x128xf32>
    %1093 = arith.subf %766, %1092 : vector<8x128xf32>
    %cst_380 = arith.constant 1.200000e+00 : f32
    %1094 = vector.broadcast %cst_380 : f32 to vector<8x128xf32>
    %1095 = arith.divf %1093, %1094 : vector<8x128xf32>
    %1096 = arith.mulf %1095, %1003 : vector<8x128xf32>
    %cst_381 = arith.constant 6.000000e-01 : f32
    %1097 = vector.broadcast %cst_381 : f32 to vector<8x128xf32>
    %1098 = arith.subf %1097, %766 : vector<8x128xf32>
    %cst_382 = arith.constant 1.200000e+00 : f32
    %1099 = vector.broadcast %cst_382 : f32 to vector<8x128xf32>
    %1100 = arith.divf %1098, %1099 : vector<8x128xf32>
    %1101 = arith.mulf %1100, %1014 : vector<8x128xf32>
    %1102 = arith.addf %1096, %1101 : vector<8x128xf32>
    %cst_383 = arith.constant -6.000000e-01 : f32
    %1103 = vector.broadcast %cst_383 : f32 to vector<8x128xf32>
    %1104 = arith.subf %766, %1103 : vector<8x128xf32>
    %cst_384 = arith.constant 1.200000e+00 : f32
    %1105 = vector.broadcast %cst_384 : f32 to vector<8x128xf32>
    %1106 = arith.divf %1104, %1105 : vector<8x128xf32>
    %1107 = arith.mulf %1106, %1014 : vector<8x128xf32>
    %cst_385 = arith.constant 1.000000e+00 : f32
    %1108 = vector.broadcast %cst_385 : f32 to vector<8x128xf32>
    %1109 = arith.subf %1108, %766 : vector<8x128xf32>
    %cst_386 = arith.constant 1.200000e+00 : f32
    %1110 = vector.broadcast %cst_386 : f32 to vector<8x128xf32>
    %1111 = arith.divf %1109, %1110 : vector<8x128xf32>
    %1112 = arith.mulf %1111, %1025 : vector<8x128xf32>
    %1113 = arith.addf %1107, %1112 : vector<8x128xf32>
    %cst_387 = arith.constant -0.199999988 : f32
    %1114 = vector.broadcast %cst_387 : f32 to vector<8x128xf32>
    %1115 = arith.subf %766, %1114 : vector<8x128xf32>
    %cst_388 = arith.constant 1.200000e+00 : f32
    %1116 = vector.broadcast %cst_388 : f32 to vector<8x128xf32>
    %1117 = arith.divf %1115, %1116 : vector<8x128xf32>
    %1118 = arith.mulf %1117, %1025 : vector<8x128xf32>
    %cst_389 = arith.constant 1.4000001 : f32
    %1119 = vector.broadcast %cst_389 : f32 to vector<8x128xf32>
    %1120 = arith.subf %1119, %766 : vector<8x128xf32>
    %cst_390 = arith.constant 1.200000e+00 : f32
    %1121 = vector.broadcast %cst_390 : f32 to vector<8x128xf32>
    %1122 = arith.divf %1120, %1121 : vector<8x128xf32>
    %1123 = arith.mulf %1122, %1036 : vector<8x128xf32>
    %1124 = arith.addf %1118, %1123 : vector<8x128xf32>
    %cst_391 = arith.constant 0.200000048 : f32
    %1125 = vector.broadcast %cst_391 : f32 to vector<8x128xf32>
    %1126 = arith.subf %766, %1125 : vector<8x128xf32>
    %cst_392 = arith.constant 1.200000e+00 : f32
    %1127 = vector.broadcast %cst_392 : f32 to vector<8x128xf32>
    %1128 = arith.divf %1126, %1127 : vector<8x128xf32>
    %1129 = arith.mulf %1128, %1036 : vector<8x128xf32>
    %cst_393 = arith.constant 1.800000e+00 : f32
    %1130 = vector.broadcast %cst_393 : f32 to vector<8x128xf32>
    %1131 = arith.subf %1130, %766 : vector<8x128xf32>
    %cst_394 = arith.constant 1.19999993 : f32
    %1132 = vector.broadcast %cst_394 : f32 to vector<8x128xf32>
    %1133 = arith.divf %1131, %1132 : vector<8x128xf32>
    %1134 = arith.mulf %1133, %1047 : vector<8x128xf32>
    %1135 = arith.addf %1129, %1134 : vector<8x128xf32>
    %cst_395 = arith.constant 6.000000e-01 : f32
    %1136 = vector.broadcast %cst_395 : f32 to vector<8x128xf32>
    %1137 = arith.subf %766, %1136 : vector<8x128xf32>
    %cst_396 = arith.constant 1.19999993 : f32
    %1138 = vector.broadcast %cst_396 : f32 to vector<8x128xf32>
    %1139 = arith.divf %1137, %1138 : vector<8x128xf32>
    %1140 = arith.mulf %1139, %1047 : vector<8x128xf32>
    %cst_397 = arith.constant 2.200000e+00 : f32
    %1141 = vector.broadcast %cst_397 : f32 to vector<8x128xf32>
    %1142 = arith.subf %1141, %766 : vector<8x128xf32>
    %cst_398 = arith.constant 1.200000e+00 : f32
    %1143 = vector.broadcast %cst_398 : f32 to vector<8x128xf32>
    %1144 = arith.divf %1142, %1143 : vector<8x128xf32>
    %1145 = arith.mulf %1144, %1058 : vector<8x128xf32>
    %1146 = arith.addf %1140, %1145 : vector<8x128xf32>
    %1147 = tpu.concatenate %772, %1069, %1080, %1091, %1102, %1113, %1124, %1135, %1146 in 1 : vector<8x128xf32>, vector<8x128xf32>, vector<8x128xf32>, vector<8x128xf32>, vector<8x128xf32>, vector<8x128xf32>, vector<8x128xf32>, vector<8x128xf32>, vector<8x128xf32> -> vector<8x1152xf32>
    %c0_399 = arith.constant 0 : index
    %c0_400 = arith.constant 0 : index
    %1148 = vector.load %arg4[%c0_399, %c0_400] : memref<1152x128xf32, #tpu.memory_space<vmem>>, vector<1152x128xf32>
    %cst_401 = arith.constant dense<0.000000e+00> : vector<8x128xf32>
    %1149 = tpu.matmul %1147, %1148, %cst_401 {dimension_numbers = #tpu.dot_dimension_numbers<[1], [0], [0], [1], [0, 0, 1, 1], [], []>} : vector<8x1152xf32>, vector<1152x128xf32>, vector<8x128xf32> -> vector<8x128xf32>
    %c0_402 = arith.constant 0 : index
    %c0_403 = arith.constant 0 : index
    %1150 = vector.load %arg5[%c0_402, %c0_403] : memref<8x128xf32, #tpu.memory_space<vmem>>, vector<8x128xf32>
    tpu.vector_store %arg5[%c0_402, %c0_403], %1149 {strides = array<i32>} : memref<8x128xf32, #tpu.memory_space<vmem>>, vector<8x128xf32>,
    return
  }
  func.func @transform_0(%arg0: i32) -> (i32, i32) {
    %c0_i32 = arith.constant 0 : i32
    %c0_i32_0 = arith.constant 0 : i32
    return %arg0, %c0_i32 : i32, i32
  }
  func.func @transform_1(%arg0: i32) -> (i32, i32) {
    %c0_i32 = arith.constant 0 : i32
    %c0_i32_0 = arith.constant 0 : i32
    %c0_i32_1 = arith.constant 0 : i32
    return %c0_i32, %c0_i32_0 : i32, i32
  }
  func.func @transform_2(%arg0: i32) -> (i32, i32) {
    %c0_i32 = arith.constant 0 : i32
    %c0_i32_0 = arith.constant 0 : i32
    %c0_i32_1 = arith.constant 0 : i32
    return %c0_i32, %c0_i32_0 : i32, i32
  }
  func.func @transform_3(%arg0: i32) -> (i32, i32) {
    %c0_i32 = arith.constant 0 : i32
    %c0_i32_0 = arith.constant 0 : i32
    %c0_i32_1 = arith.constant 0 : i32
    return %c0_i32, %c0_i32_0 : i32, i32
  }
  func.func @transform_4(%arg0: i32) -> (i32, i32) {
    %c0_i32 = arith.constant 0 : i32
    %c0_i32_0 = arith.constant 0 : i32
    return %arg0, %c0_i32 : i32, i32
  }
}

</mosaic_0001>

<llo_original>
// kernel: run.1
$region0: #{run.1}
  #allocation0 [shape = 'u32[]', space=smem, size = 0x4, offset = 0x4, fixed_abs, tag = 'smem constant byte address 0x4 - core index']
  #allocation1 [shape = 'u32[144,128]{1,0:T(1,128)}', space=vmem, size = 0x12000, scoped, tag = 'internal scratch']
  %s0 = inlined_call_operand.vmem [shape: f32[8,128], index: 0, kind: input, shape index: {}]
  %s1 = inlined_call_operand.hbm [shape: f32[1152,128], index: 1, kind: input, shape index: {}]
  %s2 = inlined_call_operand.hbm [shape: f32[1152,128], index: 2, kind: input, shape index: {}]
  %s3 = inlined_call_operand.hbm [shape: f32[1152,128], index: 3, kind: input, shape index: {}]
  %s4 = inlined_call_operand.hbm [shape: f32[8,128], index: 4, kind: output, shape index: {}]
  %s5 = sld [smem:[#allocation0]]
  $region38: #{run.1} parent=0
    _
  %s7 = ssub.s32 1, %s5
  %s8 = scalar_select 0, %s7, %s5
  $region1: #{run.1} parent=0
    #allocation2 [shape = 'u8[589824]{0}', space=vmem, size = 0x90000, scoped, tag = 'input window, operand 1, single buffered']
    #allocation3 [shape = 's32[1]{0}', space=sflag, size = 0x4, scoped, tag = 'scoped memory for run.1']
    #allocation4 [shape = 's32[1]{0}', space=sflag, size = 0x4, scoped, tag = 'scoped memory for run.1']
    #allocation5 [shape = 'u8[589824]{0}', space=vmem, size = 0x90000, scoped, tag = 'input window, operand 2, single buffered']
    #allocation6 [shape = 's32[1]{0}', space=sflag, size = 0x4, scoped, tag = 'scoped memory for run.1']
    #allocation7 [shape = 'u8[589824]{0}', space=vmem, size = 0x90000, scoped, tag = 'input window, operand 3, single buffered']
    #allocation8 [shape = 'u8[4096]{0}', space=vmem, size = 0x1000, scoped, tag = 'output window, operand 0, single buffered']
    %9 = vsyncpa [#allocation3], 0
    %10 = vsyncpa [#allocation6], 0
    %11 = vsyncpa [#allocation4], 0
    // Predicated region
    $region2: #{run.1} parent=1 // pred_check
      _
    $region3: #{run.1} parent=1 // pred_check_branch
      %13 = sbr.rel (0) target = $region5
    $region4: #{run.1} parent=1 // pred_region
      _
    $region5: #{run.1} parent=1 // pred_fallthru
      _
    // Predicated region
    $region6: #{run.1} parent=1 // pred_check
      _
    $region7: #{run.1} parent=1 // pred_check_branch
      %15 = sbr.rel (0) target = $region9
    $region8: #{run.1} parent=1 // pred_region
      %s17 = ssub.s32 18432, 18432
      %18 = vsyncadd [#allocation3], %s17
      %s19 = sshll.u32 [#allocation2], 4
      %s20 = int_to_ptr.vmem [resolvable:$true] %s19
      %25 = dma.hbm_to_vmem [thread:$0]  %s1, 18432, %s20, [#allocation3], 128, 128, 8
    $region9: #{run.1} parent=1 // pred_fallthru
      _
    // Predicated region
    $region10: #{run.1} parent=1 // pred_check
      _
    $region11: #{run.1} parent=1 // pred_check_branch
      %27 = sbr.rel (0) target = $region13
    $region12: #{run.1} parent=1 // pred_region
      %s29 = ssub.s32 18432, 18432
      %30 = vsyncadd [#allocation6], %s29
      %s31 = sshll.u32 [#allocation5], 4
      %s32 = int_to_ptr.vmem [resolvable:$true] %s31
      %37 = dma.hbm_to_vmem [thread:$0]  %s2, 18432, %s32, [#allocation6], 128, 128, 8
    $region13: #{run.1} parent=1 // pred_fallthru
      _
    // Predicated region
    $region14: #{run.1} parent=1 // pred_check
      _
    $region15: #{run.1} parent=1 // pred_check_branch
      %39 = sbr.rel (0) target = $region17
    $region16: #{run.1} parent=1 // pred_region
      %s41 = ssub.s32 18432, 18432
      %42 = vsyncadd [#allocation6], %s41
      %s43 = sshll.u32 [#allocation7], 4
      %s44 = int_to_ptr.vmem [resolvable:$true] %s43
      %49 = dma.hbm_to_vmem [thread:$0]  %s3, 18432, %s44, [#allocation6], 128, 128, 8
    $region17: #{run.1} parent=1 // pred_fallthru
      _
    // Predicated region
    $region18: #{run.1} parent=1 // pred_check
      _
    $region19: #{run.1} parent=1 // pred_check_branch
      %51 = sbr.rel (0) target = $region21
    $region20: #{run.1} parent=1 // pred_region
      %52 = dma.done [#allocation3], 18432
    $region21: #{run.1} parent=1 // pred_fallthru
      _
    // Predicated region
    $region22: #{run.1} parent=1 // pred_check
      _
    $region23: #{run.1} parent=1 // pred_check_branch
      %54 = sbr.rel (0) target = $region25
    $region24: #{run.1} parent=1 // pred_region
      %55 = dma.done [#allocation6], 18432
    $region25: #{run.1} parent=1 // pred_fallthru
      _
    // Predicated region
    $region26: #{run.1} parent=1 // pred_check
      _
    $region27: #{run.1} parent=1 // pred_check_branch
      %57 = sbr.rel (0) target = $region29
    $region28: #{run.1} parent=1 // pred_region
      %58 = dma.done [#allocation6], 18432
    $region29: #{run.1} parent=1 // pred_fallthru
      _
    %v59 = vld [vmem:[%s0] sm:$0xff]
    %v60 = vxor.u32 %v59, 2147483648
    %v61 = vmul.f32 %v60, 1.442695
    %v62 = vpow.pop %v61
    %v63 = vadd.f32 %v62, 1.0
    %v64 = vrcp.pop %v63
    %v65 = vmul.f32 1.0, %v64
    %v66 = vmul.f32 %v59, %v65
    %vm67 = vcmp.ge.f32.partialorder %v59, -2.2
    %vm68 = vcmp.lt.f32.partialorder %v59, -1.8
    %vm69 = vmand %vm67, %vm68
    %v70 = vsel %vm69, 1, 0
    %v71 = vcvt.s32.f32 %v70
    %vm72 = vcmp.ge.f32.partialorder %v59, -1.8
    %vm73 = vcmp.lt.f32.partialorder %v59, -1.4
    %vm74 = vmand %vm72, %vm73
    %v75 = vsel %vm74, 1, 0
    %v76 = vcvt.s32.f32 %v75
    %vm77 = vcmp.ge.f32.partialorder %v59, -1.4
    %vm78 = vcmp.lt.f32.partialorder %v59, -1.0
    %vm79 = vmand %vm77, %vm78
    %v80 = vsel %vm79, 1, 0
    %v81 = vcvt.s32.f32 %v80
    %vm82 = vcmp.ge.f32.partialorder %v59, -1.0
    %vm83 = vcmp.lt.f32.partialorder %v59, -0.6
    %vm84 = vmand %vm82, %vm83
    %v85 = vsel %vm84, 1, 0
    %v86 = vcvt.s32.f32 %v85
    %vm87 = vcmp.ge.f32.partialorder %v59, -0.6
    %vm88 = vcmp.lt.f32.partialorder %v59, -0.19999999
    %vm89 = vmand %vm87, %vm88
    %v90 = vsel %vm89, 1, 0
    %v91 = vcvt.s32.f32 %v90
    %vm92 = vcmp.ge.f32.partialorder %v59, -0.19999999
    %vm93 = vcmp.lt.f32.partialorder %v59, 0.20000005
    %vm94 = vmand %vm92, %vm93
    %v95 = vsel %vm94, 1, 0
    %v96 = vcvt.s32.f32 %v95
    %vm97 = vcmp.ge.f32.partialorder %v59, 0.20000005
    %vm98 = vcmp.lt.f32.partialorder %v59, 0.6
    %vm99 = vmand %vm97, %vm98
    %v100 = vsel %vm99, 1, 0
    %v101 = vcvt.s32.f32 %v100
    %vm102 = vcmp.ge.f32.partialorder %v59, 0.6
    %vm103 = vcmp.lt.f32.partialorder %v59, 1.0
    %vm104 = vmand %vm102, %vm103
    %v105 = vsel %vm104, 1, 0
    %v106 = vcvt.s32.f32 %v105
    %vm107 = vcmp.ge.f32.partialorder %v59, 1.0
    %vm108 = vcmp.lt.f32.partialorder %v59, 1.4000001
    %vm109 = vmand %vm107, %vm108
    %v110 = vsel %vm109, 1, 0
    %v111 = vcvt.s32.f32 %v110
    %vm112 = vcmp.ge.f32.partialorder %v59, 1.4000001
    %vm113 = vcmp.lt.f32.partialorder %v59, 1.8
    %vm114 = vmand %vm112, %vm113
    %v115 = vsel %vm114, 1, 0
    %v116 = vcvt.s32.f32 %v115
    %vm117 = vcmp.ge.f32.partialorder %v59, 1.8
    %vm118 = vcmp.lt.f32.partialorder %v59, 2.2
    %vm119 = vmand %vm117, %vm118
    %v120 = vsel %vm119, 1, 0
    %v121 = vcvt.s32.f32 %v120
    %v122 = vsub.f32 %v59, -2.2
    %v123 = vrcp.pop 0.4000001
    %v124 = vmul.f32 %v122, %v123
    %v125 = vmul.f32 %v124, %v71
    %v126 = vsub.f32 -1.4, %v59
    %v127 = vrcp.pop 0.39999998
    %v128 = vmul.f32 %v126, %v127
    %v129 = vmul.f32 %v128, %v76
    %v130 = vadd.f32 %v125, %v129
    %v131 = vsub.f32 %v59, -1.8
    %v132 = vmul.f32 %v131, %v127
    %v133 = vmul.f32 %v132, %v76
    %v134 = vsub.f32 -1.0, %v59
    %v135 = vmul.f32 %v134, %v127
    %v136 = vmul.f32 %v135, %v81
    %v137 = vadd.f32 %v133, %v136
    %v138 = vsub.f32 %v59, -1.4
    %v139 = vmul.f32 %v138, %v127
    %v140 = vmul.f32 %v139, %v81
    %v141 = vsub.f32 -0.6, %v59
    %v142 = vmul.f32 %v141, %v127
    %v143 = vmul.f32 %v142, %v86
    %v144 = vadd.f32 %v140, %v143
    %v145 = vsub.f32 %v59, -1.0
    %v146 = vmul.f32 %v145, %v127
    %v147 = vmul.f32 %v146, %v86
    %v148 = vsub.f32 -0.19999999, %v59
    %v149 = vrcp.pop 0.40000004
    %v150 = vmul.f32 %v148, %v149
    %v151 = vmul.f32 %v150, %v91
    %v152 = vadd.f32 %v147, %v151
    %v153 = vsub.f32 %v59, -0.6
    %v154 = vmul.f32 %v153, %v149
    %v155 = vmul.f32 %v154, %v91
    %v156 = vsub.f32 0.20000005, %v59
    %v157 = vmul.f32 %v156, %v149
    %v158 = vmul.f32 %v157, %v96
    %v159 = vadd.f32 %v155, %v158
    %v160 = vsub.f32 %v59, -0.19999999
    %v161 = vmul.f32 %v160, %v149
    %v162 = vmul.f32 %v161, %v96
    %v163 = vsub.f32 0.6, %v59
    %v164 = vmul.f32 %v163, %v127
    %v165 = vmul.f32 %v164, %v101
    %v166 = vadd.f32 %v162, %v165
    %v167 = vsub.f32 %v59, 0.20000005
    %v168 = vmul.f32 %v167, %v127
    %v169 = vmul.f32 %v168, %v101
    %v170 = vsub.f32 1.0, %v59
    %v171 = vmul.f32 %v170, %v127
    %v172 = vmul.f32 %v171, %v106
    %v173 = vadd.f32 %v169, %v172
    %v174 = vsub.f32 %v59, 0.6
    %v175 = vmul.f32 %v174, %v127
    %v176 = vmul.f32 %v175, %v106
    %v177 = vsub.f32 1.4000001, %v59
    %v178 = vmul.f32 %v177, %v123
    %v179 = vmul.f32 %v178, %v111
    %v180 = vadd.f32 %v176, %v179
    %v181 = vsub.f32 %v59, 1.0
    %v182 = vmul.f32 %v181, %v123
    %v183 = vmul.f32 %v182, %v111
    %v184 = vsub.f32 1.8, %v59
    %v185 = vrcp.pop 0.39999986
    %v186 = vmul.f32 %v184, %v185
    %v187 = vmul.f32 %v186, %v116
    %v188 = vadd.f32 %v183, %v187
    %v189 = vsub.f32 %v59, 1.4000001
    %v190 = vmul.f32 %v189, %v185
    %v191 = vmul.f32 %v190, %v116
    %v192 = vsub.f32 2.2, %v59
    %v193 = vmul.f32 %v192, %v123
    %v194 = vmul.f32 %v193, %v121
    %v195 = vadd.f32 %v191, %v194
    %v196 = vrcp.pop 0.8000001
    %v197 = vmul.f32 %v122, %v196
    %v198 = vmul.f32 %v197, %v130
    %v199 = vrcp.pop 0.79999995
    %v200 = vmul.f32 %v134, %v199
    %v201 = vmul.f32 %v200, %v137
    %v202 = vadd.f32 %v198, %v201
    %v203 = vmul.f32 %v131, %v199
    %v204 = vmul.f32 %v203, %v137
    %v205 = vmul.f32 %v141, %v199
    %v206 = vmul.f32 %v205, %v144
    %v207 = vadd.f32 %v204, %v206
    %v208 = vmul.f32 %v138, %v199
    %v209 = vmul.f32 %v208, %v144
    %v210 = vrcp.pop 0.8
    %v211 = vmul.f32 %v148, %v210
    %v212 = vmul.f32 %v211, %v152
    %v213 = vadd.f32 %v209, %v212
    %v214 = vmul.f32 %v145, %v210
    %v215 = vmul.f32 %v214, %v152
    %v216 = vmul.f32 %v156, %v196
    %v217 = vmul.f32 %v216, %v159
    %v218 = vadd.f32 %v215, %v217
    %v219 = vmul.f32 %v153, %v196
    %v220 = vmul.f32 %v219, %v159
    %v221 = vmul.f32 %v163, %v210
    %v222 = vmul.f32 %v221, %v166
    %v223 = vadd.f32 %v220, %v222
    %v224 = vmul.f32 %v160, %v210
    %v225 = vmul.f32 %v224, %v166
    %v226 = vmul.f32 %v170, %v199
    %v227 = vmul.f32 %v226, %v173
    %v228 = vadd.f32 %v225, %v227
    %v229 = vmul.f32 %v167, %v199
    %v230 = vmul.f32 %v229, %v173
    %v231 = vmul.f32 %v177, %v196
    %v232 = vmul.f32 %v231, %v180
    %v233 = vadd.f32 %v230, %v232
    %v234 = vmul.f32 %v174, %v196
    %v235 = vmul.f32 %v234, %v180
    %v236 = vmul.f32 %v184, %v199
    %v237 = vmul.f32 %v236, %v188
    %v238 = vadd.f32 %v235, %v237
    %v239 = vmul.f32 %v181, %v199
    %v240 = vmul.f32 %v239, %v188
    %v241 = vmul.f32 %v192, %v199
    %v242 = vmul.f32 %v241, %v195
    %v243 = vadd.f32 %v240, %v242
    %v244 = vrcp.pop 1.2
    %v245 = vmul.f32 %v122, %v244
    %v246 = vmul.f32 %v245, %v202
    %v247 = vrcp.pop 1.1999999
    %v248 = vmul.f32 %v141, %v247
    %v249 = vmul.f32 %v248, %v207
    %v250 = vadd.f32 %v246, %v249
    %v251 = vmul.f32 %v131, %v247
    %v252 = vmul.f32 %v251, %v207
    %v253 = vmul.f32 %v148, %v244
    %v254 = vmul.f32 %v253, %v213
    %v255 = vadd.f32 %v252, %v254
    %v256 = vmul.f32 %v138, %v244
    %v257 = vmul.f32 %v256, %v213
    %v258 = vmul.f32 %v156, %v244
    %v259 = vmul.f32 %v258, %v218
    %v260 = vadd.f32 %v257, %v259
    %v261 = vmul.f32 %v145, %v244
    %v262 = vmul.f32 %v261, %v218
    %v263 = vmul.f32 %v163, %v244
    %v264 = vmul.f32 %v263, %v223
    %v265 = vadd.f32 %v262, %v264
    %v266 = vmul.f32 %v153, %v244
    %v267 = vmul.f32 %v266, %v223
    %v268 = vmul.f32 %v170, %v244
    %v269 = vmul.f32 %v268, %v228
    %v270 = vadd.f32 %v267, %v269
    %v271 = vmul.f32 %v160, %v244
    %v272 = vmul.f32 %v271, %v228
    %v273 = vmul.f32 %v177, %v244
    %v274 = vmul.f32 %v273, %v233
    %v275 = vadd.f32 %v272, %v274
    %v276 = vmul.f32 %v167, %v244
    %v277 = vmul.f32 %v276, %v233
    %v278 = vmul.f32 %v184, %v247
    %v279 = vmul.f32 %v278, %v238
    %v280 = vadd.f32 %v277, %v279
    %v281 = vmul.f32 %v174, %v247
    %v282 = vmul.f32 %v281, %v238
    %v283 = vmul.f32 %v192, %v244
    %v284 = vmul.f32 %v283, %v243
    %v285 = vadd.f32 %v282, %v284
    %v286 = vld [vmem:[#allocation2] sm:$0xff]
    %v287 = vld [vmem:[#allocation2 + $0x8] sm:$0xff]
    %v288 = vld [vmem:[#allocation2 + $0x10] sm:$0xff]
    %v289 = vld [vmem:[#allocation2 + $0x18] sm:$0xff]
    %v290 = vld [vmem:[#allocation2 + $0x20] sm:$0xff]
    %v291 = vld [vmem:[#allocation2 + $0x28] sm:$0xff]
    %v292 = vld [vmem:[#allocation2 + $0x30] sm:$0xff]
    %v293 = vld [vmem:[#allocation2 + $0x38] sm:$0xff]
    %v294 = vld [vmem:[#allocation2 + $0x40] sm:$0xff]
    %v295 = vld [vmem:[#allocation2 + $0x48] sm:$0xff]
    %v296 = vld [vmem:[#allocation2 + $0x50] sm:$0xff]
    %v297 = vld [vmem:[#allocation2 + $0x58] sm:$0xff]
    %v298 = vld [vmem:[#allocation2 + $0x60] sm:$0xff]
    %v299 = vld [vmem:[#allocation2 + $0x68] sm:$0xff]
    %v300 = vld [vmem:[#allocation2 + $0x70] sm:$0xff]
    %v301 = vld [vmem:[#allocation2 + $0x78] sm:$0xff]
    %v302 = vld [vmem:[#allocation2 + $0x80] sm:$0xff]
    %v303 = vld [vmem:[#allocation2 + $0x88] sm:$0xff]
    %v304 = vld [vmem:[#allocation2 + $0x90] sm:$0xff]
    %v305 = vld [vmem:[#allocation2 + $0x98] sm:$0xff]
    %v306 = vld [vmem:[#allocation2 + $0xa0] sm:$0xff]
    %v307 = vld [vmem:[#allocation2 + $0xa8] sm:$0xff]
    %v308 = vld [vmem:[#allocation2 + $0xb0] sm:$0xff]
    %v309 = vld [vmem:[#allocation2 + $0xb8] sm:$0xff]
    %v310 = vld [vmem:[#allocation2 + $0xc0] sm:$0xff]
    %v311 = vld [vmem:[#allocation2 + $0xc8] sm:$0xff]
    %v312 = vld [vmem:[#allocation2 + $0xd0] sm:$0xff]
    %v313 = vld [vmem:[#allocation2 + $0xd8] sm:$0xff]
    %v314 = vld [vmem:[#allocation2 + $0xe0] sm:$0xff]
    %v315 = vld [vmem:[#allocation2 + $0xe8] sm:$0xff]
    %v316 = vld [vmem:[#allocation2 + $0xf0] sm:$0xff]
    %v317 = vld [vmem:[#allocation2 + $0xf8] sm:$0xff]
    %v318 = vld [vmem:[#allocation2 + $0x100] sm:$0xff]
    %v319 = vld [vmem:[#allocation2 + $0x108] sm:$0xff]
    %v320 = vld [vmem:[#allocation2 + $0x110] sm:$0xff]
    %v321 = vld [vmem:[#allocation2 + $0x118] sm:$0xff]
    %v322 = vld [vmem:[#allocation2 + $0x120] sm:$0xff]
    %v323 = vld [vmem:[#allocation2 + $0x128] sm:$0xff]
    %v324 = vld [vmem:[#allocation2 + $0x130] sm:$0xff]
    %v325 = vld [vmem:[#allocation2 + $0x138] sm:$0xff]
    %v326 = vld [vmem:[#allocation2 + $0x140] sm:$0xff]
    %v327 = vld [vmem:[#allocation2 + $0x148] sm:$0xff]
    %v328 = vld [vmem:[#allocation2 + $0x150] sm:$0xff]
    %v329 = vld [vmem:[#allocation2 + $0x158] sm:$0xff]
    %v330 = vld [vmem:[#allocation2 + $0x160] sm:$0xff]
    %v331 = vld [vmem:[#allocation2 + $0x168] sm:$0xff]
    %v332 = vld [vmem:[#allocation2 + $0x170] sm:$0xff]
    %v333 = vld [vmem:[#allocation2 + $0x178] sm:$0xff]
    %v334 = vld [vmem:[#allocation2 + $0x180] sm:$0xff]
    %v335 = vld [vmem:[#allocation2 + $0x188] sm:$0xff]
    %v336 = vld [vmem:[#allocation2 + $0x190] sm:$0xff]
    %v337 = vld [vmem:[#allocation2 + $0x198] sm:$0xff]
    %v338 = vld [vmem:[#allocation2 + $0x1a0] sm:$0xff]
    %v339 = vld [vmem:[#allocation2 + $0x1a8] sm:$0xff]
    %v340 = vld [vmem:[#allocation2 + $0x1b0] sm:$0xff]
    %v341 = vld [vmem:[#allocation2 + $0x1b8] sm:$0xff]
    %v342 = vld [vmem:[#allocation2 + $0x1c0] sm:$0xff]
    %v343 = vld [vmem:[#allocation2 + $0x1c8] sm:$0xff]
    %v344 = vld [vmem:[#allocation2 + $0x1d0] sm:$0xff]
    %v345 = vld [vmem:[#allocation2 + $0x1d8] sm:$0xff]
    %v346 = vld [vmem:[#allocation2 + $0x1e0] sm:$0xff]
    %v347 = vld [vmem:[#allocation2 + $0x1e8] sm:$0xff]
    %v348 = vld [vmem:[#allocation2 + $0x1f0] sm:$0xff]
    %v349 = vld [vmem:[#allocation2 + $0x1f8] sm:$0xff]
    %v350 = vld [vmem:[#allocation2 + $0x200] sm:$0xff]
    %v351 = vld [vmem:[#allocation2 + $0x208] sm:$0xff]
    %v352 = vld [vmem:[#allocation2 + $0x210] sm:$0xff]
    %v353 = vld [vmem:[#allocation2 + $0x218] sm:$0xff]
    %v354 = vld [vmem:[#allocation2 + $0x220] sm:$0xff]
    %v355 = vld [vmem:[#allocation2 + $0x228] sm:$0xff]
    %v356 = vld [vmem:[#allocation2 + $0x230] sm:$0xff]
    %v357 = vld [vmem:[#allocation2 + $0x238] sm:$0xff]
    %v358 = vld [vmem:[#allocation2 + $0x240] sm:$0xff]
    %v359 = vld [vmem:[#allocation2 + $0x248] sm:$0xff]
    %v360 = vld [vmem:[#allocation2 + $0x250] sm:$0xff]
    %v361 = vld [vmem:[#allocation2 + $0x258] sm:$0xff]
    %v362 = vld [vmem:[#allocation2 + $0x260] sm:$0xff]
    %v363 = vld [vmem:[#allocation2 + $0x268] sm:$0xff]
    %v364 = vld [vmem:[#allocation2 + $0x270] sm:$0xff]
    %v365 = vld [vmem:[#allocation2 + $0x278] sm:$0xff]
    %v366 = vld [vmem:[#allocation2 + $0x280] sm:$0xff]
    %v367 = vld [vmem:[#allocation2 + $0x288] sm:$0xff]
    %v368 = vld [vmem:[#allocation2 + $0x290] sm:$0xff]
    %v369 = vld [vmem:[#allocation2 + $0x298] sm:$0xff]
    %v370 = vld [vmem:[#allocation2 + $0x2a0] sm:$0xff]
    %v371 = vld [vmem:[#allocation2 + $0x2a8] sm:$0xff]
    %v372 = vld [vmem:[#allocation2 + $0x2b0] sm:$0xff]
    %v373 = vld [vmem:[#allocation2 + $0x2b8] sm:$0xff]
    %v374 = vld [vmem:[#allocation2 + $0x2c0] sm:$0xff]
    %v375 = vld [vmem:[#allocation2 + $0x2c8] sm:$0xff]
    %v376 = vld [vmem:[#allocation2 + $0x2d0] sm:$0xff]
    %v377 = vld [vmem:[#allocation2 + $0x2d8] sm:$0xff]
    %v378 = vld [vmem:[#allocation2 + $0x2e0] sm:$0xff]
    %v379 = vld [vmem:[#allocation2 + $0x2e8] sm:$0xff]
    %v380 = vld [vmem:[#allocation2 + $0x2f0] sm:$0xff]
    %v381 = vld [vmem:[#allocation2 + $0x2f8] sm:$0xff]
    %v382 = vld [vmem:[#allocation2 + $0x300] sm:$0xff]
    %v383 = vld [vmem:[#allocation2 + $0x308] sm:$0xff]
    %v384 = vld [vmem:[#allocation2 + $0x310] sm:$0xff]
    %v385 = vld [vmem:[#allocation2 + $0x318] sm:$0xff]
    %v386 = vld [vmem:[#allocation2 + $0x320] sm:$0xff]
    %v387 = vld [vmem:[#allocation2 + $0x328] sm:$0xff]
    %v388 = vld [vmem:[#allocation2 + $0x330] sm:$0xff]
    %v389 = vld [vmem:[#allocation2 + $0x338] sm:$0xff]
    %v390 = vld [vmem:[#allocation2 + $0x340] sm:$0xff]
    %v391 = vld [vmem:[#allocation2 + $0x348] sm:$0xff]
    %v392 = vld [vmem:[#allocation2 + $0x350] sm:$0xff]
    %v393 = vld [vmem:[#allocation2 + $0x358] sm:$0xff]
    %v394 = vld [vmem:[#allocation2 + $0x360] sm:$0xff]
    %v395 = vld [vmem:[#allocation2 + $0x368] sm:$0xff]
    %v396 = vld [vmem:[#allocation2 + $0x370] sm:$0xff]
    %v397 = vld [vmem:[#allocation2 + $0x378] sm:$0xff]
    %v398 = vld [vmem:[#allocation2 + $0x380] sm:$0xff]
    %v399 = vld [vmem:[#allocation2 + $0x388] sm:$0xff]
    %v400 = vld [vmem:[#allocation2 + $0x390] sm:$0xff]
    %v401 = vld [vmem:[#allocation2 + $0x398] sm:$0xff]
    %v402 = vld [vmem:[#allocation2 + $0x3a0] sm:$0xff]
    %v403 = vld [vmem:[#allocation2 + $0x3a8] sm:$0xff]
    %v404 = vld [vmem:[#allocation2 + $0x3b0] sm:$0xff]
    %v405 = vld [vmem:[#allocation2 + $0x3b8] sm:$0xff]
    %v406 = vld [vmem:[#allocation2 + $0x3c0] sm:$0xff]
    %v407 = vld [vmem:[#allocation2 + $0x3c8] sm:$0xff]
    %v408 = vld [vmem:[#allocation2 + $0x3d0] sm:$0xff]
    %v409 = vld [vmem:[#allocation2 + $0x3d8] sm:$0xff]
    %v410 = vld [vmem:[#allocation2 + $0x3e0] sm:$0xff]
    %v411 = vld [vmem:[#allocation2 + $0x3e8] sm:$0xff]
    %v412 = vld [vmem:[#allocation2 + $0x3f0] sm:$0xff]
    %v413 = vld [vmem:[#allocation2 + $0x3f8] sm:$0xff]
    %v414 = vld [vmem:[#allocation2 + $0x400] sm:$0xff]
    %v415 = vld [vmem:[#allocation2 + $0x408] sm:$0xff]
    %v416 = vld [vmem:[#allocation2 + $0x410] sm:$0xff]
    %v417 = vld [vmem:[#allocation2 + $0x418] sm:$0xff]
    %v418 = vld [vmem:[#allocation2 + $0x420] sm:$0xff]
    %v419 = vld [vmem:[#allocation2 + $0x428] sm:$0xff]
    %v420 = vld [vmem:[#allocation2 + $0x430] sm:$0xff]
    %v421 = vld [vmem:[#allocation2 + $0x438] sm:$0xff]
    %v422 = vld [vmem:[#allocation2 + $0x440] sm:$0xff]
    %v423 = vld [vmem:[#allocation2 + $0x448] sm:$0xff]
    %v424 = vld [vmem:[#allocation2 + $0x450] sm:$0xff]
    %v425 = vld [vmem:[#allocation2 + $0x458] sm:$0xff]
    %v426 = vld [vmem:[#allocation2 + $0x460] sm:$0xff]
    %v427 = vld [vmem:[#allocation2 + $0x468] sm:$0xff]
    %v428 = vld [vmem:[#allocation2 + $0x470] sm:$0xff]
    %v429 = vld [vmem:[#allocation2 + $0x478] sm:$0xff]
    %430 = vmatprep.subr.mxu0 0.0
    %431 = vmatpush1.msra.mxu0 %v286
    %432 = vmatprep.subr.mxu0 0.0
    %433 = vmatpush1.msra.mxu0 %v287
    %434 = vmatprep.subr.mxu0 0.0
    %435 = vmatpush1.msra.mxu0 %v288
    %436 = vmatprep.subr.mxu0 0.0
    %437 = vmatpush1.msra.mxu0 %v289
    %438 = vmatprep.subr.mxu0 0.0
    %439 = vmatpush1.msra.mxu0 %v290
    %440 = vmatprep.subr.mxu0 0.0
    %441 = vmatpush1.msra.mxu0 %v291
    %442 = vmatprep.subr.mxu0 0.0
    %443 = vmatpush1.msra.mxu0 %v292
    %444 = vmatprep.subr.mxu0 0.0
    %445 = vmatpush1.msra.mxu0 %v293
    %446 = vmatprep.subr.mxu0 0.0
    %447 = vmatpush1.msra.mxu0 %v294
    %448 = vmatprep.subr.mxu0 0.0
    %449 = vmatpush1.msra.mxu0 %v295
    %450 = vmatprep.subr.mxu0 0.0
    %451 = vmatpush1.msra.mxu0 %v296
    %452 = vmatprep.subr.mxu0 0.0
    %453 = vmatpush1.msra.mxu0 %v297
    %454 = vmatprep.subr.mxu0 0.0
    %455 = vmatpush1.msra.mxu0 %v298
    %456 = vmatprep.subr.mxu0 0.0
    %457 = vmatpush1.msra.mxu0 %v299
    %458 = vmatprep.subr.mxu0 0.0
    %459 = vmatpush1.msra.mxu0 %v300
    %460 = vmatprep.subr.mxu0 0.0
    %461 = vmatpush1.msra.mxu0 %v301
    %462 = vmatprep.subr.mxu0 0.0
    %463 = vmatpush1.msra.mxu0 %v302
    %464 = vmatprep.subr.mxu0 0.0
    %465 = vmatpush1.msra.mxu0 %v303
    %466 = vmatprep.subr.mxu0 0.0
    %467 = vmatpush1.msra.mxu0 %v304
    %468 = vmatprep.subr.mxu0 0.0
    %469 = vmatpush1.msra.mxu0 %v305
    %470 = vmatprep.subr.mxu0 0.0
    %471 = vmatpush1.msra.mxu0 %v306
    %472 = vmatprep.subr.mxu0 0.0
    %473 = vmatpush1.msra.mxu0 %v307
    %474 = vmatprep.subr.mxu0 0.0
    %475 = vmatpush1.msra.mxu0 %v308
    %476 = vmatprep.subr.mxu0 0.0
    %477 = vmatpush1.msra.mxu0 %v309
    %478 = vmatprep.subr.mxu0 0.0
    %479 = vmatpush1.msra.mxu0 %v310
    %480 = vmatprep.subr.mxu0 0.0
    %481 = vmatpush1.msra.mxu0 %v311
    %482 = vmatprep.subr.mxu0 0.0
    %483 = vmatpush1.msra.mxu0 %v312
    %484 = vmatprep.subr.mxu0 0.0
    %485 = vmatpush1.msra.mxu0 %v313
    %486 = vmatprep.subr.mxu0 0.0
    %487 = vmatpush1.msra.mxu0 %v314
    %488 = vmatprep.subr.mxu0 0.0
    %489 = vmatpush1.msra.mxu0 %v315
    %490 = vmatprep.subr.mxu0 0.0
    %491 = vmatpush1.msra.mxu0 %v316
    %492 = vmatprep.subr.mxu0 0.0
    %493 = vmatpush1.msra.mxu0 %v317
    %494 = vmatprep.mubr.f32.mxu0 %v250
    %495 = vmatmul.mubr.f32.gmra.mrb[0].mxu0 %v66
    %v496 = vpop.f32.mrb[0].mxu0
    %v497 = vadd.f32 0.0, %v496
    %v498 = vpop.f32.mrb[0].mxu0
    %499 = vdwg.mxu0
    %500 = vmatprep.subr.mxu0 0.0
    %501 = vmatpush1.msra.mxu0 %v318
    %502 = vmatprep.subr.mxu0 0.0
    %503 = vmatpush1.msra.mxu0 %v319
    %504 = vmatprep.subr.mxu0 0.0
    %505 = vmatpush1.msra.mxu0 %v320
    %506 = vmatprep.subr.mxu0 0.0
    %507 = vmatpush1.msra.mxu0 %v321
    %508 = vmatprep.subr.mxu0 0.0
    %509 = vmatpush1.msra.mxu0 %v322
    %510 = vmatprep.subr.mxu0 0.0
    %511 = vmatpush1.msra.mxu0 %v323
    %512 = vmatprep.subr.mxu0 0.0
    %513 = vmatpush1.msra.mxu0 %v324
    %514 = vmatprep.subr.mxu0 0.0
    %515 = vmatpush1.msra.mxu0 %v325
    %516 = vmatprep.subr.mxu0 0.0
    %517 = vmatpush1.msra.mxu0 %v326
    %518 = vmatprep.subr.mxu0 0.0
    %519 = vmatpush1.msra.mxu0 %v327
    %520 = vmatprep.subr.mxu0 0.0
    %521 = vmatpush1.msra.mxu0 %v328
    %522 = vmatprep.subr.mxu0 0.0
    %523 = vmatpush1.msra.mxu0 %v329
    %524 = vmatprep.subr.mxu0 0.0
    %525 = vmatpush1.msra.mxu0 %v330
    %526 = vmatprep.subr.mxu0 0.0
    %527 = vmatpush1.msra.mxu0 %v331
    %528 = vmatprep.subr.mxu0 0.0
    %529 = vmatpush1.msra.mxu0 %v332
    %530 = vmatprep.subr.mxu0 0.0
    %531 = vmatpush1.msra.mxu0 %v333
    %532 = vmatprep.subr.mxu0 0.0
    %533 = vmatpush1.msra.mxu0 %v334
    %534 = vmatprep.subr.mxu0 0.0
    %535 = vmatpush1.msra.mxu0 %v335
    %536 = vmatprep.subr.mxu0 0.0
    %537 = vmatpush1.msra.mxu0 %v336
    %538 = vmatprep.subr.mxu0 0.0
    %539 = vmatpush1.msra.mxu0 %v337
    %540 = vmatprep.subr.mxu0 0.0
    %541 = vmatpush1.msra.mxu0 %v338
    %542 = vmatprep.subr.mxu0 0.0
    %543 = vmatpush1.msra.mxu0 %v339
    %544 = vmatprep.subr.mxu0 0.0
    %545 = vmatpush1.msra.mxu0 %v340
    %546 = vmatprep.subr.mxu0 0.0
    %547 = vmatpush1.msra.mxu0 %v341
    %548 = vmatprep.subr.mxu0 0.0
    %549 = vmatpush1.msra.mxu0 %v342
    %550 = vmatprep.subr.mxu0 0.0
    %551 = vmatpush1.msra.mxu0 %v343
    %552 = vmatprep.subr.mxu0 0.0
    %553 = vmatpush1.msra.mxu0 %v344
    %554 = vmatprep.subr.mxu0 0.0
    %555 = vmatpush1.msra.mxu0 %v345
    %556 = vmatprep.subr.mxu0 0.0
    %557 = vmatpush1.msra.mxu0 %v346
    %558 = vmatprep.subr.mxu0 0.0
    %559 = vmatpush1.msra.mxu0 %v347
    %560 = vmatprep.subr.mxu0 0.0
    %561 = vmatpush1.msra.mxu0 %v348
    %562 = vmatprep.subr.mxu0 0.0
    %563 = vmatpush1.msra.mxu0 %v349
    %564 = vmatprep.mubr.f32.mxu0 %v260
    %565 = vmatmul.mubr.f32.gmra.mrb[0].mxu0 %v255
    %v566 = vpop.f32.mrb[0].mxu0
    %v567 = vadd.f32 %v497, %v566
    %v568 = vpop.f32.mrb[0].mxu0
    %569 = vdwg.mxu0
    %570 = vmatprep.subr.mxu0 0.0
    %571 = vmatpush1.msra.mxu0 %v350
    %572 = vmatprep.subr.mxu0 0.0
    %573 = vmatpush1.msra.mxu0 %v351
    %574 = vmatprep.subr.mxu0 0.0
    %575 = vmatpush1.msra.mxu0 %v352
    %576 = vmatprep.subr.mxu0 0.0
    %577 = vmatpush1.msra.mxu0 %v353
    %578 = vmatprep.subr.mxu0 0.0
    %579 = vmatpush1.msra.mxu0 %v354
    %580 = vmatprep.subr.mxu0 0.0
    %581 = vmatpush1.msra.mxu0 %v355
    %582 = vmatprep.subr.mxu0 0.0
    %583 = vmatpush1.msra.mxu0 %v356
    %584 = vmatprep.subr.mxu0 0.0
    %585 = vmatpush1.msra.mxu0 %v357
    %586 = vmatprep.subr.mxu0 0.0
    %587 = vmatpush1.msra.mxu0 %v358
    %588 = vmatprep.subr.mxu0 0.0
    %589 = vmatpush1.msra.mxu0 %v359
    %590 = vmatprep.subr.mxu0 0.0
    %591 = vmatpush1.msra.mxu0 %v360
    %592 = vmatprep.subr.mxu0 0.0
    %593 = vmatpush1.msra.mxu0 %v361
    %594 = vmatprep.subr.mxu0 0.0
    %595 = vmatpush1.msra.mxu0 %v362
    %596 = vmatprep.subr.mxu0 0.0
    %597 = vmatpush1.msra.mxu0 %v363
    %598 = vmatprep.subr.mxu0 0.0
    %599 = vmatpush1.msra.mxu0 %v364
    %600 = vmatprep.subr.mxu0 0.0
    %601 = vmatpush1.msra.mxu0 %v365
    %602 = vmatprep.subr.mxu0 0.0
    %603 = vmatpush1.msra.mxu0 %v366
    %604 = vmatprep.subr.mxu0 0.0
    %605 = vmatpush1.msra.mxu0 %v367
    %606 = vmatprep.subr.mxu0 0.0
    %607 = vmatpush1.msra.mxu0 %v368
    %608 = vmatprep.subr.mxu0 0.0
    %609 = vmatpush1.msra.mxu0 %v369
    %610 = vmatprep.subr.mxu0 0.0
    %611 = vmatpush1.msra.mxu0 %v370
    %612 = vmatprep.subr.mxu0 0.0
    %613 = vmatpush1.msra.mxu0 %v371
    %614 = vmatprep.subr.mxu0 0.0
    %615 = vmatpush1.msra.mxu0 %v372
    %616 = vmatprep.subr.mxu0 0.0
    %617 = vmatpush1.msra.mxu0 %v373
    %618 = vmatprep.subr.mxu0 0.0
    %619 = vmatpush1.msra.mxu0 %v374
    %620 = vmatprep.subr.mxu0 0.0
    %621 = vmatpush1.msra.mxu0 %v375
    %622 = vmatprep.subr.mxu0 0.0
    %623 = vmatpush1.msra.mxu0 %v376
    %624 = vmatprep.subr.mxu0 0.0
    %625 = vmatpush1.msra.mxu0 %v377
    %626 = vmatprep.subr.mxu0 0.0
    %627 = vmatpush1.msra.mxu0 %v378
    %628 = vmatprep.subr.mxu0 0.0
    %629 = vmatpush1.msra.mxu0 %v379
    %630 = vmatprep.subr.mxu0 0.0
    %631 = vmatpush1.msra.mxu0 %v380
    %632 = vmatprep.subr.mxu0 0.0
    %633 = vmatpush1.msra.mxu0 %v381
    %634 = vmatprep.mubr.f32.mxu0 %v270
    %635 = vmatmul.mubr.f32.gmra.mrb[0].mxu0 %v265
    %v636 = vpop.f32.mrb[0].mxu0
    %v637 = vadd.f32 %v567, %v636
    %v638 = vpop.f32.mrb[0].mxu0
    %639 = vdwg.mxu0
    %640 = vmatprep.subr.mxu0 0.0
    %641 = vmatpush1.msra.mxu0 %v382
    %642 = vmatprep.subr.mxu0 0.0
    %643 = vmatpush1.msra.mxu0 %v383
    %644 = vmatprep.subr.mxu0 0.0
    %645 = vmatpush1.msra.mxu0 %v384
    %646 = vmatprep.subr.mxu0 0.0
    %647 = vmatpush1.msra.mxu0 %v385
    %648 = vmatprep.subr.mxu0 0.0
    %649 = vmatpush1.msra.mxu0 %v386
    %650 = vmatprep.subr.mxu0 0.0
    %651 = vmatpush1.msra.mxu0 %v387
    %652 = vmatprep.subr.mxu0 0.0
    %653 = vmatpush1.msra.mxu0 %v388
    %654 = vmatprep.subr.mxu0 0.0
    %655 = vmatpush1.msra.mxu0 %v389
    %656 = vmatprep.subr.mxu0 0.0
    %657 = vmatpush1.msra.mxu0 %v390
    %658 = vmatprep.subr.mxu0 0.0
    %659 = vmatpush1.msra.mxu0 %v391
    %660 = vmatprep.subr.mxu0 0.0
    %661 = vmatpush1.msra.mxu0 %v392
    %662 = vmatprep.subr.mxu0 0.0
    %663 = vmatpush1.msra.mxu0 %v393
    %664 = vmatprep.subr.mxu0 0.0
    %665 = vmatpush1.msra.mxu0 %v394
    %666 = vmatprep.subr.mxu0 0.0
    %667 = vmatpush1.msra.mxu0 %v395
    %668 = vmatprep.subr.mxu0 0.0
    %669 = vmatpush1.msra.mxu0 %v396
    %670 = vmatprep.subr.mxu0 0.0
    %671 = vmatpush1.msra.mxu0 %v397
    %672 = vmatprep.subr.mxu0 0.0
    %673 = vmatpush1.msra.mxu0 %v398
    %674 = vmatprep.subr.mxu0 0.0
    %675 = vmatpush1.msra.mxu0 %v399
    %676 = vmatprep.subr.mxu0 0.0
    %677 = vmatpush1.msra.mxu0 %v400
    %678 = vmatprep.subr.mxu0 0.0
    %679 = vmatpush1.msra.mxu0 %v401
    %680 = vmatprep.subr.mxu0 0.0
    %681 = vmatpush1.msra.mxu0 %v402
    %682 = vmatprep.subr.mxu0 0.0
    %683 = vmatpush1.msra.mxu0 %v403
    %684 = vmatprep.subr.mxu0 0.0
    %685 = vmatpush1.msra.mxu0 %v404
    %686 = vmatprep.subr.mxu0 0.0
    %687 = vmatpush1.msra.mxu0 %v405
    %688 = vmatprep.subr.mxu0 0.0
    %689 = vmatpush1.msra.mxu0 %v406
    %690 = vmatprep.subr.mxu0 0.0
    %691 = vmatpush1.msra.mxu0 %v407
    %692 = vmatprep.subr.mxu0 0.0
    %693 = vmatpush1.msra.mxu0 %v408
    %694 = vmatprep.subr.mxu0 0.0
    %695 = vmatpush1.msra.mxu0 %v409
    %696 = vmatprep.subr.mxu0 0.0
    %697 = vmatpush1.msra.mxu0 %v410
    %698 = vmatprep.subr.mxu0 0.0
    %699 = vmatpush1.msra.mxu0 %v411
    %700 = vmatprep.subr.mxu0 0.0
    %701 = vmatpush1.msra.mxu0 %v412
    %702 = vmatprep.subr.mxu0 0.0
    %703 = vmatpush1.msra.mxu0 %v413
    %704 = vmatprep.mubr.f32.mxu0 %v280
    %705 = vmatmul.mubr.f32.gmra.mrb[0].mxu0 %v275
    %v706 = vpop.f32.mrb[0].mxu0
    %v707 = vadd.f32 %v637, %v706
    %v708 = vpop.f32.mrb[0].mxu0
    %709 = vdwg.mxu0
    %710 = vmatprep.subr.mxu0 0.0
    %711 = vmatpush1.msra.mxu0 %v414
    %712 = vmatprep.subr.mxu0 0.0
    %713 = vmatpush1.msra.mxu0 %v415
    %714 = vmatprep.subr.mxu0 0.0
    %715 = vmatpush1.msra.mxu0 %v416
    %716 = vmatprep.subr.mxu0 0.0
    %717 = vmatpush1.msra.mxu0 %v417
    %718 = vmatprep.subr.mxu0 0.0
    %719 = vmatpush1.msra.mxu0 %v418
    %720 = vmatprep.subr.mxu0 0.0
    %721 = vmatpush1.msra.mxu0 %v419
    %722 = vmatprep.subr.mxu0 0.0
    %723 = vmatpush1.msra.mxu0 %v420
    %724 = vmatprep.subr.mxu0 0.0
    %725 = vmatpush1.msra.mxu0 %v421
    %726 = vmatprep.subr.mxu0 0.0
    %727 = vmatpush1.msra.mxu0 %v422
    %728 = vmatprep.subr.mxu0 0.0
    %729 = vmatpush1.msra.mxu0 %v423
    %730 = vmatprep.subr.mxu0 0.0
    %731 = vmatpush1.msra.mxu0 %v424
    %732 = vmatprep.subr.mxu0 0.0
    %733 = vmatpush1.msra.mxu0 %v425
    %734 = vmatprep.subr.mxu0 0.0
    %735 = vmatpush1.msra.mxu0 %v426
    %736 = vmatprep.subr.mxu0 0.0
    %737 = vmatpush1.msra.mxu0 %v427
    %738 = vmatprep.subr.mxu0 0.0
    %739 = vmatpush1.msra.mxu0 %v428
    %740 = vmatprep.subr.mxu0 0.0
    %741 = vmatpush1.msra.mxu0 %v429
    %742 = vmatprep.subr.mxu0 0.0
    %743 = vmatpush1.msra.mxu0 0.0
    %744 = vmatprep.subr.mxu0 0.0
    %745 = vmatpush1.msra.mxu0 0.0
    %746 = vmatprep.subr.mxu0 0.0
    %747 = vmatpush1.msra.mxu0 0.0
    %748 = vmatprep.subr.mxu0 0.0
    %749 = vmatpush1.msra.mxu0 0.0
    %750 = vmatprep.subr.mxu0 0.0
    %751 = vmatpush1.msra.mxu0 0.0
    %752 = vmatprep.subr.mxu0 0.0
    %753 = vmatpush1.msra.mxu0 0.0
    %754 = vmatprep.subr.mxu0 0.0
    %755 = vmatpush1.msra.mxu0 0.0
    %756 = vmatprep.subr.mxu0 0.0
    %757 = vmatpush1.msra.mxu0 0.0
    %758 = vmatprep.subr.mxu0 0.0
    %759 = vmatpush1.msra.mxu0 0.0
    %760 = vmatprep.subr.mxu0 0.0
    %761 = vmatpush1.msra.mxu0 0.0
    %762 = vmatprep.subr.mxu0 0.0
    %763 = vmatpush1.msra.mxu0 0.0
    %764 = vmatprep.subr.mxu0 0.0
    %765 = vmatpush1.msra.mxu0 0.0
    %766 = vmatprep.subr.mxu0 0.0
    %767 = vmatpush1.msra.mxu0 0.0
    %768 = vmatprep.subr.mxu0 0.0
    %769 = vmatpush1.msra.mxu0 0.0
    %770 = vmatprep.subr.mxu0 0.0
    %771 = vmatpush1.msra.mxu0 0.0
    %772 = vmatprep.subr.mxu0 0.0
    %773 = vmatpush1.msra.mxu0 0.0
    %774 = vmatprep.mubr.f32.mxu0 0.0
    %775 = vmatmul.mubr.f32.gmra.mrb[0].mxu0 %v285
    %v776 = vpop.f32.mrb[0].mxu0
    %v777 = vadd.f32 %v707, %v776
    %v778 = vpop.f32.mrb[0].mxu0
    %779 = vdwg.mxu0
    %v780 = vxor.u32 %v777, 2147483648
    %v781 = vmul.f32 %v780, 1.442695
    %v782 = vpow.pop %v781
    %v783 = vadd.f32 %v782, 1.0
    %v784 = vrcp.pop %v783
    %v785 = vmul.f32 1.0, %v784
    %v786 = vmul.f32 %v777, %v785
    %vm787 = vcmp.ge.f32.partialorder %v777, -2.2
    %vm788 = vcmp.lt.f32.partialorder %v777, -1.8
    %vm789 = vmand %vm787, %vm788
    %v790 = vsel %vm789, 1, 0
    %v791 = vcvt.s32.f32 %v790
    %vm792 = vcmp.ge.f32.partialorder %v777, -1.8
    %vm793 = vcmp.lt.f32.partialorder %v777, -1.4
    %vm794 = vmand %vm792, %vm793
    %v795 = vsel %vm794, 1, 0
    %v796 = vcvt.s32.f32 %v795
    %vm797 = vcmp.ge.f32.partialorder %v777, -1.4
    %vm798 = vcmp.lt.f32.partialorder %v777, -1.0
    %vm799 = vmand %vm797, %vm798
    %v800 = vsel %vm799, 1, 0
    %v801 = vcvt.s32.f32 %v800
    %vm802 = vcmp.ge.f32.partialorder %v777, -1.0
    %vm803 = vcmp.lt.f32.partialorder %v777, -0.6
    %vm804 = vmand %vm802, %vm803
    %v805 = vsel %vm804, 1, 0
    %v806 = vcvt.s32.f32 %v805
    %vm807 = vcmp.ge.f32.partialorder %v777, -0.6
    %vm808 = vcmp.lt.f32.partialorder %v777, -0.19999999
    %vm809 = vmand %vm807, %vm808
    %v810 = vsel %vm809, 1, 0
    %v811 = vcvt.s32.f32 %v810
    %vm812 = vcmp.ge.f32.partialorder %v777, -0.19999999
    %vm813 = vcmp.lt.f32.partialorder %v777, 0.20000005
    %vm814 = vmand %vm812, %vm813
    %v815 = vsel %vm814, 1, 0
    %v816 = vcvt.s32.f32 %v815
    %vm817 = vcmp.ge.f32.partialorder %v777, 0.20000005
    %vm818 = vcmp.lt.f32.partialorder %v777, 0.6
    %vm819 = vmand %vm817, %vm818
    %v820 = vsel %vm819, 1, 0
    %v821 = vcvt.s32.f32 %v820
    %vm822 = vcmp.ge.f32.partialorder %v777, 0.6
    %vm823 = vcmp.lt.f32.partialorder %v777, 1.0
    %vm824 = vmand %vm822, %vm823
    %v825 = vsel %vm824, 1, 0
    %v826 = vcvt.s32.f32 %v825
    %vm827 = vcmp.ge.f32.partialorder %v777, 1.0
    %vm828 = vcmp.lt.f32.partialorder %v777, 1.4000001
    %vm829 = vmand %vm827, %vm828
    %v830 = vsel %vm829, 1, 0
    %v831 = vcvt.s32.f32 %v830
    %vm832 = vcmp.ge.f32.partialorder %v777, 1.4000001
    %vm833 = vcmp.lt.f32.partialorder %v777, 1.8
    %vm834 = vmand %vm832, %vm833
    %v835 = vsel %vm834, 1, 0
    %v836 = vcvt.s32.f32 %v835
    %vm837 = vcmp.ge.f32.partialorder %v777, 1.8
    %vm838 = vcmp.lt.f32.partialorder %v777, 2.2
    %vm839 = vmand %vm837, %vm838
    %v840 = vsel %vm839, 1, 0
    %v841 = vcvt.s32.f32 %v840
    %v842 = vsub.f32 %v777, -2.2
    %v843 = vmul.f32 %v842, %v123
    %v844 = vmul.f32 %v843, %v791
    %v845 = vsub.f32 -1.4, %v777
    %v846 = vmul.f32 %v845, %v127
    %v847 = vmul.f32 %v846, %v796
    %v848 = vadd.f32 %v844, %v847
    %v849 = vsub.f32 %v777, -1.8
    %v850 = vmul.f32 %v849, %v127
    %v851 = vmul.f32 %v850, %v796
    %v852 = vsub.f32 -1.0, %v777
    %v853 = vmul.f32 %v852, %v127
    %v854 = vmul.f32 %v853, %v801
    %v855 = vadd.f32 %v851, %v854
    %v856 = vsub.f32 %v777, -1.4
    %v857 = vmul.f32 %v856, %v127
    %v858 = vmul.f32 %v857, %v801
    %v859 = vsub.f32 -0.6, %v777
    %v860 = vmul.f32 %v859, %v127
    %v861 = vmul.f32 %v860, %v806
    %v862 = vadd.f32 %v858, %v861
    %v863 = vsub.f32 %v777, -1.0
    %v864 = vmul.f32 %v863, %v127
    %v865 = vmul.f32 %v864, %v806
    %v866 = vsub.f32 -0.19999999, %v777
    %v867 = vmul.f32 %v866, %v149
    %v868 = vmul.f32 %v867, %v811
    %v869 = vadd.f32 %v865, %v868
    %v870 = vsub.f32 %v777, -0.6
    %v871 = vmul.f32 %v870, %v149
    %v872 = vmul.f32 %v871, %v811
    %v873 = vsub.f32 0.20000005, %v777
    %v874 = vmul.f32 %v873, %v149
    %v875 = vmul.f32 %v874, %v816
    %v876 = vadd.f32 %v872, %v875
    %v877 = vsub.f32 %v777, -0.19999999
    %v878 = vmul.f32 %v877, %v149
    %v879 = vmul.f32 %v878, %v816
    %v880 = vsub.f32 0.6, %v777
    %v881 = vmul.f32 %v880, %v127
    %v882 = vmul.f32 %v881, %v821
    %v883 = vadd.f32 %v879, %v882
    %v884 = vsub.f32 %v777, 0.20000005
    %v885 = vmul.f32 %v884, %v127
    %v886 = vmul.f32 %v885, %v821
    %v887 = vsub.f32 1.0, %v777
    %v888 = vmul.f32 %v887, %v127
    %v889 = vmul.f32 %v888, %v826
    %v890 = vadd.f32 %v886, %v889
    %v891 = vsub.f32 %v777, 0.6
    %v892 = vmul.f32 %v891, %v127
    %v893 = vmul.f32 %v892, %v826
    %v894 = vsub.f32 1.4000001, %v777
    %v895 = vmul.f32 %v894, %v123
    %v896 = vmul.f32 %v895, %v831
    %v897 = vadd.f32 %v893, %v896
    %v898 = vsub.f32 %v777, 1.0
    %v899 = vmul.f32 %v898, %v123
    %v900 = vmul.f32 %v899, %v831
    %v901 = vsub.f32 1.8, %v777
    %v902 = vmul.f32 %v901, %v185
    %v903 = vmul.f32 %v902, %v836
    %v904 = vadd.f32 %v900, %v903
    %v905 = vsub.f32 %v777, 1.4000001
    %v906 = vmul.f32 %v905, %v185
    %v907 = vmul.f32 %v906, %v836
    %v908 = vsub.f32 2.2, %v777
    %v909 = vmul.f32 %v908, %v123
    %v910 = vmul.f32 %v909, %v841
    %v911 = vadd.f32 %v907, %v910
    %v912 = vmul.f32 %v842, %v196
    %v913 = vmul.f32 %v912, %v848
    %v914 = vmul.f32 %v852, %v199
    %v915 = vmul.f32 %v914, %v855
    %v916 = vadd.f32 %v913, %v915
    %v917 = vmul.f32 %v849, %v199
    %v918 = vmul.f32 %v917, %v855
    %v919 = vmul.f32 %v859, %v199
    %v920 = vmul.f32 %v919, %v862
    %v921 = vadd.f32 %v918, %v920
    %v922 = vmul.f32 %v856, %v199
    %v923 = vmul.f32 %v922, %v862
    %v924 = vmul.f32 %v866, %v210
    %v925 = vmul.f32 %v924, %v869
    %v926 = vadd.f32 %v923, %v925
    %v927 = vmul.f32 %v863, %v210
    %v928 = vmul.f32 %v927, %v869
    %v929 = vmul.f32 %v873, %v196
    %v930 = vmul.f32 %v929, %v876
    %v931 = vadd.f32 %v928, %v930
    %v932 = vmul.f32 %v870, %v196
    %v933 = vmul.f32 %v932, %v876
    %v934 = vmul.f32 %v880, %v210
    %v935 = vmul.f32 %v934, %v883
    %v936 = vadd.f32 %v933, %v935
    %v937 = vmul.f32 %v877, %v210
    %v938 = vmul.f32 %v937, %v883
    %v939 = vmul.f32 %v887, %v199
    %v940 = vmul.f32 %v939, %v890
    %v941 = vadd.f32 %v938, %v940
    %v942 = vmul.f32 %v884, %v199
    %v943 = vmul.f32 %v942, %v890
    %v944 = vmul.f32 %v894, %v196
    %v945 = vmul.f32 %v944, %v897
    %v946 = vadd.f32 %v943, %v945
    %v947 = vmul.f32 %v891, %v196
    %v948 = vmul.f32 %v947, %v897
    %v949 = vmul.f32 %v901, %v199
    %v950 = vmul.f32 %v949, %v904
    %v951 = vadd.f32 %v948, %v950
    %v952 = vmul.f32 %v898, %v199
    %v953 = vmul.f32 %v952, %v904
    %v954 = vmul.f32 %v908, %v199
    %v955 = vmul.f32 %v954, %v911
    %v956 = vadd.f32 %v953, %v955
    %v957 = vmul.f32 %v842, %v244
    %v958 = vmul.f32 %v957, %v916
    %v959 = vmul.f32 %v859, %v247
    %v960 = vmul.f32 %v959, %v921
    %v961 = vadd.f32 %v958, %v960
    %v962 = vmul.f32 %v849, %v247
    %v963 = vmul.f32 %v962, %v921
    %v964 = vmul.f32 %v866, %v244
    %v965 = vmul.f32 %v964, %v926
    %v966 = vadd.f32 %v963, %v965
    %v967 = vmul.f32 %v856, %v244
    %v968 = vmul.f32 %v967, %v926
    %v969 = vmul.f32 %v873, %v244
    %v970 = vmul.f32 %v969, %v931
    %v971 = vadd.f32 %v968, %v970
    %v972 = vmul.f32 %v863, %v244
    %v973 = vmul.f32 %v972, %v931
    %v974 = vmul.f32 %v880, %v244
    %v975 = vmul.f32 %v974, %v936
    %v976 = vadd.f32 %v973, %v975
    %v977 = vmul.f32 %v870, %v244
    %v978 = vmul.f32 %v977, %v936
    %v979 = vmul.f32 %v887, %v244
    %v980 = vmul.f32 %v979, %v941
    %v981 = vadd.f32 %v978, %v980
    %v982 = vmul.f32 %v877, %v244
    %v983 = vmul.f32 %v982, %v941
    %v984 = vmul.f32 %v894, %v244
    %v985 = vmul.f32 %v984, %v946
    %v986 = vadd.f32 %v983, %v985
    %v987 = vmul.f32 %v884, %v244
    %v988 = vmul.f32 %v987, %v946
    %v989 = vmul.f32 %v901, %v247
    %v990 = vmul.f32 %v989, %v951
    %v991 = vadd.f32 %v988, %v990
    %v992 = vmul.f32 %v891, %v247
    %v993 = vmul.f32 %v992, %v951
    %v994 = vmul.f32 %v908, %v244
    %v995 = vmul.f32 %v994, %v956
    %v996 = vadd.f32 %v993, %v995
    %v997 = vld [vmem:[#allocation5] sm:$0xff]
    %v998 = vld [vmem:[#allocation5 + $0x8] sm:$0xff]
    %v999 = vld [vmem:[#allocation5 + $0x10] sm:$0xff]
    %v1000 = vld [vmem:[#allocation5 + $0x18] sm:$0xff]
    %v1001 = vld [vmem:[#allocation5 + $0x20] sm:$0xff]
    %v1002 = vld [vmem:[#allocation5 + $0x28] sm:$0xff]
    %v1003 = vld [vmem:[#allocation5 + $0x30] sm:$0xff]
    %v1004 = vld [vmem:[#allocation5 + $0x38] sm:$0xff]
    %v1005 = vld [vmem:[#allocation5 + $0x40] sm:$0xff]
    %v1006 = vld [vmem:[#allocation5 + $0x48] sm:$0xff]
    %v1007 = vld [vmem:[#allocation5 + $0x50] sm:$0xff]
    %v1008 = vld [vmem:[#allocation5 + $0x58] sm:$0xff]
    %v1009 = vld [vmem:[#allocation5 + $0x60] sm:$0xff]
    %v1010 = vld [vmem:[#allocation5 + $0x68] sm:$0xff]
    %v1011 = vld [vmem:[#allocation5 + $0x70] sm:$0xff]
    %v1012 = vld [vmem:[#allocation5 + $0x78] sm:$0xff]
    %v1013 = vld [vmem:[#allocation5 + $0x80] sm:$0xff]
    %v1014 = vld [vmem:[#allocation5 + $0x88] sm:$0xff]
    %v1015 = vld [vmem:[#allocation5 + $0x90] sm:$0xff]
    %v1016 = vld [vmem:[#allocation5 + $0x98] sm:$0xff]
    %v1017 = vld [vmem:[#allocation5 + $0xa0] sm:$0xff]
    %v1018 = vld [vmem:[#allocation5 + $0xa8] sm:$0xff]
    %v1019 = vld [vmem:[#allocation5 + $0xb0] sm:$0xff]
    %v1020 = vld [vmem:[#allocation5 + $0xb8] sm:$0xff]
    %v1021 = vld [vmem:[#allocation5 + $0xc0] sm:$0xff]
    %v1022 = vld [vmem:[#allocation5 + $0xc8] sm:$0xff]
    %v1023 = vld [vmem:[#allocation5 + $0xd0] sm:$0xff]
    %v1024 = vld [vmem:[#allocation5 + $0xd8] sm:$0xff]
    %v1025 = vld [vmem:[#allocation5 + $0xe0] sm:$0xff]
    %v1026 = vld [vmem:[#allocation5 + $0xe8] sm:$0xff]
    %v1027 = vld [vmem:[#allocation5 + $0xf0] sm:$0xff]
    %v1028 = vld [vmem:[#allocation5 + $0xf8] sm:$0xff]
    %v1029 = vld [vmem:[#allocation5 + $0x100] sm:$0xff]
    %v1030 = vld [vmem:[#allocation5 + $0x108] sm:$0xff]
    %v1031 = vld [vmem:[#allocation5 + $0x110] sm:$0xff]
    %v1032 = vld [vmem:[#allocation5 + $0x118] sm:$0xff]
    %v1033 = vld [vmem:[#allocation5 + $0x120] sm:$0xff]
    %v1034 = vld [vmem:[#allocation5 + $0x128] sm:$0xff]
    %v1035 = vld [vmem:[#allocation5 + $0x130] sm:$0xff]
    %v1036 = vld [vmem:[#allocation5 + $0x138] sm:$0xff]
    %v1037 = vld [vmem:[#allocation5 + $0x140] sm:$0xff]
    %v1038 = vld [vmem:[#allocation5 + $0x148] sm:$0xff]
    %v1039 = vld [vmem:[#allocation5 + $0x150] sm:$0xff]
    %v1040 = vld [vmem:[#allocation5 + $0x158] sm:$0xff]
    %v1041 = vld [vmem:[#allocation5 + $0x160] sm:$0xff]
    %v1042 = vld [vmem:[#allocation5 + $0x168] sm:$0xff]
    %v1043 = vld [vmem:[#allocation5 + $0x170] sm:$0xff]
    %v1044 = vld [vmem:[#allocation5 + $0x178] sm:$0xff]
    %v1045 = vld [vmem:[#allocation5 + $0x180] sm:$0xff]
    %v1046 = vld [vmem:[#allocation5 + $0x188] sm:$0xff]
    %v1047 = vld [vmem:[#allocation5 + $0x190] sm:$0xff]
    %v1048 = vld [vmem:[#allocation5 + $0x198] sm:$0xff]
    %v1049 = vld [vmem:[#allocation5 + $0x1a0] sm:$0xff]
    %v1050 = vld [vmem:[#allocation5 + $0x1a8] sm:$0xff]
    %v1051 = vld [vmem:[#allocation5 + $0x1b0] sm:$0xff]
    %v1052 = vld [vmem:[#allocation5 + $0x1b8] sm:$0xff]
    %v1053 = vld [vmem:[#allocation5 + $0x1c0] sm:$0xff]
    %v1054 = vld [vmem:[#allocation5 + $0x1c8] sm:$0xff]
    %v1055 = vld [vmem:[#allocation5 + $0x1d0] sm:$0xff]
    %v1056 = vld [vmem:[#allocation5 + $0x1d8] sm:$0xff]
    %v1057 = vld [vmem:[#allocation5 + $0x1e0] sm:$0xff]
    %v1058 = vld [vmem:[#allocation5 + $0x1e8] sm:$0xff]
    %v1059 = vld [vmem:[#allocation5 + $0x1f0] sm:$0xff]
    %v1060 = vld [vmem:[#allocation5 + $0x1f8] sm:$0xff]
    %v1061 = vld [vmem:[#allocation5 + $0x200] sm:$0xff]
    %v1062 = vld [vmem:[#allocation5 + $0x208] sm:$0xff]
    %v1063 = vld [vmem:[#allocation5 + $0x210] sm:$0xff]
    %v1064 = vld [vmem:[#allocation5 + $0x218] sm:$0xff]
    %v1065 = vld [vmem:[#allocation5 + $0x220] sm:$0xff]
    %v1066 = vld [vmem:[#allocation5 + $0x228] sm:$0xff]
    %v1067 = vld [vmem:[#allocation5 + $0x230] sm:$0xff]
    %v1068 = vld [vmem:[#allocation5 + $0x238] sm:$0xff]
    %v1069 = vld [vmem:[#allocation5 + $0x240] sm:$0xff]
    %v1070 = vld [vmem:[#allocation5 + $0x248] sm:$0xff]
    %v1071 = vld [vmem:[#allocation5 + $0x250] sm:$0xff]
    %v1072 = vld [vmem:[#allocation5 + $0x258] sm:$0xff]
    %v1073 = vld [vmem:[#allocation5 + $0x260] sm:$0xff]
    %v1074 = vld [vmem:[#allocation5 + $0x268] sm:$0xff]
    %v1075 = vld [vmem:[#allocation5 + $0x270] sm:$0xff]
    %v1076 = vld [vmem:[#allocation5 + $0x278] sm:$0xff]
    %v1077 = vld [vmem:[#allocation5 + $0x280] sm:$0xff]
    %v1078 = vld [vmem:[#allocation5 + $0x288] sm:$0xff]
    %v1079 = vld [vmem:[#allocation5 + $0x290] sm:$0xff]
    %v1080 = vld [vmem:[#allocation5 + $0x298] sm:$0xff]
    %v1081 = vld [vmem:[#allocation5 + $0x2a0] sm:$0xff]
    %v1082 = vld [vmem:[#allocation5 + $0x2a8] sm:$0xff]
    %v1083 = vld [vmem:[#allocation5 + $0x2b0] sm:$0xff]
    %v1084 = vld [vmem:[#allocation5 + $0x2b8] sm:$0xff]
    %v1085 = vld [vmem:[#allocation5 + $0x2c0] sm:$0xff]
    %v1086 = vld [vmem:[#allocation5 + $0x2c8] sm:$0xff]
    %v1087 = vld [vmem:[#allocation5 + $0x2d0] sm:$0xff]
    %v1088 = vld [vmem:[#allocation5 + $0x2d8] sm:$0xff]
    %v1089 = vld [vmem:[#allocation5 + $0x2e0] sm:$0xff]
    %v1090 = vld [vmem:[#allocation5 + $0x2e8] sm:$0xff]
    %v1091 = vld [vmem:[#allocation5 + $0x2f0] sm:$0xff]
    %v1092 = vld [vmem:[#allocation5 + $0x2f8] sm:$0xff]
    %v1093 = vld [vmem:[#allocation5 + $0x300] sm:$0xff]
    %v1094 = vld [vmem:[#allocation5 + $0x308] sm:$0xff]
    %v1095 = vld [vmem:[#allocation5 + $0x310] sm:$0xff]
    %v1096 = vld [vmem:[#allocation5 + $0x318] sm:$0xff]
    %v1097 = vld [vmem:[#allocation5 + $0x320] sm:$0xff]
    %v1098 = vld [vmem:[#allocation5 + $0x328] sm:$0xff]
    %v1099 = vld [vmem:[#allocation5 + $0x330] sm:$0xff]
    %v1100 = vld [vmem:[#allocation5 + $0x338] sm:$0xff]
    %v1101 = vld [vmem:[#allocation5 + $0x340] sm:$0xff]
    %v1102 = vld [vmem:[#allocation5 + $0x348] sm:$0xff]
    %v1103 = vld [vmem:[#allocation5 + $0x350] sm:$0xff]
    %v1104 = vld [vmem:[#allocation5 + $0x358] sm:$0xff]
    %v1105 = vld [vmem:[#allocation5 + $0x360] sm:$0xff]
    %v1106 = vld [vmem:[#allocation5 + $0x368] sm:$0xff]
    %v1107 = vld [vmem:[#allocation5 + $0x370] sm:$0xff]
    %v1108 = vld [vmem:[#allocation5 + $0x378] sm:$0xff]
    %v1109 = vld [vmem:[#allocation5 + $0x380] sm:$0xff]
    %v1110 = vld [vmem:[#allocation5 + $0x388] sm:$0xff]
    %v1111 = vld [vmem:[#allocation5 + $0x390] sm:$0xff]
    %v1112 = vld [vmem:[#allocation5 + $0x398] sm:$0xff]
    %v1113 = vld [vmem:[#allocation5 + $0x3a0] sm:$0xff]
    %v1114 = vld [vmem:[#allocation5 + $0x3a8] sm:$0xff]
    %v1115 = vld [vmem:[#allocation5 + $0x3b0] sm:$0xff]
    %v1116 = vld [vmem:[#allocation5 + $0x3b8] sm:$0xff]
    %v1117 = vld [vmem:[#allocation5 + $0x3c0] sm:$0xff]
    %v1118 = vld [vmem:[#allocation5 + $0x3c8] sm:$0xff]
    %v1119 = vld [vmem:[#allocation5 + $0x3d0] sm:$0xff]
    %v1120 = vld [vmem:[#allocation5 + $0x3d8] sm:$0xff]
    %v1121 = vld [vmem:[#allocation5 + $0x3e0] sm:$0xff]
    %v1122 = vld [vmem:[#allocation5 + $0x3e8] sm:$0xff]
    %v1123 = vld [vmem:[#allocation5 + $0x3f0] sm:$0xff]
    %v1124 = vld [vmem:[#allocation5 + $0x3f8] sm:$0xff]
    %v1125 = vld [vmem:[#allocation5 + $0x400] sm:$0xff]
    %v1126 = vld [vmem:[#allocation5 + $0x408] sm:$0xff]
    %v1127 = vld [vmem:[#allocation5 + $0x410] sm:$0xff]
    %v1128 = vld [vmem:[#allocation5 + $0x418] sm:$0xff]
    %v1129 = vld [vmem:[#allocation5 + $0x420] sm:$0xff]
    %v1130 = vld [vmem:[#allocation5 + $0x428] sm:$0xff]
    %v1131 = vld [vmem:[#allocation5 + $0x430] sm:$0xff]
    %v1132 = vld [vmem:[#allocation5 + $0x438] sm:$0xff]
    %v1133 = vld [vmem:[#allocation5 + $0x440] sm:$0xff]
    %v1134 = vld [vmem:[#allocation5 + $0x448] sm:$0xff]
    %v1135 = vld [vmem:[#allocation5 + $0x450] sm:$0xff]
    %v1136 = vld [vmem:[#allocation5 + $0x458] sm:$0xff]
    %v1137 = vld [vmem:[#allocation5 + $0x460] sm:$0xff]
    %v1138 = vld [vmem:[#allocation5 + $0x468] sm:$0xff]
    %v1139 = vld [vmem:[#allocation5 + $0x470] sm:$0xff]
    %v1140 = vld [vmem:[#allocation5 + $0x478] sm:$0xff]
    %1141 = vmatprep.subr.mxu0 0.0
    %1142 = vmatpush1.msra.mxu0 %v997
    %1143 = vmatprep.subr.mxu0 0.0
    %1144 = vmatpush1.msra.mxu0 %v998
    %1145 = vmatprep.subr.mxu0 0.0
    %1146 = vmatpush1.msra.mxu0 %v999
    %1147 = vmatprep.subr.mxu0 0.0
    %1148 = vmatpush1.msra.mxu0 %v1000
    %1149 = vmatprep.subr.mxu0 0.0
    %1150 = vmatpush1.msra.mxu0 %v1001
    %1151 = vmatprep.subr.mxu0 0.0
    %1152 = vmatpush1.msra.mxu0 %v1002
    %1153 = vmatprep.subr.mxu0 0.0
    %1154 = vmatpush1.msra.mxu0 %v1003
    %1155 = vmatprep.subr.mxu0 0.0
    %1156 = vmatpush1.msra.mxu0 %v1004
    %1157 = vmatprep.subr.mxu0 0.0
    %1158 = vmatpush1.msra.mxu0 %v1005
    %1159 = vmatprep.subr.mxu0 0.0
    %1160 = vmatpush1.msra.mxu0 %v1006
    %1161 = vmatprep.subr.mxu0 0.0
    %1162 = vmatpush1.msra.mxu0 %v1007
    %1163 = vmatprep.subr.mxu0 0.0
    %1164 = vmatpush1.msra.mxu0 %v1008
    %1165 = vmatprep.subr.mxu0 0.0
    %1166 = vmatpush1.msra.mxu0 %v1009
    %1167 = vmatprep.subr.mxu0 0.0
    %1168 = vmatpush1.msra.mxu0 %v1010
    %1169 = vmatprep.subr.mxu0 0.0
    %1170 = vmatpush1.msra.mxu0 %v1011
    %1171 = vmatprep.subr.mxu0 0.0
    %1172 = vmatpush1.msra.mxu0 %v1012
    %1173 = vmatprep.subr.mxu0 0.0
    %1174 = vmatpush1.msra.mxu0 %v1013
    %1175 = vmatprep.subr.mxu0 0.0
    %1176 = vmatpush1.msra.mxu0 %v1014
    %1177 = vmatprep.subr.mxu0 0.0
    %1178 = vmatpush1.msra.mxu0 %v1015
    %1179 = vmatprep.subr.mxu0 0.0
    %1180 = vmatpush1.msra.mxu0 %v1016
    %1181 = vmatprep.subr.mxu0 0.0
    %1182 = vmatpush1.msra.mxu0 %v1017
    %1183 = vmatprep.subr.mxu0 0.0
    %1184 = vmatpush1.msra.mxu0 %v1018
    %1185 = vmatprep.subr.mxu0 0.0
    %1186 = vmatpush1.msra.mxu0 %v1019
    %1187 = vmatprep.subr.mxu0 0.0
    %1188 = vmatpush1.msra.mxu0 %v1020
    %1189 = vmatprep.subr.mxu0 0.0
    %1190 = vmatpush1.msra.mxu0 %v1021
    %1191 = vmatprep.subr.mxu0 0.0
    %1192 = vmatpush1.msra.mxu0 %v1022
    %1193 = vmatprep.subr.mxu0 0.0
    %1194 = vmatpush1.msra.mxu0 %v1023
    %1195 = vmatprep.subr.mxu0 0.0
    %1196 = vmatpush1.msra.mxu0 %v1024
    %1197 = vmatprep.subr.mxu0 0.0
    %1198 = vmatpush1.msra.mxu0 %v1025
    %1199 = vmatprep.subr.mxu0 0.0
    %1200 = vmatpush1.msra.mxu0 %v1026
    %1201 = vmatprep.subr.mxu0 0.0
    %1202 = vmatpush1.msra.mxu0 %v1027
    %1203 = vmatprep.subr.mxu0 0.0
    %1204 = vmatpush1.msra.mxu0 %v1028
    %1205 = vmatprep.mubr.f32.mxu0 %v961
    %1206 = vmatmul.mubr.f32.gmra.mrb[0].mxu0 %v786
    %v1207 = vpop.f32.mrb[0].mxu0
    %v1208 = vadd.f32 0.0, %v1207
    %v1209 = vpop.f32.mrb[0].mxu0
    %1210 = vdwg.mxu0
    %1211 = vmatprep.subr.mxu0 0.0
    %1212 = vmatpush1.msra.mxu0 %v1029
    %1213 = vmatprep.subr.mxu0 0.0
    %1214 = vmatpush1.msra.mxu0 %v1030
    %1215 = vmatprep.subr.mxu0 0.0
    %1216 = vmatpush1.msra.mxu0 %v1031
    %1217 = vmatprep.subr.mxu0 0.0
    %1218 = vmatpush1.msra.mxu0 %v1032
    %1219 = vmatprep.subr.mxu0 0.0
    %1220 = vmatpush1.msra.mxu0 %v1033
    %1221 = vmatprep.subr.mxu0 0.0
    %1222 = vmatpush1.msra.mxu0 %v1034
    %1223 = vmatprep.subr.mxu0 0.0
    %1224 = vmatpush1.msra.mxu0 %v1035
    %1225 = vmatprep.subr.mxu0 0.0
    %1226 = vmatpush1.msra.mxu0 %v1036
    %1227 = vmatprep.subr.mxu0 0.0
    %1228 = vmatpush1.msra.mxu0 %v1037
    %1229 = vmatprep.subr.mxu0 0.0
    %1230 = vmatpush1.msra.mxu0 %v1038
    %1231 = vmatprep.subr.mxu0 0.0
    %1232 = vmatpush1.msra.mxu0 %v1039
    %1233 = vmatprep.subr.mxu0 0.0
    %1234 = vmatpush1.msra.mxu0 %v1040
    %1235 = vmatprep.subr.mxu0 0.0
    %1236 = vmatpush1.msra.mxu0 %v1041
    %1237 = vmatprep.subr.mxu0 0.0
    %1238 = vmatpush1.msra.mxu0 %v1042
    %1239 = vmatprep.subr.mxu0 0.0
    %1240 = vmatpush1.msra.mxu0 %v1043
    %1241 = vmatprep.subr.mxu0 0.0
    %1242 = vmatpush1.msra.mxu0 %v1044
    %1243 = vmatprep.subr.mxu0 0.0
    %1244 = vmatpush1.msra.mxu0 %v1045
    %1245 = vmatprep.subr.mxu0 0.0
    %1246 = vmatpush1.msra.mxu0 %v1046
    %1247 = vmatprep.subr.mxu0 0.0
    %1248 = vmatpush1.msra.mxu0 %v1047
    %1249 = vmatprep.subr.mxu0 0.0
    %1250 = vmatpush1.msra.mxu0 %v1048
    %1251 = vmatprep.subr.mxu0 0.0
    %1252 = vmatpush1.msra.mxu0 %v1049
    %1253 = vmatprep.subr.mxu0 0.0
    %1254 = vmatpush1.msra.mxu0 %v1050
    %1255 = vmatprep.subr.mxu0 0.0
    %1256 = vmatpush1.msra.mxu0 %v1051
    %1257 = vmatprep.subr.mxu0 0.0
    %1258 = vmatpush1.msra.mxu0 %v1052
    %1259 = vmatprep.subr.mxu0 0.0
    %1260 = vmatpush1.msra.mxu0 %v1053
    %1261 = vmatprep.subr.mxu0 0.0
    %1262 = vmatpush1.msra.mxu0 %v1054
    %1263 = vmatprep.subr.mxu0 0.0
    %1264 = vmatpush1.msra.mxu0 %v1055
    %1265 = vmatprep.subr.mxu0 0.0
    %1266 = vmatpush1.msra.mxu0 %v1056
    %1267 = vmatprep.subr.mxu0 0.0
    %1268 = vmatpush1.msra.mxu0 %v1057
    %1269 = vmatprep.subr.mxu0 0.0
    %1270 = vmatpush1.msra.mxu0 %v1058
    %1271 = vmatprep.subr.mxu0 0.0
    %1272 = vmatpush1.msra.mxu0 %v1059
    %1273 = vmatprep.subr.mxu0 0.0
    %1274 = vmatpush1.msra.mxu0 %v1060
    %1275 = vmatprep.mubr.f32.mxu0 %v971
    %1276 = vmatmul.mubr.f32.gmra.mrb[0].mxu0 %v966
    %v1277 = vpop.f32.mrb[0].mxu0
    %v1278 = vadd.f32 %v1208, %v1277
    %v1279 = vpop.f32.mrb[0].mxu0
    %1280 = vdwg.mxu0
    %1281 = vmatprep.subr.mxu0 0.0
    %1282 = vmatpush1.msra.mxu0 %v1061
    %1283 = vmatprep.subr.mxu0 0.0
    %1284 = vmatpush1.msra.mxu0 %v1062
    %1285 = vmatprep.subr.mxu0 0.0
    %1286 = vmatpush1.msra.mxu0 %v1063
    %1287 = vmatprep.subr.mxu0 0.0
    %1288 = vmatpush1.msra.mxu0 %v1064
    %1289 = vmatprep.subr.mxu0 0.0
    %1290 = vmatpush1.msra.mxu0 %v1065
    %1291 = vmatprep.subr.mxu0 0.0
    %1292 = vmatpush1.msra.mxu0 %v1066
    %1293 = vmatprep.subr.mxu0 0.0
    %1294 = vmatpush1.msra.mxu0 %v1067
    %1295 = vmatprep.subr.mxu0 0.0
    %1296 = vmatpush1.msra.mxu0 %v1068
    %1297 = vmatprep.subr.mxu0 0.0
    %1298 = vmatpush1.msra.mxu0 %v1069
    %1299 = vmatprep.subr.mxu0 0.0
    %1300 = vmatpush1.msra.mxu0 %v1070
    %1301 = vmatprep.subr.mxu0 0.0
    %1302 = vmatpush1.msra.mxu0 %v1071
    %1303 = vmatprep.subr.mxu0 0.0
    %1304 = vmatpush1.msra.mxu0 %v1072
    %1305 = vmatprep.subr.mxu0 0.0
    %1306 = vmatpush1.msra.mxu0 %v1073
    %1307 = vmatprep.subr.mxu0 0.0
    %1308 = vmatpush1.msra.mxu0 %v1074
    %1309 = vmatprep.subr.mxu0 0.0
    %1310 = vmatpush1.msra.mxu0 %v1075
    %1311 = vmatprep.subr.mxu0 0.0
    %1312 = vmatpush1.msra.mxu0 %v1076
    %1313 = vmatprep.subr.mxu0 0.0
    %1314 = vmatpush1.msra.mxu0 %v1077
    %1315 = vmatprep.subr.mxu0 0.0
    %1316 = vmatpush1.msra.mxu0 %v1078
    %1317 = vmatprep.subr.mxu0 0.0
    %1318 = vmatpush1.msra.mxu0 %v1079
    %1319 = vmatprep.subr.mxu0 0.0
    %1320 = vmatpush1.msra.mxu0 %v1080
    %1321 = vmatprep.subr.mxu0 0.0
    %1322 = vmatpush1.msra.mxu0 %v1081
    %1323 = vmatprep.subr.mxu0 0.0
    %1324 = vmatpush1.msra.mxu0 %v1082
    %1325 = vmatprep.subr.mxu0 0.0
    %1326 = vmatpush1.msra.mxu0 %v1083
    %1327 = vmatprep.subr.mxu0 0.0
    %1328 = vmatpush1.msra.mxu0 %v1084
    %1329 = vmatprep.subr.mxu0 0.0
    %1330 = vmatpush1.msra.mxu0 %v1085
    %1331 = vmatprep.subr.mxu0 0.0
    %1332 = vmatpush1.msra.mxu0 %v1086
    %1333 = vmatprep.subr.mxu0 0.0
    %1334 = vmatpush1.msra.mxu0 %v1087
    %1335 = vmatprep.subr.mxu0 0.0
    %1336 = vmatpush1.msra.mxu0 %v1088
    %1337 = vmatprep.subr.mxu0 0.0
    %1338 = vmatpush1.msra.mxu0 %v1089
    %1339 = vmatprep.subr.mxu0 0.0
    %1340 = vmatpush1.msra.mxu0 %v1090
    %1341 = vmatprep.subr.mxu0 0.0
    %1342 = vmatpush1.msra.mxu0 %v1091
    %1343 = vmatprep.subr.mxu0 0.0
    %1344 = vmatpush1.msra.mxu0 %v1092
    %1345 = vmatprep.mubr.f32.mxu0 %v981
    %1346 = vmatmul.mubr.f32.gmra.mrb[0].mxu0 %v976
    %v1347 = vpop.f32.mrb[0].mxu0
    %v1348 = vadd.f32 %v1278, %v1347
    %v1349 = vpop.f32.mrb[0].mxu0
    %1350 = vdwg.mxu0
    %1351 = vmatprep.subr.mxu0 0.0
    %1352 = vmatpush1.msra.mxu0 %v1093
    %1353 = vmatprep.subr.mxu0 0.0
    %1354 = vmatpush1.msra.mxu0 %v1094
    %1355 = vmatprep.subr.mxu0 0.0
    %1356 = vmatpush1.msra.mxu0 %v1095
    %1357 = vmatprep.subr.mxu0 0.0
    %1358 = vmatpush1.msra.mxu0 %v1096
    %1359 = vmatprep.subr.mxu0 0.0
    %1360 = vmatpush1.msra.mxu0 %v1097
    %1361 = vmatprep.subr.mxu0 0.0
    %1362 = vmatpush1.msra.mxu0 %v1098
    %1363 = vmatprep.subr.mxu0 0.0
    %1364 = vmatpush1.msra.mxu0 %v1099
    %1365 = vmatprep.subr.mxu0 0.0
    %1366 = vmatpush1.msra.mxu0 %v1100
    %1367 = vmatprep.subr.mxu0 0.0
    %1368 = vmatpush1.msra.mxu0 %v1101
    %1369 = vmatprep.subr.mxu0 0.0
    %1370 = vmatpush1.msra.mxu0 %v1102
    %1371 = vmatprep.subr.mxu0 0.0
    %1372 = vmatpush1.msra.mxu0 %v1103
    %1373 = vmatprep.subr.mxu0 0.0
    %1374 = vmatpush1.msra.mxu0 %v1104
    %1375 = vmatprep.subr.mxu0 0.0
    %1376 = vmatpush1.msra.mxu0 %v1105
    %1377 = vmatprep.subr.mxu0 0.0
    %1378 = vmatpush1.msra.mxu0 %v1106
    %1379 = vmatprep.subr.mxu0 0.0
    %1380 = vmatpush1.msra.mxu0 %v1107
    %1381 = vmatprep.subr.mxu0 0.0
    %1382 = vmatpush1.msra.mxu0 %v1108
    %1383 = vmatprep.subr.mxu0 0.0
    %1384 = vmatpush1.msra.mxu0 %v1109
    %1385 = vmatprep.subr.mxu0 0.0
    %1386 = vmatpush1.msra.mxu0 %v1110
    %1387 = vmatprep.subr.mxu0 0.0
    %1388 = vmatpush1.msra.mxu0 %v1111
    %1389 = vmatprep.subr.mxu0 0.0
    %1390 = vmatpush1.msra.mxu0 %v1112
    %1391 = vmatprep.subr.mxu0 0.0
    %1392 = vmatpush1.msra.mxu0 %v1113
    %1393 = vmatprep.subr.mxu0 0.0
    %1394 = vmatpush1.msra.mxu0 %v1114
    %1395 = vmatprep.subr.mxu0 0.0
    %1396 = vmatpush1.msra.mxu0 %v1115
    %1397 = vmatprep.subr.mxu0 0.0
    %1398 = vmatpush1.msra.mxu0 %v1116
    %1399 = vmatprep.subr.mxu0 0.0
    %1400 = vmatpush1.msra.mxu0 %v1117
    %1401 = vmatprep.subr.mxu0 0.0
    %1402 = vmatpush1.msra.mxu0 %v1118
    %1403 = vmatprep.subr.mxu0 0.0
    %1404 = vmatpush1.msra.mxu0 %v1119
    %1405 = vmatprep.subr.mxu0 0.0
    %1406 = vmatpush1.msra.mxu0 %v1120
    %1407 = vmatprep.subr.mxu0 0.0
    %1408 = vmatpush1.msra.mxu0 %v1121
    %1409 = vmatprep.subr.mxu0 0.0
    %1410 = vmatpush1.msra.mxu0 %v1122
    %1411 = vmatprep.subr.mxu0 0.0
    %1412 = vmatpush1.msra.mxu0 %v1123
    %1413 = vmatprep.subr.mxu0 0.0
    %1414 = vmatpush1.msra.mxu0 %v1124
    %1415 = vmatprep.mubr.f32.mxu0 %v991
    %1416 = vmatmul.mubr.f32.gmra.mrb[0].mxu0 %v986
    %v1417 = vpop.f32.mrb[0].mxu0
    %v1418 = vadd.f32 %v1348, %v1417
    %v1419 = vpop.f32.mrb[0].mxu0
    %1420 = vdwg.mxu0
    %1421 = vmatprep.subr.mxu0 0.0
    %1422 = vmatpush1.msra.mxu0 %v1125
    %1423 = vmatprep.subr.mxu0 0.0
    %1424 = vmatpush1.msra.mxu0 %v1126
    %1425 = vmatprep.subr.mxu0 0.0
    %1426 = vmatpush1.msra.mxu0 %v1127
    %1427 = vmatprep.subr.mxu0 0.0
    %1428 = vmatpush1.msra.mxu0 %v1128
    %1429 = vmatprep.subr.mxu0 0.0
    %1430 = vmatpush1.msra.mxu0 %v1129
    %1431 = vmatprep.subr.mxu0 0.0
    %1432 = vmatpush1.msra.mxu0 %v1130
    %1433 = vmatprep.subr.mxu0 0.0
    %1434 = vmatpush1.msra.mxu0 %v1131
    %1435 = vmatprep.subr.mxu0 0.0
    %1436 = vmatpush1.msra.mxu0 %v1132
    %1437 = vmatprep.subr.mxu0 0.0
    %1438 = vmatpush1.msra.mxu0 %v1133
    %1439 = vmatprep.subr.mxu0 0.0
    %1440 = vmatpush1.msra.mxu0 %v1134
    %1441 = vmatprep.subr.mxu0 0.0
    %1442 = vmatpush1.msra.mxu0 %v1135
    %1443 = vmatprep.subr.mxu0 0.0
    %1444 = vmatpush1.msra.mxu0 %v1136
    %1445 = vmatprep.subr.mxu0 0.0
    %1446 = vmatpush1.msra.mxu0 %v1137
    %1447 = vmatprep.subr.mxu0 0.0
    %1448 = vmatpush1.msra.mxu0 %v1138
    %1449 = vmatprep.subr.mxu0 0.0
    %1450 = vmatpush1.msra.mxu0 %v1139
    %1451 = vmatprep.subr.mxu0 0.0
    %1452 = vmatpush1.msra.mxu0 %v1140
    %1453 = vmatprep.subr.mxu0 0.0
    %1454 = vmatpush1.msra.mxu0 0.0
    %1455 = vmatprep.subr.mxu0 0.0
    %1456 = vmatpush1.msra.mxu0 0.0
    %1457 = vmatprep.subr.mxu0 0.0
    %1458 = vmatpush1.msra.mxu0 0.0
    %1459 = vmatprep.subr.mxu0 0.0
    %1460 = vmatpush1.msra.mxu0 0.0
    %1461 = vmatprep.subr.mxu0 0.0
    %1462 = vmatpush1.msra.mxu0 0.0
    %1463 = vmatprep.subr.mxu0 0.0
    %1464 = vmatpush1.msra.mxu0 0.0
    %1465 = vmatprep.subr.mxu0 0.0
    %1466 = vmatpush1.msra.mxu0 0.0
    %1467 = vmatprep.subr.mxu0 0.0
    %1468 = vmatpush1.msra.mxu0 0.0
    %1469 = vmatprep.subr.mxu0 0.0
    %1470 = vmatpush1.msra.mxu0 0.0
    %1471 = vmatprep.subr.mxu0 0.0
    %1472 = vmatpush1.msra.mxu0 0.0
    %1473 = vmatprep.subr.mxu0 0.0
    %1474 = vmatpush1.msra.mxu0 0.0
    %1475 = vmatprep.subr.mxu0 0.0
    %1476 = vmatpush1.msra.mxu0 0.0
    %1477 = vmatprep.subr.mxu0 0.0
    %1478 = vmatpush1.msra.mxu0 0.0
    %1479 = vmatprep.subr.mxu0 0.0
    %1480 = vmatpush1.msra.mxu0 0.0
    %1481 = vmatprep.subr.mxu0 0.0
    %1482 = vmatpush1.msra.mxu0 0.0
    %1483 = vmatprep.subr.mxu0 0.0
    %1484 = vmatpush1.msra.mxu0 0.0
    %1485 = vmatprep.mubr.f32.mxu0 0.0
    %1486 = vmatmul.mubr.f32.gmra.mrb[0].mxu0 %v996
    %v1487 = vpop.f32.mrb[0].mxu0
    %v1488 = vadd.f32 %v1418, %v1487
    %v1489 = vpop.f32.mrb[0].mxu0
    %1490 = vdwg.mxu0
    %v1491 = vxor.u32 %v1488, 2147483648
    %v1492 = vmul.f32 %v1491, 1.442695
    %v1493 = vpow.pop %v1492
    %v1494 = vadd.f32 %v1493, 1.0
    %v1495 = vrcp.pop %v1494
    %v1496 = vmul.f32 1.0, %v1495
    %v1497 = vmul.f32 %v1488, %v1496
    %vm1498 = vcmp.ge.f32.partialorder %v1488, -2.2
    %vm1499 = vcmp.lt.f32.partialorder %v1488, -1.8
    %vm1500 = vmand %vm1498, %vm1499
    %v1501 = vsel %vm1500, 1, 0
    %v1502 = vcvt.s32.f32 %v1501
    %vm1503 = vcmp.ge.f32.partialorder %v1488, -1.8
    %vm1504 = vcmp.lt.f32.partialorder %v1488, -1.4
    %vm1505 = vmand %vm1503, %vm1504
    %v1506 = vsel %vm1505, 1, 0
    %v1507 = vcvt.s32.f32 %v1506
    %vm1508 = vcmp.ge.f32.partialorder %v1488, -1.4
    %vm1509 = vcmp.lt.f32.partialorder %v1488, -1.0
    %vm1510 = vmand %vm1508, %vm1509
    %v1511 = vsel %vm1510, 1, 0
    %v1512 = vcvt.s32.f32 %v1511
    %vm1513 = vcmp.ge.f32.partialorder %v1488, -1.0
    %vm1514 = vcmp.lt.f32.partialorder %v1488, -0.6
    %vm1515 = vmand %vm1513, %vm1514
    %v1516 = vsel %vm1515, 1, 0
    %v1517 = vcvt.s32.f32 %v1516
    %vm1518 = vcmp.ge.f32.partialorder %v1488, -0.6
    %vm1519 = vcmp.lt.f32.partialorder %v1488, -0.19999999
    %vm1520 = vmand %vm1518, %vm1519
    %v1521 = vsel %vm1520, 1, 0
    %v1522 = vcvt.s32.f32 %v1521
    %vm1523 = vcmp.ge.f32.partialorder %v1488, -0.19999999
    %vm1524 = vcmp.lt.f32.partialorder %v1488, 0.20000005
    %vm1525 = vmand %vm1523, %vm1524
    %v1526 = vsel %vm1525, 1, 0
    %v1527 = vcvt.s32.f32 %v1526
    %vm1528 = vcmp.ge.f32.partialorder %v1488, 0.20000005
    %vm1529 = vcmp.lt.f32.partialorder %v1488, 0.6
    %vm1530 = vmand %vm1528, %vm1529
    %v1531 = vsel %vm1530, 1, 0
    %v1532 = vcvt.s32.f32 %v1531
    %vm1533 = vcmp.ge.f32.partialorder %v1488, 0.6
    %vm1534 = vcmp.lt.f32.partialorder %v1488, 1.0
    %vm1535 = vmand %vm1533, %vm1534
    %v1536 = vsel %vm1535, 1, 0
    %v1537 = vcvt.s32.f32 %v1536
    %vm1538 = vcmp.ge.f32.partialorder %v1488, 1.0
    %vm1539 = vcmp.lt.f32.partialorder %v1488, 1.4000001
    %vm1540 = vmand %vm1538, %vm1539
    %v1541 = vsel %vm1540, 1, 0
    %v1542 = vcvt.s32.f32 %v1541
    %vm1543 = vcmp.ge.f32.partialorder %v1488, 1.4000001
    %vm1544 = vcmp.lt.f32.partialorder %v1488, 1.8
    %vm1545 = vmand %vm1543, %vm1544
    %v1546 = vsel %vm1545, 1, 0
    %v1547 = vcvt.s32.f32 %v1546
    %vm1548 = vcmp.ge.f32.partialorder %v1488, 1.8
    %vm1549 = vcmp.lt.f32.partialorder %v1488, 2.2
    %vm1550 = vmand %vm1548, %vm1549
    %v1551 = vsel %vm1550, 1, 0
    %v1552 = vcvt.s32.f32 %v1551
    %v1553 = vsub.f32 %v1488, -2.2
    %v1554 = vmul.f32 %v1553, %v123
    %v1555 = vmul.f32 %v1554, %v1502
    %v1556 = vsub.f32 -1.4, %v1488
    %v1557 = vmul.f32 %v1556, %v127
    %v1558 = vmul.f32 %v1557, %v1507
    %v1559 = vadd.f32 %v1555, %v1558
    %v1560 = vsub.f32 %v1488, -1.8
    %v1561 = vmul.f32 %v1560, %v127
    %v1562 = vmul.f32 %v1561, %v1507
    %v1563 = vsub.f32 -1.0, %v1488
    %v1564 = vmul.f32 %v1563, %v127
    %v1565 = vmul.f32 %v1564, %v1512
    %v1566 = vadd.f32 %v1562, %v1565
    %v1567 = vsub.f32 %v1488, -1.4
    %v1568 = vmul.f32 %v1567, %v127
    %v1569 = vmul.f32 %v1568, %v1512
    %v1570 = vsub.f32 -0.6, %v1488
    %v1571 = vmul.f32 %v1570, %v127
    %v1572 = vmul.f32 %v1571, %v1517
    %v1573 = vadd.f32 %v1569, %v1572
    %v1574 = vsub.f32 %v1488, -1.0
    %v1575 = vmul.f32 %v1574, %v127
    %v1576 = vmul.f32 %v1575, %v1517
    %v1577 = vsub.f32 -0.19999999, %v1488
    %v1578 = vmul.f32 %v1577, %v149
    %v1579 = vmul.f32 %v1578, %v1522
    %v1580 = vadd.f32 %v1576, %v1579
    %v1581 = vsub.f32 %v1488, -0.6
    %v1582 = vmul.f32 %v1581, %v149
    %v1583 = vmul.f32 %v1582, %v1522
    %v1584 = vsub.f32 0.20000005, %v1488
    %v1585 = vmul.f32 %v1584, %v149
    %v1586 = vmul.f32 %v1585, %v1527
    %v1587 = vadd.f32 %v1583, %v1586
    %v1588 = vsub.f32 %v1488, -0.19999999
    %v1589 = vmul.f32 %v1588, %v149
    %v1590 = vmul.f32 %v1589, %v1527
    %v1591 = vsub.f32 0.6, %v1488
    %v1592 = vmul.f32 %v1591, %v127
    %v1593 = vmul.f32 %v1592, %v1532
    %v1594 = vadd.f32 %v1590, %v1593
    %v1595 = vsub.f32 %v1488, 0.20000005
    %v1596 = vmul.f32 %v1595, %v127
    %v1597 = vmul.f32 %v1596, %v1532
    %v1598 = vsub.f32 1.0, %v1488
    %v1599 = vmul.f32 %v1598, %v127
    %v1600 = vmul.f32 %v1599, %v1537
    %v1601 = vadd.f32 %v1597, %v1600
    %v1602 = vsub.f32 %v1488, 0.6
    %v1603 = vmul.f32 %v1602, %v127
    %v1604 = vmul.f32 %v1603, %v1537
    %v1605 = vsub.f32 1.4000001, %v1488
    %v1606 = vmul.f32 %v1605, %v123
    %v1607 = vmul.f32 %v1606, %v1542
    %v1608 = vadd.f32 %v1604, %v1607
    %v1609 = vsub.f32 %v1488, 1.0
    %v1610 = vmul.f32 %v1609, %v123
    %v1611 = vmul.f32 %v1610, %v1542
    %v1612 = vsub.f32 1.8, %v1488
    %v1613 = vmul.f32 %v1612, %v185
    %v1614 = vmul.f32 %v1613, %v1547
    %v1615 = vadd.f32 %v1611, %v1614
    %v1616 = vsub.f32 %v1488, 1.4000001
    %v1617 = vmul.f32 %v1616, %v185
    %v1618 = vmul.f32 %v1617, %v1547
    %v1619 = vsub.f32 2.2, %v1488
    %v1620 = vmul.f32 %v1619, %v123
    %v1621 = vmul.f32 %v1620, %v1552
    %v1622 = vadd.f32 %v1618, %v1621
    %v1623 = vmul.f32 %v1553, %v196
    %v1624 = vmul.f32 %v1623, %v1559
    %v1625 = vmul.f32 %v1563, %v199
    %v1626 = vmul.f32 %v1625, %v1566
    %v1627 = vadd.f32 %v1624, %v1626
    %v1628 = vmul.f32 %v1560, %v199
    %v1629 = vmul.f32 %v1628, %v1566
    %v1630 = vmul.f32 %v1570, %v199
    %v1631 = vmul.f32 %v1630, %v1573
    %v1632 = vadd.f32 %v1629, %v1631
    %v1633 = vmul.f32 %v1567, %v199
    %v1634 = vmul.f32 %v1633, %v1573
    %v1635 = vmul.f32 %v1577, %v210
    %v1636 = vmul.f32 %v1635, %v1580
    %v1637 = vadd.f32 %v1634, %v1636
    %v1638 = vmul.f32 %v1574, %v210
    %v1639 = vmul.f32 %v1638, %v1580
    %v1640 = vmul.f32 %v1584, %v196
    %v1641 = vmul.f32 %v1640, %v1587
    %v1642 = vadd.f32 %v1639, %v1641
    %v1643 = vmul.f32 %v1581, %v196
    %v1644 = vmul.f32 %v1643, %v1587
    %v1645 = vmul.f32 %v1591, %v210
    %v1646 = vmul.f32 %v1645, %v1594
    %v1647 = vadd.f32 %v1644, %v1646
    %v1648 = vmul.f32 %v1588, %v210
    %v1649 = vmul.f32 %v1648, %v1594
    %v1650 = vmul.f32 %v1598, %v199
    %v1651 = vmul.f32 %v1650, %v1601
    %v1652 = vadd.f32 %v1649, %v1651
    %v1653 = vmul.f32 %v1595, %v199
    %v1654 = vmul.f32 %v1653, %v1601
    %v1655 = vmul.f32 %v1605, %v196
    %v1656 = vmul.f32 %v1655, %v1608
    %v1657 = vadd.f32 %v1654, %v1656
    %v1658 = vmul.f32 %v1602, %v196
    %v1659 = vmul.f32 %v1658, %v1608
    %v1660 = vmul.f32 %v1612, %v199
    %v1661 = vmul.f32 %v1660, %v1615
    %v1662 = vadd.f32 %v1659, %v1661
    %v1663 = vmul.f32 %v1609, %v199
    %v1664 = vmul.f32 %v1663, %v1615
    %v1665 = vmul.f32 %v1619, %v199
    %v1666 = vmul.f32 %v1665, %v1622
    %v1667 = vadd.f32 %v1664, %v1666
    %v1668 = vmul.f32 %v1553, %v244
    %v1669 = vmul.f32 %v1668, %v1627
    %v1670 = vmul.f32 %v1570, %v247
    %v1671 = vmul.f32 %v1670, %v1632
    %v1672 = vadd.f32 %v1669, %v1671
    %v1673 = vmul.f32 %v1560, %v247
    %v1674 = vmul.f32 %v1673, %v1632
    %v1675 = vmul.f32 %v1577, %v244
    %v1676 = vmul.f32 %v1675, %v1637
    %v1677 = vadd.f32 %v1674, %v1676
    %v1678 = vmul.f32 %v1567, %v244
    %v1679 = vmul.f32 %v1678, %v1637
    %v1680 = vmul.f32 %v1584, %v244
    %v1681 = vmul.f32 %v1680, %v1642
    %v1682 = vadd.f32 %v1679, %v1681
    %v1683 = vmul.f32 %v1574, %v244
    %v1684 = vmul.f32 %v1683, %v1642
    %v1685 = vmul.f32 %v1591, %v244
    %v1686 = vmul.f32 %v1685, %v1647
    %v1687 = vadd.f32 %v1684, %v1686
    %v1688 = vmul.f32 %v1581, %v244
    %v1689 = vmul.f32 %v1688, %v1647
    %v1690 = vmul.f32 %v1598, %v244
    %v1691 = vmul.f32 %v1690, %v1652
    %v1692 = vadd.f32 %v1689, %v1691
    %v1693 = vmul.f32 %v1588, %v244
    %v1694 = vmul.f32 %v1693, %v1652
    %v1695 = vmul.f32 %v1605, %v244
    %v1696 = vmul.f32 %v1695, %v1657
    %v1697 = vadd.f32 %v1694, %v1696
    %v1698 = vmul.f32 %v1595, %v244
    %v1699 = vmul.f32 %v1698, %v1657
    %v1700 = vmul.f32 %v1612, %v247
    %v1701 = vmul.f32 %v1700, %v1662
    %v1702 = vadd.f32 %v1699, %v1701
    %v1703 = vmul.f32 %v1602, %v247
    %v1704 = vmul.f32 %v1703, %v1662
    %v1705 = vmul.f32 %v1619, %v244
    %v1706 = vmul.f32 %v1705, %v1667
    %v1707 = vadd.f32 %v1704, %v1706
    %v1708 = vld [vmem:[#allocation7] sm:$0xff]
    %v1709 = vld [vmem:[#allocation7 + $0x8] sm:$0xff]
    %v1710 = vld [vmem:[#allocation7 + $0x10] sm:$0xff]
    %v1711 = vld [vmem:[#allocation7 + $0x18] sm:$0xff]
    %v1712 = vld [vmem:[#allocation7 + $0x20] sm:$0xff]
    %v1713 = vld [vmem:[#allocation7 + $0x28] sm:$0xff]
    %v1714 = vld [vmem:[#allocation7 + $0x30] sm:$0xff]
    %v1715 = vld [vmem:[#allocation7 + $0x38] sm:$0xff]
    %v1716 = vld [vmem:[#allocation7 + $0x40] sm:$0xff]
    %v1717 = vld [vmem:[#allocation7 + $0x48] sm:$0xff]
    %v1718 = vld [vmem:[#allocation7 + $0x50] sm:$0xff]
    %v1719 = vld [vmem:[#allocation7 + $0x58] sm:$0xff]
    %v1720 = vld [vmem:[#allocation7 + $0x60] sm:$0xff]
    %v1721 = vld [vmem:[#allocation7 + $0x68] sm:$0xff]
    %v1722 = vld [vmem:[#allocation7 + $0x70] sm:$0xff]
    %v1723 = vld [vmem:[#allocation7 + $0x78] sm:$0xff]
    %v1724 = vld [vmem:[#allocation7 + $0x80] sm:$0xff]
    %v1725 = vld [vmem:[#allocation7 + $0x88] sm:$0xff]
    %v1726 = vld [vmem:[#allocation7 + $0x90] sm:$0xff]
    %v1727 = vld [vmem:[#allocation7 + $0x98] sm:$0xff]
    %v1728 = vld [vmem:[#allocation7 + $0xa0] sm:$0xff]
    %v1729 = vld [vmem:[#allocation7 + $0xa8] sm:$0xff]
    %v1730 = vld [vmem:[#allocation7 + $0xb0] sm:$0xff]
    %v1731 = vld [vmem:[#allocation7 + $0xb8] sm:$0xff]
    %v1732 = vld [vmem:[#allocation7 + $0xc0] sm:$0xff]
    %v1733 = vld [vmem:[#allocation7 + $0xc8] sm:$0xff]
    %v1734 = vld [vmem:[#allocation7 + $0xd0] sm:$0xff]
    %v1735 = vld [vmem:[#allocation7 + $0xd8] sm:$0xff]
    %v1736 = vld [vmem:[#allocation7 + $0xe0] sm:$0xff]
    %v1737 = vld [vmem:[#allocation7 + $0xe8] sm:$0xff]
    %v1738 = vld [vmem:[#allocation7 + $0xf0] sm:$0xff]
    %v1739 = vld [vmem:[#allocation7 + $0xf8] sm:$0xff]
    %v1740 = vld [vmem:[#allocation7 + $0x100] sm:$0xff]
    %v1741 = vld [vmem:[#allocation7 + $0x108] sm:$0xff]
    %v1742 = vld [vmem:[#allocation7 + $0x110] sm:$0xff]
    %v1743 = vld [vmem:[#allocation7 + $0x118] sm:$0xff]
    %v1744 = vld [vmem:[#allocation7 + $0x120] sm:$0xff]
    %v1745 = vld [vmem:[#allocation7 + $0x128] sm:$0xff]
    %v1746 = vld [vmem:[#allocation7 + $0x130] sm:$0xff]
    %v1747 = vld [vmem:[#allocation7 + $0x138] sm:$0xff]
    %v1748 = vld [vmem:[#allocation7 + $0x140] sm:$0xff]
    %v1749 = vld [vmem:[#allocation7 + $0x148] sm:$0xff]
    %v1750 = vld [vmem:[#allocation7 + $0x150] sm:$0xff]
    %v1751 = vld [vmem:[#allocation7 + $0x158] sm:$0xff]
    %v1752 = vld [vmem:[#allocation7 + $0x160] sm:$0xff]
    %v1753 = vld [vmem:[#allocation7 + $0x168] sm:$0xff]
    %v1754 = vld [vmem:[#allocation7 + $0x170] sm:$0xff]
    %v1755 = vld [vmem:[#allocation7 + $0x178] sm:$0xff]
    %v1756 = vld [vmem:[#allocation7 + $0x180] sm:$0xff]
    %v1757 = vld [vmem:[#allocation7 + $0x188] sm:$0xff]
    %v1758 = vld [vmem:[#allocation7 + $0x190] sm:$0xff]
    %v1759 = vld [vmem:[#allocation7 + $0x198] sm:$0xff]
    %v1760 = vld [vmem:[#allocation7 + $0x1a0] sm:$0xff]
    %v1761 = vld [vmem:[#allocation7 + $0x1a8] sm:$0xff]
    %v1762 = vld [vmem:[#allocation7 + $0x1b0] sm:$0xff]
    %v1763 = vld [vmem:[#allocation7 + $0x1b8] sm:$0xff]
    %v1764 = vld [vmem:[#allocation7 + $0x1c0] sm:$0xff]
    %v1765 = vld [vmem:[#allocation7 + $0x1c8] sm:$0xff]
    %v1766 = vld [vmem:[#allocation7 + $0x1d0] sm:$0xff]
    %v1767 = vld [vmem:[#allocation7 + $0x1d8] sm:$0xff]
    %v1768 = vld [vmem:[#allocation7 + $0x1e0] sm:$0xff]
    %v1769 = vld [vmem:[#allocation7 + $0x1e8] sm:$0xff]
    %v1770 = vld [vmem:[#allocation7 + $0x1f0] sm:$0xff]
    %v1771 = vld [vmem:[#allocation7 + $0x1f8] sm:$0xff]
    %v1772 = vld [vmem:[#allocation7 + $0x200] sm:$0xff]
    %v1773 = vld [vmem:[#allocation7 + $0x208] sm:$0xff]
    %v1774 = vld [vmem:[#allocation7 + $0x210] sm:$0xff]
    %v1775 = vld [vmem:[#allocation7 + $0x218] sm:$0xff]
    %v1776 = vld [vmem:[#allocation7 + $0x220] sm:$0xff]
    %v1777 = vld [vmem:[#allocation7 + $0x228] sm:$0xff]
    %v1778 = vld [vmem:[#allocation7 + $0x230] sm:$0xff]
    %v1779 = vld [vmem:[#allocation7 + $0x238] sm:$0xff]
    %v1780 = vld [vmem:[#allocation7 + $0x240] sm:$0xff]
    %v1781 = vld [vmem:[#allocation7 + $0x248] sm:$0xff]
    %v1782 = vld [vmem:[#allocation7 + $0x250] sm:$0xff]
    %v1783 = vld [vmem:[#allocation7 + $0x258] sm:$0xff]
    %v1784 = vld [vmem:[#allocation7 + $0x260] sm:$0xff]
    %v1785 = vld [vmem:[#allocation7 + $0x268] sm:$0xff]
    %v1786 = vld [vmem:[#allocation7 + $0x270] sm:$0xff]
    %v1787 = vld [vmem:[#allocation7 + $0x278] sm:$0xff]
    %v1788 = vld [vmem:[#allocation7 + $0x280] sm:$0xff]
    %v1789 = vld [vmem:[#allocation7 + $0x288] sm:$0xff]
    %v1790 = vld [vmem:[#allocation7 + $0x290] sm:$0xff]
    %v1791 = vld [vmem:[#allocation7 + $0x298] sm:$0xff]
    %v1792 = vld [vmem:[#allocation7 + $0x2a0] sm:$0xff]
    %v1793 = vld [vmem:[#allocation7 + $0x2a8] sm:$0xff]
    %v1794 = vld [vmem:[#allocation7 + $0x2b0] sm:$0xff]
    %v1795 = vld [vmem:[#allocation7 + $0x2b8] sm:$0xff]
    %v1796 = vld [vmem:[#allocation7 + $0x2c0] sm:$0xff]
    %v1797 = vld [vmem:[#allocation7 + $0x2c8] sm:$0xff]
    %v1798 = vld [vmem:[#allocation7 + $0x2d0] sm:$0xff]
    %v1799 = vld [vmem:[#allocation7 + $0x2d8] sm:$0xff]
    %v1800 = vld [vmem:[#allocation7 + $0x2e0] sm:$0xff]
    %v1801 = vld [vmem:[#allocation7 + $0x2e8] sm:$0xff]
    %v1802 = vld [vmem:[#allocation7 + $0x2f0] sm:$0xff]
    %v1803 = vld [vmem:[#allocation7 + $0x2f8] sm:$0xff]
    %v1804 = vld [vmem:[#allocation7 + $0x300] sm:$0xff]
    %v1805 = vld [vmem:[#allocation7 + $0x308] sm:$0xff]
    %v1806 = vld [vmem:[#allocation7 + $0x310] sm:$0xff]
    %v1807 = vld [vmem:[#allocation7 + $0x318] sm:$0xff]
    %v1808 = vld [vmem:[#allocation7 + $0x320] sm:$0xff]
    %v1809 = vld [vmem:[#allocation7 + $0x328] sm:$0xff]
    %v1810 = vld [vmem:[#allocation7 + $0x330] sm:$0xff]
    %v1811 = vld [vmem:[#allocation7 + $0x338] sm:$0xff]
    %v1812 = vld [vmem:[#allocation7 + $0x340] sm:$0xff]
    %v1813 = vld [vmem:[#allocation7 + $0x348] sm:$0xff]
    %v1814 = vld [vmem:[#allocation7 + $0x350] sm:$0xff]
    %v1815 = vld [vmem:[#allocation7 + $0x358] sm:$0xff]
    %v1816 = vld [vmem:[#allocation7 + $0x360] sm:$0xff]
    %v1817 = vld [vmem:[#allocation7 + $0x368] sm:$0xff]
    %v1818 = vld [vmem:[#allocation7 + $0x370] sm:$0xff]
    %v1819 = vld [vmem:[#allocation7 + $0x378] sm:$0xff]
    %v1820 = vld [vmem:[#allocation7 + $0x380] sm:$0xff]
    %v1821 = vld [vmem:[#allocation7 + $0x388] sm:$0xff]
    %v1822 = vld [vmem:[#allocation7 + $0x390] sm:$0xff]
    %v1823 = vld [vmem:[#allocation7 + $0x398] sm:$0xff]
    %v1824 = vld [vmem:[#allocation7 + $0x3a0] sm:$0xff]
    %v1825 = vld [vmem:[#allocation7 + $0x3a8] sm:$0xff]
    %v1826 = vld [vmem:[#allocation7 + $0x3b0] sm:$0xff]
    %v1827 = vld [vmem:[#allocation7 + $0x3b8] sm:$0xff]
    %v1828 = vld [vmem:[#allocation7 + $0x3c0] sm:$0xff]
    %v1829 = vld [vmem:[#allocation7 + $0x3c8] sm:$0xff]
    %v1830 = vld [vmem:[#allocation7 + $0x3d0] sm:$0xff]
    %v1831 = vld [vmem:[#allocation7 + $0x3d8] sm:$0xff]
    %v1832 = vld [vmem:[#allocation7 + $0x3e0] sm:$0xff]
    %v1833 = vld [vmem:[#allocation7 + $0x3e8] sm:$0xff]
    %v1834 = vld [vmem:[#allocation7 + $0x3f0] sm:$0xff]
    %v1835 = vld [vmem:[#allocation7 + $0x3f8] sm:$0xff]
    %v1836 = vld [vmem:[#allocation7 + $0x400] sm:$0xff]
    %v1837 = vld [vmem:[#allocation7 + $0x408] sm:$0xff]
    %v1838 = vld [vmem:[#allocation7 + $0x410] sm:$0xff]
    %v1839 = vld [vmem:[#allocation7 + $0x418] sm:$0xff]
    %v1840 = vld [vmem:[#allocation7 + $0x420] sm:$0xff]
    %v1841 = vld [vmem:[#allocation7 + $0x428] sm:$0xff]
    %v1842 = vld [vmem:[#allocation7 + $0x430] sm:$0xff]
    %v1843 = vld [vmem:[#allocation7 + $0x438] sm:$0xff]
    %v1844 = vld [vmem:[#allocation7 + $0x440] sm:$0xff]
    %v1845 = vld [vmem:[#allocation7 + $0x448] sm:$0xff]
    %v1846 = vld [vmem:[#allocation7 + $0x450] sm:$0xff]
    %v1847 = vld [vmem:[#allocation7 + $0x458] sm:$0xff]
    %v1848 = vld [vmem:[#allocation7 + $0x460] sm:$0xff]
    %v1849 = vld [vmem:[#allocation7 + $0x468] sm:$0xff]
    %v1850 = vld [vmem:[#allocation7 + $0x470] sm:$0xff]
    %v1851 = vld [vmem:[#allocation7 + $0x478] sm:$0xff]
    %1852 = vmatprep.subr.mxu0 0.0
    %1853 = vmatpush1.msra.mxu0 %v1708
    %1854 = vmatprep.subr.mxu0 0.0
    %1855 = vmatpush1.msra.mxu0 %v1709
    %1856 = vmatprep.subr.mxu0 0.0
    %1857 = vmatpush1.msra.mxu0 %v1710
    %1858 = vmatprep.subr.mxu0 0.0
    %1859 = vmatpush1.msra.mxu0 %v1711
    %1860 = vmatprep.subr.mxu0 0.0
    %1861 = vmatpush1.msra.mxu0 %v1712
    %1862 = vmatprep.subr.mxu0 0.0
    %1863 = vmatpush1.msra.mxu0 %v1713
    %1864 = vmatprep.subr.mxu0 0.0
    %1865 = vmatpush1.msra.mxu0 %v1714
    %1866 = vmatprep.subr.mxu0 0.0
    %1867 = vmatpush1.msra.mxu0 %v1715
    %1868 = vmatprep.subr.mxu0 0.0
    %1869 = vmatpush1.msra.mxu0 %v1716
    %1870 = vmatprep.subr.mxu0 0.0
    %1871 = vmatpush1.msra.mxu0 %v1717
    %1872 = vmatprep.subr.mxu0 0.0
    %1873 = vmatpush1.msra.mxu0 %v1718
    %1874 = vmatprep.subr.mxu0 0.0
    %1875 = vmatpush1.msra.mxu0 %v1719
    %1876 = vmatprep.subr.mxu0 0.0
    %1877 = vmatpush1.msra.mxu0 %v1720
    %1878 = vmatprep.subr.mxu0 0.0
    %1879 = vmatpush1.msra.mxu0 %v1721
    %1880 = vmatprep.subr.mxu0 0.0
    %1881 = vmatpush1.msra.mxu0 %v1722
    %1882 = vmatprep.subr.mxu0 0.0
    %1883 = vmatpush1.msra.mxu0 %v1723
    %1884 = vmatprep.subr.mxu0 0.0
    %1885 = vmatpush1.msra.mxu0 %v1724
    %1886 = vmatprep.subr.mxu0 0.0
    %1887 = vmatpush1.msra.mxu0 %v1725
    %1888 = vmatprep.subr.mxu0 0.0
    %1889 = vmatpush1.msra.mxu0 %v1726
    %1890 = vmatprep.subr.mxu0 0.0
    %1891 = vmatpush1.msra.mxu0 %v1727
    %1892 = vmatprep.subr.mxu0 0.0
    %1893 = vmatpush1.msra.mxu0 %v1728
    %1894 = vmatprep.subr.mxu0 0.0
    %1895 = vmatpush1.msra.mxu0 %v1729
    %1896 = vmatprep.subr.mxu0 0.0
    %1897 = vmatpush1.msra.mxu0 %v1730
    %1898 = vmatprep.subr.mxu0 0.0
    %1899 = vmatpush1.msra.mxu0 %v1731
    %1900 = vmatprep.subr.mxu0 0.0
    %1901 = vmatpush1.msra.mxu0 %v1732
    %1902 = vmatprep.subr.mxu0 0.0
    %1903 = vmatpush1.msra.mxu0 %v1733
    %1904 = vmatprep.subr.mxu0 0.0
    %1905 = vmatpush1.msra.mxu0 %v1734
    %1906 = vmatprep.subr.mxu0 0.0
    %1907 = vmatpush1.msra.mxu0 %v1735
    %1908 = vmatprep.subr.mxu0 0.0
    %1909 = vmatpush1.msra.mxu0 %v1736
    %1910 = vmatprep.subr.mxu0 0.0
    %1911 = vmatpush1.msra.mxu0 %v1737
    %1912 = vmatprep.subr.mxu0 0.0
    %1913 = vmatpush1.msra.mxu0 %v1738
    %1914 = vmatprep.subr.mxu0 0.0
    %1915 = vmatpush1.msra.mxu0 %v1739
    %1916 = vmatprep.mubr.f32.mxu0 %v1672
    %1917 = vmatmul.mubr.f32.gmra.mrb[0].mxu0 %v1497
    %v1918 = vpop.f32.mrb[0].mxu0
    %v1919 = vadd.f32 0.0, %v1918
    %v1920 = vpop.f32.mrb[0].mxu0
    %1921 = vdwg.mxu0
    %1922 = vmatprep.subr.mxu0 0.0
    %1923 = vmatpush1.msra.mxu0 %v1740
    %1924 = vmatprep.subr.mxu0 0.0
    %1925 = vmatpush1.msra.mxu0 %v1741
    %1926 = vmatprep.subr.mxu0 0.0
    %1927 = vmatpush1.msra.mxu0 %v1742
    %1928 = vmatprep.subr.mxu0 0.0
    %1929 = vmatpush1.msra.mxu0 %v1743
    %1930 = vmatprep.subr.mxu0 0.0
    %1931 = vmatpush1.msra.mxu0 %v1744
    %1932 = vmatprep.subr.mxu0 0.0
    %1933 = vmatpush1.msra.mxu0 %v1745
    %1934 = vmatprep.subr.mxu0 0.0
    %1935 = vmatpush1.msra.mxu0 %v1746
    %1936 = vmatprep.subr.mxu0 0.0
    %1937 = vmatpush1.msra.mxu0 %v1747
    %1938 = vmatprep.subr.mxu0 0.0
    %1939 = vmatpush1.msra.mxu0 %v1748
    %1940 = vmatprep.subr.mxu0 0.0
    %1941 = vmatpush1.msra.mxu0 %v1749
    %1942 = vmatprep.subr.mxu0 0.0
    %1943 = vmatpush1.msra.mxu0 %v1750
    %1944 = vmatprep.subr.mxu0 0.0
    %1945 = vmatpush1.msra.mxu0 %v1751
    %1946 = vmatprep.subr.mxu0 0.0
    %1947 = vmatpush1.msra.mxu0 %v1752
    %1948 = vmatprep.subr.mxu0 0.0
    %1949 = vmatpush1.msra.mxu0 %v1753
    %1950 = vmatprep.subr.mxu0 0.0
    %1951 = vmatpush1.msra.mxu0 %v1754
    %1952 = vmatprep.subr.mxu0 0.0
    %1953 = vmatpush1.msra.mxu0 %v1755
    %1954 = vmatprep.subr.mxu0 0.0
    %1955 = vmatpush1.msra.mxu0 %v1756
    %1956 = vmatprep.subr.mxu0 0.0
    %1957 = vmatpush1.msra.mxu0 %v1757
    %1958 = vmatprep.subr.mxu0 0.0
    %1959 = vmatpush1.msra.mxu0 %v1758
    %1960 = vmatprep.subr.mxu0 0.0
    %1961 = vmatpush1.msra.mxu0 %v1759
    %1962 = vmatprep.subr.mxu0 0.0
    %1963 = vmatpush1.msra.mxu0 %v1760
    %1964 = vmatprep.subr.mxu0 0.0
    %1965 = vmatpush1.msra.mxu0 %v1761
    %1966 = vmatprep.subr.mxu0 0.0
    %1967 = vmatpush1.msra.mxu0 %v1762
    %1968 = vmatprep.subr.mxu0 0.0
    %1969 = vmatpush1.msra.mxu0 %v1763
    %1970 = vmatprep.subr.mxu0 0.0
    %1971 = vmatpush1.msra.mxu0 %v1764
    %1972 = vmatprep.subr.mxu0 0.0
    %1973 = vmatpush1.msra.mxu0 %v1765
    %1974 = vmatprep.subr.mxu0 0.0
    %1975 = vmatpush1.msra.mxu0 %v1766
    %1976 = vmatprep.subr.mxu0 0.0
    %1977 = vmatpush1.msra.mxu0 %v1767
    %1978 = vmatprep.subr.mxu0 0.0
    %1979 = vmatpush1.msra.mxu0 %v1768
    %1980 = vmatprep.subr.mxu0 0.0
    %1981 = vmatpush1.msra.mxu0 %v1769
    %1982 = vmatprep.subr.mxu0 0.0
    %1983 = vmatpush1.msra.mxu0 %v1770
    %1984 = vmatprep.subr.mxu0 0.0
    %1985 = vmatpush1.msra.mxu0 %v1771
    %1986 = vmatprep.mubr.f32.mxu0 %v1682
    %1987 = vmatmul.mubr.f32.gmra.mrb[0].mxu0 %v1677
    %v1988 = vpop.f32.mrb[0].mxu0
    %v1989 = vadd.f32 %v1919, %v1988
    %v1990 = vpop.f32.mrb[0].mxu0
    %1991 = vdwg.mxu0
    %1992 = vmatprep.subr.mxu0 0.0
    %1993 = vmatpush1.msra.mxu0 %v1772
    %1994 = vmatprep.subr.mxu0 0.0
    %1995 = vmatpush1.msra.mxu0 %v1773
    %1996 = vmatprep.subr.mxu0 0.0
    %1997 = vmatpush1.msra.mxu0 %v1774
    %1998 = vmatprep.subr.mxu0 0.0
    %1999 = vmatpush1.msra.mxu0 %v1775
    %2000 = vmatprep.subr.mxu0 0.0
    %2001 = vmatpush1.msra.mxu0 %v1776
    %2002 = vmatprep.subr.mxu0 0.0
    %2003 = vmatpush1.msra.mxu0 %v1777
    %2004 = vmatprep.subr.mxu0 0.0
    %2005 = vmatpush1.msra.mxu0 %v1778
    %2006 = vmatprep.subr.mxu0 0.0
    %2007 = vmatpush1.msra.mxu0 %v1779
    %2008 = vmatprep.subr.mxu0 0.0
    %2009 = vmatpush1.msra.mxu0 %v1780
    %2010 = vmatprep.subr.mxu0 0.0
    %2011 = vmatpush1.msra.mxu0 %v1781
    %2012 = vmatprep.subr.mxu0 0.0
    %2013 = vmatpush1.msra.mxu0 %v1782
    %2014 = vmatprep.subr.mxu0 0.0
    %2015 = vmatpush1.msra.mxu0 %v1783
    %2016 = vmatprep.subr.mxu0 0.0
    %2017 = vmatpush1.msra.mxu0 %v1784
    %2018 = vmatprep.subr.mxu0 0.0
    %2019 = vmatpush1.msra.mxu0 %v1785
    %2020 = vmatprep.subr.mxu0 0.0
    %2021 = vmatpush1.msra.mxu0 %v1786
    %2022 = vmatprep.subr.mxu0 0.0
    %2023 = vmatpush1.msra.mxu0 %v1787
    %2024 = vmatprep.subr.mxu0 0.0
    %2025 = vmatpush1.msra.mxu0 %v1788
    %2026 = vmatprep.subr.mxu0 0.0
    %2027 = vmatpush1.msra.mxu0 %v1789
    %2028 = vmatprep.subr.mxu0 0.0
    %2029 = vmatpush1.msra.mxu0 %v1790
    %2030 = vmatprep.subr.mxu0 0.0
    %2031 = vmatpush1.msra.mxu0 %v1791
    %2032 = vmatprep.subr.mxu0 0.0
    %2033 = vmatpush1.msra.mxu0 %v1792
    %2034 = vmatprep.subr.mxu0 0.0
    %2035 = vmatpush1.msra.mxu0 %v1793
    %2036 = vmatprep.subr.mxu0 0.0
    %2037 = vmatpush1.msra.mxu0 %v1794
    %2038 = vmatprep.subr.mxu0 0.0
    %2039 = vmatpush1.msra.mxu0 %v1795
    %2040 = vmatprep.subr.mxu0 0.0
    %2041 = vmatpush1.msra.mxu0 %v1796
    %2042 = vmatprep.subr.mxu0 0.0
    %2043 = vmatpush1.msra.mxu0 %v1797
    %2044 = vmatprep.subr.mxu0 0.0
    %2045 = vmatpush1.msra.mxu0 %v1798
    %2046 = vmatprep.subr.mxu0 0.0
    %2047 = vmatpush1.msra.mxu0 %v1799
    %2048 = vmatprep.subr.mxu0 0.0
    %2049 = vmatpush1.msra.mxu0 %v1800
    %2050 = vmatprep.subr.mxu0 0.0
    %2051 = vmatpush1.msra.mxu0 %v1801
    %2052 = vmatprep.subr.mxu0 0.0
    %2053 = vmatpush1.msra.mxu0 %v1802
    %2054 = vmatprep.subr.mxu0 0.0
    %2055 = vmatpush1.msra.mxu0 %v1803
    %2056 = vmatprep.mubr.f32.mxu0 %v1692
    %2057 = vmatmul.mubr.f32.gmra.mrb[0].mxu0 %v1687
    %v2058 = vpop.f32.mrb[0].mxu0
    %v2059 = vadd.f32 %v1989, %v2058
    %v2060 = vpop.f32.mrb[0].mxu0
    %2061 = vdwg.mxu0
    %2062 = vmatprep.subr.mxu0 0.0
    %2063 = vmatpush1.msra.mxu0 %v1804
    %2064 = vmatprep.subr.mxu0 0.0
    %2065 = vmatpush1.msra.mxu0 %v1805
    %2066 = vmatprep.subr.mxu0 0.0
    %2067 = vmatpush1.msra.mxu0 %v1806
    %2068 = vmatprep.subr.mxu0 0.0
    %2069 = vmatpush1.msra.mxu0 %v1807
    %2070 = vmatprep.subr.mxu0 0.0
    %2071 = vmatpush1.msra.mxu0 %v1808
    %2072 = vmatprep.subr.mxu0 0.0
    %2073 = vmatpush1.msra.mxu0 %v1809
    %2074 = vmatprep.subr.mxu0 0.0
    %2075 = vmatpush1.msra.mxu0 %v1810
    %2076 = vmatprep.subr.mxu0 0.0
    %2077 = vmatpush1.msra.mxu0 %v1811
    %2078 = vmatprep.subr.mxu0 0.0
    %2079 = vmatpush1.msra.mxu0 %v1812
    %2080 = vmatprep.subr.mxu0 0.0
    %2081 = vmatpush1.msra.mxu0 %v1813
    %2082 = vmatprep.subr.mxu0 0.0
    %2083 = vmatpush1.msra.mxu0 %v1814
    %2084 = vmatprep.subr.mxu0 0.0
    %2085 = vmatpush1.msra.mxu0 %v1815
    %2086 = vmatprep.subr.mxu0 0.0
    %2087 = vmatpush1.msra.mxu0 %v1816
    %2088 = vmatprep.subr.mxu0 0.0
    %2089 = vmatpush1.msra.mxu0 %v1817
    %2090 = vmatprep.subr.mxu0 0.0
    %2091 = vmatpush1.msra.mxu0 %v1818
    %2092 = vmatprep.subr.mxu0 0.0
    %2093 = vmatpush1.msra.mxu0 %v1819
    %2094 = vmatprep.subr.mxu0 0.0
    %2095 = vmatpush1.msra.mxu0 %v1820
    %2096 = vmatprep.subr.mxu0 0.0
    %2097 = vmatpush1.msra.mxu0 %v1821
    %2098 = vmatprep.subr.mxu0 0.0
    %2099 = vmatpush1.msra.mxu0 %v1822
    %2100 = vmatprep.subr.mxu0 0.0
    %2101 = vmatpush1.msra.mxu0 %v1823
    %2102 = vmatprep.subr.mxu0 0.0
    %2103 = vmatpush1.msra.mxu0 %v1824
    %2104 = vmatprep.subr.mxu0 0.0
    %2105 = vmatpush1.msra.mxu0 %v1825
    %2106 = vmatprep.subr.mxu0 0.0
    %2107 = vmatpush1.msra.mxu0 %v1826
    %2108 = vmatprep.subr.mxu0 0.0
    %2109 = vmatpush1.msra.mxu0 %v1827
    %2110 = vmatprep.subr.mxu0 0.0
    %2111 = vmatpush1.msra.mxu0 %v1828
    %2112 = vmatprep.subr.mxu0 0.0
    %2113 = vmatpush1.msra.mxu0 %v1829
    %2114 = vmatprep.subr.mxu0 0.0
    %2115 = vmatpush1.msra.mxu0 %v1830
    %2116 = vmatprep.subr.mxu0 0.0
    %2117 = vmatpush1.msra.mxu0 %v1831
    %2118 = vmatprep.subr.mxu0 0.0
    %2119 = vmatpush1.msra.mxu0 %v1832
    %2120 = vmatprep.subr.mxu0 0.0
    %2121 = vmatpush1.msra.mxu0 %v1833
    %2122 = vmatprep.subr.mxu0 0.0
    %2123 = vmatpush1.msra.mxu0 %v1834
    %2124 = vmatprep.subr.mxu0 0.0
    %2125 = vmatpush1.msra.mxu0 %v1835
    %2126 = vmatprep.mubr.f32.mxu0 %v1702
    %2127 = vmatmul.mubr.f32.gmra.mrb[0].mxu0 %v1697
    %v2128 = vpop.f32.mrb[0].mxu0
    %v2129 = vadd.f32 %v2059, %v2128
    %v2130 = vpop.f32.mrb[0].mxu0
    %2131 = vdwg.mxu0
    %2132 = vmatprep.subr.mxu0 0.0
    %2133 = vmatpush1.msra.mxu0 %v1836
    %2134 = vmatprep.subr.mxu0 0.0
    %2135 = vmatpush1.msra.mxu0 %v1837
    %2136 = vmatprep.subr.mxu0 0.0
    %2137 = vmatpush1.msra.mxu0 %v1838
    %2138 = vmatprep.subr.mxu0 0.0
    %2139 = vmatpush1.msra.mxu0 %v1839
    %2140 = vmatprep.subr.mxu0 0.0
    %2141 = vmatpush1.msra.mxu0 %v1840
    %2142 = vmatprep.subr.mxu0 0.0
    %2143 = vmatpush1.msra.mxu0 %v1841
    %2144 = vmatprep.subr.mxu0 0.0
    %2145 = vmatpush1.msra.mxu0 %v1842
    %2146 = vmatprep.subr.mxu0 0.0
    %2147 = vmatpush1.msra.mxu0 %v1843
    %2148 = vmatprep.subr.mxu0 0.0
    %2149 = vmatpush1.msra.mxu0 %v1844
    %2150 = vmatprep.subr.mxu0 0.0
    %2151 = vmatpush1.msra.mxu0 %v1845
    %2152 = vmatprep.subr.mxu0 0.0
    %2153 = vmatpush1.msra.mxu0 %v1846
    %2154 = vmatprep.subr.mxu0 0.0
    %2155 = vmatpush1.msra.mxu0 %v1847
    %2156 = vmatprep.subr.mxu0 0.0
    %2157 = vmatpush1.msra.mxu0 %v1848
    %2158 = vmatprep.subr.mxu0 0.0
    %2159 = vmatpush1.msra.mxu0 %v1849
    %2160 = vmatprep.subr.mxu0 0.0
    %2161 = vmatpush1.msra.mxu0 %v1850
    %2162 = vmatprep.subr.mxu0 0.0
    %2163 = vmatpush1.msra.mxu0 %v1851
    %2164 = vmatprep.subr.mxu0 0.0
    %2165 = vmatpush1.msra.mxu0 0.0
    %2166 = vmatprep.subr.mxu0 0.0
    %2167 = vmatpush1.msra.mxu0 0.0
    %2168 = vmatprep.subr.mxu0 0.0
    %2169 = vmatpush1.msra.mxu0 0.0
    %2170 = vmatprep.subr.mxu0 0.0
    %2171 = vmatpush1.msra.mxu0 0.0
    %2172 = vmatprep.subr.mxu0 0.0
    %2173 = vmatpush1.msra.mxu0 0.0
    %2174 = vmatprep.subr.mxu0 0.0
    %2175 = vmatpush1.msra.mxu0 0.0
    %2176 = vmatprep.subr.mxu0 0.0
    %2177 = vmatpush1.msra.mxu0 0.0
    %2178 = vmatprep.subr.mxu0 0.0
    %2179 = vmatpush1.msra.mxu0 0.0
    %2180 = vmatprep.subr.mxu0 0.0
    %2181 = vmatpush1.msra.mxu0 0.0
    %2182 = vmatprep.subr.mxu0 0.0
    %2183 = vmatpush1.msra.mxu0 0.0
    %2184 = vmatprep.subr.mxu0 0.0
    %2185 = vmatpush1.msra.mxu0 0.0
    %2186 = vmatprep.subr.mxu0 0.0
    %2187 = vmatpush1.msra.mxu0 0.0
    %2188 = vmatprep.subr.mxu0 0.0
    %2189 = vmatpush1.msra.mxu0 0.0
    %2190 = vmatprep.subr.mxu0 0.0
    %2191 = vmatpush1.msra.mxu0 0.0
    %2192 = vmatprep.subr.mxu0 0.0
    %2193 = vmatpush1.msra.mxu0 0.0
    %2194 = vmatprep.subr.mxu0 0.0
    %2195 = vmatpush1.msra.mxu0 0.0
    %2196 = vmatprep.mubr.f32.mxu0 0.0
    %2197 = vmatmul.mubr.f32.gmra.mrb[0].mxu0 %v1707
    %v2198 = vpop.f32.mrb[0].mxu0
    %v2199 = vadd.f32 %v2129, %v2198
    %v2200 = vpop.f32.mrb[0].mxu0
    %2201 = vdwg.mxu0
    %2202 = vst [vmem:[#allocation8] sm:$0xff] %v2199
    // Predicated region
    $region30: #{run.1} parent=1 // pred_check
      _
    $region31: #{run.1} parent=1 // pred_check_branch
      %2204 = sbr.rel (0) target = $region33
    $region32: #{run.1} parent=1 // pred_region
      %s2206 = ssub.s32 128, 128
      %2207 = vsyncadd [#allocation4], %s2206
      %s2209 = sshll.u32 [#allocation8], 4
      %s2210 = int_to_ptr.vmem [resolvable:$true] %s2209
      %2212 = dma.vmem_to_hbm [thread:$0]  %s2210, 128, %s4, [#allocation4]
    $region33: #{run.1} parent=1 // pred_fallthru
      _
    // Predicated region
    $region34: #{run.1} parent=1 // pred_check
      _
    $region35: #{run.1} parent=1 // pred_check_branch
      %2214 = sbr.rel (0) target = $region37
    $region36: #{run.1} parent=1 // pred_region
      %2215 = dma.done [#allocation4], 128
    $region37: #{run.1} parent=1 // pred_fallthru
      _
    %2216 = vsyncpa [#allocation3], 1
    %2217 = vsyncpa [#allocation6], 1
    %2218 = vsyncpa [#allocation4], 1

</llo_original>
